<compile_context>
chip_gen: v5e
topology: v5e:2x2
jax: 0.10.0
libtpu: 0.0.40
codegen_flags: <defaults>
</compile_context>

<pallas_src>
import jax
import jax.numpy as jnp
import numpy as np
from jax import lax
from jax.experimental import pallas as pl
from jax.experimental.pallas import tpu as pltpu

# ---------------- configuration (EEGNet defaults, small args) ----------------
B      = 2        # batch
NCHANS = 4        # args.nchans
NTIMES = 128      # args.ntimes
F1     = 8
D      = 2
F2     = 16
F1D    = F1 * D
K1     = 64       # kernel_1
K2     = 16       # kernel_2
LATENT = 128      # latent_dim
EPS    = 1e-3     # BatchNorm eps

PAD1 = K1 // 2
T1   = NTIMES + 2 * PAD1 - K1 + 1      # 129: block1 temporal conv output width
P1   = (T1 - 4) // 4 + 1               # 32 : AvgPool2d((1,4), stride 4) output width
PAD2 = K2 // 2
T2   = P1 + 2 * PAD2 - K2 + 1          # 33 : block2 depthwise conv output width
P2   = (T2 - 8) // 8 + 1               # 4  : AvgPool2d((1,8), stride 8) output width
FEAT = F2 * P2                         # 64 : == feature_dim()

TP1 = 4 * P1                           # 128: block1 time steps actually consumed by pool1
TP2 = 8 * P2                           # 32 : block2 time steps actually consumed by pool2

NIN1 = NCHANS * NTIMES                 # 512 : flattened input width  (lane = c*NTIMES + p)
NH1  = F1D * TP1                       # 2048: stage-1 hidden width   (lane = o*TP1 + t)
NH2  = F2 * TP2                        # 512 : stage-2 hidden width   (lane = g*TP2 + t2)


def _pick_bblk(batch):
    """Batch-block size: pack samples into sublanes, but keep >=2 grid steps when possible
    so both v7x TensorCores get work (the grid is a serial loop on v5e/v6e anyway)."""
    if batch < 2:
        return 1
    blk = max(1, min(8, batch // 2))
    while batch % blk:                 # must divide the batch
        blk -= 1
    return blk


BBLK  = _pick_bblk(B)                  # B=2 -> BBLK=1, two parallel programs
NPROG = B // BBLK


# ---------------------------------- kernel ----------------------------------
def eegnet_kernel(x_ref, w1_ref, b1_ref, w2_ref, b2_ref, w3_ref, out_ref):
    f32 = jnp.float32

    def elu(v):
        return jnp.where(v > 0, v, jnp.exp(v) - 1.0)

    x = x_ref[0]                                                          # (BBLK, NIN1)

    # block1: temporal conv (Toeplitz) + BN1 + depthwise spatial conv + BN2 -> one matmul
    h = jnp.dot(x, w1_ref[...], preferred_element_type=f32) + b1_ref[...]  # (BBLK, NH1)
    h = elu(h)

    # block2: AvgPool(1,4) + depthwise temporal conv + 1x1 pointwise conv + BN3 -> one matmul
    h = jnp.dot(h, w2_ref[...], preferred_element_type=f32) + b2_ref[...]  # (BBLK, NH2)
    h = elu(h)

    # AvgPool(1,8) + flatten + Linear -> one matmul, lane-dense (LATENT=128) store
    out = jnp.dot(h, w3_ref[...], preferred_element_type=f32)              # (BBLK, LATENT)
    out_ref[...] = out.reshape((1, BBLK, LATENT))


@jax.jit
def eegnet_forward(x, fused):
    wb1, b1r, wb2, b2r, wb3 = fused
    xf = x.astype(jnp.float32).reshape(B, NIN1).reshape(NPROG, BBLK, NIN1)
    out = pl.pallas_call(
        eegnet_kernel,
        out_shape=jax.ShapeDtypeStruct((NPROG, BBLK, LATENT), jnp.float32),
        grid_spec=pltpu.PrefetchScalarGridSpec(
            num_scalar_prefetch=0,
            grid=(NPROG,),
            in_specs=[
                pl.BlockSpec((1, BBLK, NIN1), lambda i: (i, 0, 0)),   # x batch block
                pl.BlockSpec((NIN1, NH1),     lambda i: (0, 0)),      # fused block1 weight
                pl.BlockSpec((1, NH1),        lambda i: (0, 0)),      # fused block1 bias
                pl.BlockSpec((NH1, NH2),      lambda i: (0, 0)),      # fused block2 weight
                pl.BlockSpec((1, NH2),        lambda i: (0, 0)),      # fused block2 bias
                pl.BlockSpec((NH2, LATENT),   lambda i: (0, 0)),      # fused pool+linear wgt
            ],
            out_specs=pl.BlockSpec((1, BBLK, LATENT), lambda i: (i, 0, 0)),
        ),
        compiler_params=pltpu.CompilerParams(
            dimension_semantics=("parallel",),
            vmem_limit_bytes=32 * 1024 * 1024,   # ~8.3 MiB of resident weights (x2 buffers)
        ),
    )(xf, wb1, b1r, wb2, b2r, wb3)
    return out.reshape(B, LATENT)


# ------------- deterministic parameter setup + fusion (glue, plain JAX) -------------
def init_params(key):
    """Raw PyTorch-equivalent parameters (eval mode)."""
    ks = jax.random.split(key, 8)

    def rnd(k, shape, scale=0.1):
        return (scale * jax.random.normal(k, shape)).astype(jnp.float32)

    w1_full = rnd(ks[0], (F1, 1, 1, K1))                  # Conv2d(1, F1, (1,K1)), no bias
    w2_full = rnd(ks[1], (F1D, 1, NCHANS, 1))             # Conv2dWithConstraint, groups=F1
    norms = jnp.sqrt(jnp.sum(w2_full ** 2, axis=(1, 2, 3), keepdims=True))
    w2_full = w2_full * jnp.minimum(1.0, 1.0 / jnp.maximum(norms, 1e-7))  # renorm p=2 max 1
    w3_full = rnd(ks[2], (F1D, 1, 1, K2))                 # depthwise temporal conv
    w4_full = rnd(ks[3], (F2, F1D, 1, 1))                 # pointwise conv
    w5 = rnd(ks[4], (LATENT, FEAT))                       # Linear(FEAT, LATENT, bias=False)

    def bn(k, c):
        kg, kb, km, kv = jax.random.split(k, 4)
        gamma = 1.0 + 0.1 * jax.random.normal(kg, (c,))
        beta = 0.1 * jax.random.normal(kb, (c,))
        mean = 0.1 * jax.random.normal(km, (c,))
        var = 0.5 + jnp.abs(jax.random.normal(kv, (c,)))
        scale = (gamma / jnp.sqrt(var + EPS)).astype(jnp.float32)
        shift = (beta - mean * scale).astype(jnp.float32)
        return scale, shift

    s1, be1 = bn(ks[5], F1)
    s2, be2 = bn(ks[6], F1D)
    s3, be3 = bn(ks[7], F2)
    return (w1_full, w2_full, w3_full, w4_full, w5, s1, be1, s2, be2, s3, be3)


def fuse_params(full):
    """Fold the whole eval-mode forward into three dense matrices + two bias rows.

    stage1: Wb1[c*NTIMES+p, o*TP1+t] = s2[o]*s1[o//D]*w2[o,c]*w1[o//D, p-t+PAD1]
    stage2: Wb2[o*TP1+u,  g*TP2+t2]  = 0.25*s3[g]*w4[g,o]*w3[o, u//4 - t2 + PAD2]
    stage3: Wb3[g*TP2+t2, l]         = w5[l, g*P2 + t2//8] / 8
    (zero padding of both temporal convs and both avg-pools are folded into the bands;
     only the TP1 / TP2 time steps the pools actually consume are materialized.)
    """
    w1_full, w2_full, w3_full, w4_full, w5, s1, be1, s2, be2, s3, be3 = full
    f32 = jnp.float32

    w1f = w1_full.reshape(F1, K1).astype(f32)
    w2f = w2_full.reshape(F1D, NCHANS).astype(f32)
    w3f = w3_full.reshape(F1D, K2).astype(f32)
    w4f = w4_full.reshape(F2, F1D).astype(f32)
    w5f = w5.astype(f32)

    f_of_o = jnp.arange(F1D) // D                          # F1-group of each F1*D channel

    # ---- stage 1: conv1 (Toeplitz over time) + BN1 + spatial depthwise conv + BN2 ----
    a1 = (s2[:, None, None] * s1[f_of_o][:, None, None]
          * w2f[:, :, None] * w1f[f_of_o][:, None, :])     # (F1D, NCHANS, K1)
    p_idx = jnp.arange(NTIMES)
    t_idx = jnp.arange(TP1)
    kk = p_idx[:, None] - t_idx[None, :] + PAD1            # (NTIMES, TP1) tap index
    valid1 = (kk >= 0) & (kk < K1)
    g1 = a1[:, :, jnp.clip(kk, 0, K1 - 1)]                 # (F1D, NCHANS, NTIMES, TP1)
    g1 = jnp.where(valid1[None, None], g1, 0.0)
    wb1 = g1.transpose(1, 2, 0, 3).reshape(NIN1, NH1)      # (512, 2048)
    bias1 = s2 * be1[f_of_o] * jnp.sum(w2f, axis=1) + be2  # (F1D,)
    b1r = jnp.broadcast_to(bias1[:, None], (F1D, TP1)).reshape(1, NH1)

    # ---- stage 2: AvgPool(1,4) + depthwise temporal conv + pointwise conv + BN3 ----
    w4s = s3[:, None] * w4f                                # (F2, F1D)
    u_idx = jnp.arange(TP1)
    t2_idx = jnp.arange(TP2)
    k2 = (u_idx // 4)[:, None] - t2_idx[None, :] + PAD2    # (TP1, TP2) tap index
    valid2 = (k2 >= 0) & (k2 < K2)
    w3g = w3f[:, jnp.clip(k2, 0, K2 - 1)]                  # (F1D, TP1, TP2)
    w3g = jnp.where(valid2[None], w3g, 0.0)
    wb2 = 0.25 * (w3g[:, :, None, :] * w4s.T[:, None, :, None])   # (F1D, TP1, F2, TP2)
    wb2 = wb2.reshape(NH1, NH2)                            # (2048, 512)
    b2r = jnp.broadcast_to(be3[:, None], (F2, TP2)).reshape(1, NH2)

    # ---- stage 3: AvgPool(1,8) + flatten + Linear ----
    q_idx = jnp.arange(TP2) // 8
    wb3 = (w5f.reshape(LATENT, F2, P2)[:, :, q_idx] / 8.0) # (LATENT, F2, TP2)
    wb3 = wb3.transpose(1, 2, 0).reshape(NH2, LATENT)      # (512, 128)

    return (wb1, b1r, wb2, b2r, wb3)


def reference_forward(x, full):
    # pure-JAX reference (NCHW convs) mirroring the PyTorch forward (eval mode).
    w1, w2, w3, w4, w5, s1, b1, s2, b2, s3, b3 = full
    dn = ('NCHW', 'OIHW', 'NCHW')
    h = lax.conv_general_dilated(x, w1, (1, 1), ((0, 0), (PAD1, PAD1)),
                                 dimension_numbers=dn)
    h = h * s1[None, :, None, None] + b1[None, :, None, None]
    h = lax.conv_general_dilated(h, w2, (1, 1), ((0, 0), (0, 0)),
                                 dimension_numbers=dn, feature_group_count=F1)
    h = h * s2[None, :, None, None] + b2[None, :, None, None]
    h = jax.nn.elu(h)
    h = h[..., :4 * P1].reshape(B, F1D, 1, P1, 4).mean(-1)
    h = lax.conv_general_dilated(h, w3, (1, 1), ((0, 0), (PAD2, PAD2)),
                                 dimension_numbers=dn, feature_group_count=F1D)
    h = lax.conv_general_dilated(h, w4, (1, 1), ((0, 0), (0, 0)),
                                 dimension_numbers=dn)
    h = h * s3[None, :, None, None] + b3[None, :, None, None]
    h = jax.nn.elu(h)
    h = h[..., :8 * P2].reshape(B, F2, 1, P2, 8).mean(-1)
    return h.reshape(B, -1) @ w5.T


if __name__ == "__main__":
    key = jax.random.PRNGKey(0)
    kx, kp = jax.random.split(key)
    x = jax.random.normal(kx, (B, 1, NCHANS, NTIMES), dtype=jnp.float32)  # NCHW input
    full = init_params(kp)
    fused = fuse_params(full)      # one-time wrapper-side fusion (plain JAX)

    y = eegnet_forward(x, fused)
    y = jax.block_until_ready(y)

    y_ref = reference_forward(x, full)
    assert y.shape == (B, LATENT)
    np.testing.assert_allclose(np.asarray(y), np.asarray(y_ref), rtol=1e-3, atol=1e-3)
    # TODO(synk): training-mode Dropout / BatchNorm batch-stat updates are not modeled
    # (inference semantics: identity / folded running statistics).
    print("KERNEL_OK")
</pallas_src>

<mosaic_0001>
module attributes {stable_mosaic.version = 11 : i64} {
  func.func @eegnet_kernel(%arg0: i32, %arg1: memref<1x1x512xf32, #tpu.memory_space<vmem>>, %arg2: memref<512x2048xf32, #tpu.memory_space<vmem>>, %arg3: memref<1x2048xf32, #tpu.memory_space<vmem>>, %arg4: memref<2048x512xf32, #tpu.memory_space<vmem>>, %arg5: memref<1x512xf32, #tpu.memory_space<vmem>>, %arg6: memref<512x128xf32, #tpu.memory_space<vmem>>, %arg7: memref<1x1x128xf32, #tpu.memory_space<vmem>>) attributes {dimension_semantics = [#tpu.dimension_semantics<parallel>], iteration_bounds = array<i64: 2>, scalar_prefetch = 0 : i64, scratch_operands = 0 : i64, tpu.core_type = #tpu.core_type<tc>, window_params = [{transform_indices = @transform_0, window_bounds = array<i64: 1, 1, 512>}, {pipeline_mode = #tpu.pipeline_mode<synchronous>, transform_indices = @transform_1, window_bounds = array<i64: 512, 2048>}, {pipeline_mode = #tpu.pipeline_mode<synchronous>, transform_indices = @transform_2, window_bounds = array<i64: 1, 2048>}, {pipeline_mode = #tpu.pipeline_mode<synchronous>, transform_indices = @transform_3, window_bounds = array<i64: 2048, 512>}, {pipeline_mode = #tpu.pipeline_mode<synchronous>, transform_indices = @transform_4, window_bounds = array<i64: 1, 512>}, {pipeline_mode = #tpu.pipeline_mode<synchronous>, transform_indices = @transform_5, window_bounds = array<i64: 512, 128>}, {transform_indices = @transform_6, window_bounds = array<i64: 1, 1, 128>}]} {
    %c0 = arith.constant 0 : index
    %c0_0 = arith.constant 0 : index
    %c0_1 = arith.constant 0 : index
    %0 = vector.load %arg1[%c0, %c0_0, %c0_1] : memref<1x1x512xf32, #tpu.memory_space<vmem>>, vector<1x1x512xf32>
    %1 = vector.shape_cast %0 : vector<1x1x512xf32> to vector<1x512xf32>
    %c0_2 = arith.constant 0 : index
    %c0_3 = arith.constant 0 : index
    %2 = vector.load %arg2[%c0_2, %c0_3] : memref<512x2048xf32, #tpu.memory_space<vmem>>, vector<512x2048xf32>
    %cst = arith.constant dense<0.000000e+00> : vector<1x2048xf32>
    %3 = tpu.matmul %1, %2, %cst {dimension_numbers = #tpu.dot_dimension_numbers<[1], [0], [0], [1], [0, 0, 1, 1], [], []>} : vector<1x512xf32>, vector<512x2048xf32>, vector<1x2048xf32> -> vector<1x2048xf32>
    %c0_4 = arith.constant 0 : index
    %c0_5 = arith.constant 0 : index
    %4 = vector.load %arg3[%c0_4, %c0_5] : memref<1x2048xf32, #tpu.memory_space<vmem>>, vector<1x2048xf32>
    %5 = arith.addf %3, %4 : vector<1x2048xf32>
    %cst_6 = arith.constant 0.000000e+00 : f32
    %6 = vector.broadcast %cst_6 : f32 to vector<1x2048xf32>
    %7 = arith.cmpf ogt, %5, %6 : vector<1x2048xf32>
    %8 = math.exp %5 : vector<1x2048xf32>
    %cst_7 = arith.constant 1.000000e+00 : f32
    %9 = vector.broadcast %cst_7 : f32 to vector<1x2048xf32>
    %10 = arith.subf %8, %9 : vector<1x2048xf32>
    %11 = arith.select %7, %5, %10 : vector<1x2048xi1>, vector<1x2048xf32>
    %c0_8 = arith.constant 0 : index
    %c0_9 = arith.constant 0 : index
    %12 = vector.load %arg4[%c0_8, %c0_9] : memref<2048x512xf32, #tpu.memory_space<vmem>>, vector<2048x512xf32>
    %cst_10 = arith.constant dense<0.000000e+00> : vector<1x512xf32>
    %13 = tpu.matmul %11, %12, %cst_10 {dimension_numbers = #tpu.dot_dimension_numbers<[1], [0], [0], [1], [0, 0, 1, 1], [], []>} : vector<1x2048xf32>, vector<2048x512xf32>, vector<1x512xf32> -> vector<1x512xf32>
    %c0_11 = arith.constant 0 : index
    %c0_12 = arith.constant 0 : index
    %14 = vector.load %arg5[%c0_11, %c0_12] : memref<1x512xf32, #tpu.memory_space<vmem>>, vector<1x512xf32>
    %15 = arith.addf %13, %14 : vector<1x512xf32>
    %cst_13 = arith.constant 0.000000e+00 : f32
    %16 = vector.broadcast %cst_13 : f32 to vector<1x512xf32>
    %17 = arith.cmpf ogt, %15, %16 : vector<1x512xf32>
    %18 = math.exp %15 : vector<1x512xf32>
    %cst_14 = arith.constant 1.000000e+00 : f32
    %19 = vector.broadcast %cst_14 : f32 to vector<1x512xf32>
    %20 = arith.subf %18, %19 : vector<1x512xf32>
    %21 = arith.select %17, %15, %20 : vector<1x512xi1>, vector<1x512xf32>
    %c0_15 = arith.constant 0 : index
    %c0_16 = arith.constant 0 : index
    %22 = vector.load %arg6[%c0_15, %c0_16] : memref<512x128xf32, #tpu.memory_space<vmem>>, vector<512x128xf32>
    %cst_17 = arith.constant dense<0.000000e+00> : vector<1x128xf32>
    %23 = tpu.matmul %21, %22, %cst_17 {dimension_numbers = #tpu.dot_dimension_numbers<[1], [0], [0], [1], [0, 0, 1, 1], [], []>} : vector<1x512xf32>, vector<512x128xf32>, vector<1x128xf32> -> vector<1x128xf32>
    %24 = vector.shape_cast %23 : vector<1x128xf32> to vector<1x1x128xf32>
    %c0_18 = arith.constant 0 : index
    %c0_19 = arith.constant 0 : index
    %c0_20 = arith.constant 0 : index
    %25 = vector.load %arg7[%c0_18, %c0_19, %c0_20] : memref<1x1x128xf32, #tpu.memory_space<vmem>>, vector<1x1x128xf32>
    tpu.vector_store %arg7[%c0_18, %c0_19, %c0_20], %24 {strides = array<i32>} : memref<1x1x128xf32, #tpu.memory_space<vmem>>, vector<1x1x128xf32>,
    return
  }
  func.func @transform_0(%arg0: i32) -> (i32, i32, i32) {
    %c0_i32 = arith.constant 0 : i32
    %c0_i32_0 = arith.constant 0 : i32
    %c0_i32_1 = arith.constant 0 : i32
    return %arg0, %c0_i32, %c0_i32_0 : i32, i32, i32
  }
  func.func @transform_1(%arg0: i32) -> (i32, i32) {
    %c0_i32 = arith.constant 0 : i32
    %c0_i32_0 = arith.constant 0 : i32
    %c0_i32_1 = arith.constant 0 : i32
    return %c0_i32, %c0_i32_0 : i32, i32
  }
  func.func @transform_2(%arg0: i32) -> (i32, i32) {
    %c0_i32 = arith.constant 0 : i32
    %c0_i32_0 = arith.constant 0 : i32
    %c0_i32_1 = arith.constant 0 : i32
    return %c0_i32, %c0_i32_0 : i32, i32
  }
  func.func @transform_3(%arg0: i32) -> (i32, i32) {
    %c0_i32 = arith.constant 0 : i32
    %c0_i32_0 = arith.constant 0 : i32
    %c0_i32_1 = arith.constant 0 : i32
    return %c0_i32, %c0_i32_0 : i32, i32
  }
  func.func @transform_4(%arg0: i32) -> (i32, i32) {
    %c0_i32 = arith.constant 0 : i32
    %c0_i32_0 = arith.constant 0 : i32
    %c0_i32_1 = arith.constant 0 : i32
    return %c0_i32, %c0_i32_0 : i32, i32
  }
  func.func @transform_5(%arg0: i32) -> (i32, i32) {
    %c0_i32 = arith.constant 0 : i32
    %c0_i32_0 = arith.constant 0 : i32
    %c0_i32_1 = arith.constant 0 : i32
    return %c0_i32, %c0_i32_0 : i32, i32
  }
  func.func @transform_6(%arg0: i32) -> (i32, i32, i32) {
    %c0_i32 = arith.constant 0 : i32
    %c0_i32_0 = arith.constant 0 : i32
    %c0_i32_1 = arith.constant 0 : i32
    return %arg0, %c0_i32, %c0_i32_0 : i32, i32, i32
  }
}

</mosaic_0001>

<llo_original>
// kernel: eegnet_forward.1
$region0: #{eegnet_forward.1}
  #allocation0 [shape = 'u32[]', space=smem, size = 0x4, offset = 0x4, fixed_abs, tag = 'smem constant byte address 0x4 - core index']
  #allocation1 [shape = 'u32[72,128]{1,0:T(1,128)}', space=vmem, size = 0x9000, scoped, tag = 'internal scratch']
  %s0 = inlined_call_operand.hbm [shape: f32[2,1,512], index: 0, kind: input, shape index: {}]
  %s1 = inlined_call_operand.hbm [shape: f32[512,2048], index: 1, kind: input, shape index: {}]
  %s2 = inlined_call_operand.hbm [shape: f32[1,2048], index: 2, kind: input, shape index: {}]
  %s3 = inlined_call_operand.hbm [shape: f32[2048,512], index: 3, kind: input, shape index: {}]
  %s4 = inlined_call_operand.hbm [shape: f32[1,512], index: 4, kind: input, shape index: {}]
  %s5 = inlined_call_operand.hbm [shape: f32[512,128], index: 5, kind: input, shape index: {}]
  %s6 = inlined_call_operand.hbm [shape: f32[2,1,128], index: 6, kind: output, shape index: {}]
  %s7 = sld [smem:[#allocation0]]
  $region81: #{eegnet_forward.1} parent=0
    _
  %s9 = ssub.s32 1, %s7
  %s10 = scalar_select 0, %s9, %s7
  $region1: #{eegnet_forward.1} parent=0
    #allocation2 [shape = 'u8[4096]{0}', space=vmem, size = 0x1000, scoped, tag = 'input window, operand 0']
    #allocation3 [shape = 's32[2]{0}', space=sflag, size = 0x8, scoped, tag = 'scoped memory for eegnet_forward.1']
    #allocation4 [shape = 's32[2]{0}', space=sflag, size = 0x8, scoped, tag = 'scoped memory for eegnet_forward.1']
    #allocation5 [shape = 'u8[4194304]{0}', space=vmem, size = 0x400000, scoped, tag = 'input window, operand 1, single buffered']
    #allocation6 [shape = 's32[1]{0}', space=sflag, size = 0x4, scoped, tag = 'scoped memory for eegnet_forward.1']
    #allocation7 [shape = 'u8[8192]{0}', space=vmem, size = 0x2000, scoped, tag = 'input window, operand 2, single buffered']
    #allocation8 [shape = 'u8[4194304]{0}', space=vmem, size = 0x400000, scoped, tag = 'input window, operand 3, single buffered']
    #allocation9 [shape = 's32[1]{0}', space=sflag, size = 0x4, scoped, tag = 'scoped memory for eegnet_forward.1']
    #allocation10 [shape = 'u8[2048]{0}', space=vmem, size = 0x800, scoped, tag = 'input window, operand 4, single buffered']
    #allocation11 [shape = 'u8[262144]{0}', space=vmem, size = 0x40000, scoped, tag = 'input window, operand 5, single buffered']
    #allocation12 [shape = 's32[1]{0}', space=sflag, size = 0x4, scoped, tag = 'scoped memory for eegnet_forward.1']
    #allocation13 [shape = 'u8[1024]{0}', space=vmem, size = 0x400, scoped, tag = 'output window, operand 0']
    %11 = vsyncpa [#allocation3], 0
    %s12 = scalar_lea.sflag [#allocation3], 1
    %13 = vsyncpa %s12, 0
    %14 = vsyncpa [#allocation6], 0
    %15 = vsyncpa [#allocation9], 0
    %16 = vsyncpa [#allocation12], 0
    %17 = vsyncpa [#allocation4], 0
    %s18 = scalar_lea.sflag [#allocation4], 1
    %19 = vsyncpa %s18, 0
    loop: start=0, step=1, limit=4
    $region2: #{eegnet_forward.1} parent=1 // loop_pre_header
      _
    $region3: #{eegnet_forward.1} parent=1 // loop_header
      %s21 = sphi 0, %s25
      %p22 = scmp.ge.s32.totalorder %s21, 4
      %s31 = sphi 0, %s33
      %s34 = sphi 0, %s31
      %s35 = sphi 0, %s34
      %s51 = sphi 0, %s35
      %s55 = sphi 0, %s55
      %s57 = sphi 0, %s55
      %s58 = sphi 0, %s57
      %s72 = sphi 0, %s58
      %s76 = sphi 0, %s76
      %s78 = sphi 0, %s76
      %s79 = sphi 0, %s78
      %s93 = sphi 0, %s79
      %s97 = sphi 0, %s97
      %s99 = sphi 0, %s97
      %s100 = sphi 0, %s99
      %s114 = sphi 0, %s100
      %s118 = sphi 0, %s118
      %s120 = sphi 0, %s118
      %s121 = sphi 0, %s120
      %s135 = sphi 0, %s121
      %s139 = sphi 0, %s139
      %s141 = sphi 0, %s139
      %s142 = sphi 0, %s141
      %s156 = sphi 0, %s142
      %s162 = sphi 0, %s164
      %s165 = sphi 0, %s162
      %s166 = sphi 0, %s165
      %s182 = sphi 0, %s166
    $region4: #{eegnet_forward.1} parent=1 // loop_header_branch
      %24 = sbr.rel (%p22) target = $region8
    $region5: #{eegnet_forward.1} parent=1 // loop_body
      %s26 = ssub.s32 %s21, 1
      %s27 = ssub.s32 %s21, 2
      %s28 = sadd.s32 %s21, 1
      %s29 = ssub.s32 %s21, %s28
      %p30 = scmp.eq.s32.totalorder %s29, 0
      %s32 = sadd.s32 %s31, 1
      %s33 = scalar_select %p30, %s31, %s32
      %p36 = pneg %p30
      %p37 = scmp.eq.s32.totalorder %s21, 1
      %p38 = por %p36, %p37
      %p39 = scmp.ne.s32.totalorder %s31, %s34
      %p40 = scmp.eq.s32.totalorder %s21, 0
      %p41 = por %p39, %p40
      %p42 = scmp.ne.s32.totalorder %s31, %s34
      %p43 = scmp.eq.s32.totalorder %s26, 1
      %p44 = por %p42, %p43
      %p45 = scmp.ne.s32.totalorder %s34, %s35
      %p46 = scmp.eq.s32.totalorder %s26, 0
      %p47 = por %p45, %p46
      %p48 = scmp.ne.s32.totalorder %s34, %s35
      %p49 = scmp.eq.s32.totalorder %s27, 1
      %p50 = por %p48, %p49
      %p52 = scmp.ne.s32.totalorder %s35, %s51
      %p53 = scmp.eq.s32.totalorder %s27, 0
      %p54 = por %p52, %p53
      %s56 = sadd.s32 %s55, 1
      %p59 = scmp.eq.s32.totalorder %s21, 1
      %p60 = scmp.ne.s32.totalorder %s55, %s57
      %p61 = scmp.eq.s32.totalorder %s21, 0
      %p62 = por %p60, %p61
      %p63 = scmp.ne.s32.totalorder %s55, %s57
      %p64 = scmp.eq.s32.totalorder %s26, 1
      %p65 = por %p63, %p64
      %p66 = scmp.ne.s32.totalorder %s57, %s58
      %p67 = scmp.eq.s32.totalorder %s26, 0
      %p68 = por %p66, %p67
      %p69 = scmp.ne.s32.totalorder %s57, %s58
      %p70 = scmp.eq.s32.totalorder %s27, 1
      %p71 = por %p69, %p70
      %p73 = scmp.ne.s32.totalorder %s58, %s72
      %p74 = scmp.eq.s32.totalorder %s27, 0
      %p75 = por %p73, %p74
      %s77 = sadd.s32 %s76, 1
      %p80 = scmp.eq.s32.totalorder %s21, 1
      %p81 = scmp.ne.s32.totalorder %s76, %s78
      %p82 = scmp.eq.s32.totalorder %s21, 0
      %p83 = por %p81, %p82
      %p84 = scmp.ne.s32.totalorder %s76, %s78
      %p85 = scmp.eq.s32.totalorder %s26, 1
      %p86 = por %p84, %p85
      %p87 = scmp.ne.s32.totalorder %s78, %s79
      %p88 = scmp.eq.s32.totalorder %s26, 0
      %p89 = por %p87, %p88
      %p90 = scmp.ne.s32.totalorder %s78, %s79
      %p91 = scmp.eq.s32.totalorder %s27, 1
      %p92 = por %p90, %p91
      %p94 = scmp.ne.s32.totalorder %s79, %s93
      %p95 = scmp.eq.s32.totalorder %s27, 0
      %p96 = por %p94, %p95
      %s98 = sadd.s32 %s97, 1
      %p101 = scmp.eq.s32.totalorder %s21, 1
      %p102 = scmp.ne.s32.totalorder %s97, %s99
      %p103 = scmp.eq.s32.totalorder %s21, 0
      %p104 = por %p102, %p103
      %p105 = scmp.ne.s32.totalorder %s97, %s99
      %p106 = scmp.eq.s32.totalorder %s26, 1
      %p107 = por %p105, %p106
      %p108 = scmp.ne.s32.totalorder %s99, %s100
      %p109 = scmp.eq.s32.totalorder %s26, 0
      %p110 = por %p108, %p109
      %p111 = scmp.ne.s32.totalorder %s99, %s100
      %p112 = scmp.eq.s32.totalorder %s27, 1
      %p113 = por %p111, %p112
      %p115 = scmp.ne.s32.totalorder %s100, %s114
      %p116 = scmp.eq.s32.totalorder %s27, 0
      %p117 = por %p115, %p116
      %s119 = sadd.s32 %s118, 1
      %p122 = scmp.eq.s32.totalorder %s21, 1
      %p123 = scmp.ne.s32.totalorder %s118, %s120
      %p124 = scmp.eq.s32.totalorder %s21, 0
      %p125 = por %p123, %p124
      %p126 = scmp.ne.s32.totalorder %s118, %s120
      %p127 = scmp.eq.s32.totalorder %s26, 1
      %p128 = por %p126, %p127
      %p129 = scmp.ne.s32.totalorder %s120, %s121
      %p130 = scmp.eq.s32.totalorder %s26, 0
      %p131 = por %p129, %p130
      %p132 = scmp.ne.s32.totalorder %s120, %s121
      %p133 = scmp.eq.s32.totalorder %s27, 1
      %p134 = por %p132, %p133
      %p136 = scmp.ne.s32.totalorder %s121, %s135
      %p137 = scmp.eq.s32.totalorder %s27, 0
      %p138 = por %p136, %p137
      %s140 = sadd.s32 %s139, 1
      %p143 = scmp.eq.s32.totalorder %s21, 1
      %p144 = scmp.ne.s32.totalorder %s139, %s141
      %p145 = scmp.eq.s32.totalorder %s21, 0
      %p146 = por %p144, %p145
      %p147 = scmp.ne.s32.totalorder %s139, %s141
      %p148 = scmp.eq.s32.totalorder %s26, 1
      %p149 = por %p147, %p148
      %p150 = scmp.ne.s32.totalorder %s141, %s142
      %p151 = scmp.eq.s32.totalorder %s26, 0
      %p152 = por %p150, %p151
      %p153 = scmp.ne.s32.totalorder %s141, %s142
      %p154 = scmp.eq.s32.totalorder %s27, 1
      %p155 = por %p153, %p154
      %p157 = scmp.ne.s32.totalorder %s142, %s156
      %p158 = scmp.eq.s32.totalorder %s27, 0
      %p159 = por %p157, %p158
      %s160 = ssub.s32 %s21, %s28
      %p161 = scmp.eq.s32.totalorder %s160, 0
      %s163 = sadd.s32 %s162, 1
      %s164 = scalar_select %p161, %s162, %s163
      %p167 = pneg %p161
      %p168 = scmp.eq.s32.totalorder %s21, 1
      %p169 = por %p167, %p168
      %p170 = scmp.ne.s32.totalorder %s162, %s165
      %p171 = scmp.eq.s32.totalorder %s21, 0
      %p172 = por %p170, %p171
      %p173 = scmp.ne.s32.totalorder %s162, %s165
      %p174 = scmp.eq.s32.totalorder %s26, 1
      %p175 = por %p173, %p174
      %p176 = scmp.ne.s32.totalorder %s165, %s166
      %p177 = scmp.eq.s32.totalorder %s26, 0
      %p178 = por %p176, %p177
      %p179 = scmp.ne.s32.totalorder %s165, %s166
      %p180 = scmp.eq.s32.totalorder %s27, 1
      %p181 = por %p179, %p180
      %p183 = scmp.ne.s32.totalorder %s166, %s182
      %p184 = scmp.eq.s32.totalorder %s27, 0
      %p185 = por %p183, %p184
      %p186 = scmp.le.s32.totalorder 1, %s21
      %p187 = scmp.lt.s32.totalorder %s21, 3
      %p188 = pnand %p186, %p187
      %p189 = pneg %p188
      // Predicated region
      $region9: #{eegnet_forward.1} parent=5 // pred_check
        _
      $region10: #{eegnet_forward.1} parent=5 // pred_check_branch
        %191 = sbr.rel (%p188) target = $region12
      $region11: #{eegnet_forward.1} parent=5 // pred_region
        %s192 = ssub.s32 %s21, 1
        // Predicated region
        $region13: #{eegnet_forward.1} parent=11 // pred_check
          %p193 = pneg %p68
        $region14: #{eegnet_forward.1} parent=11 // pred_check_branch
          %195 = sbr.rel (%p193) target = $region16
        $region15: #{eegnet_forward.1} parent=11 // pred_region
          %197 = vsyncadd [#allocation6], 0
          %s198 = sshll.u32 %s1, 4
          %s199 = int_to_ptr.hbm [resolvable:$true] %s198
          %s200 = sshll.u32 [#allocation5], 4
          %s201 = int_to_ptr.vmem [resolvable:$true] %s200
          %206 = dma.hbm_to_vmem [thread:$0]  %s199, 131072, %s201, [#allocation6], 2048, 2048, 128
        $region16: #{eegnet_forward.1} parent=11 // pred_fallthru
          _
        // Predicated region
        $region17: #{eegnet_forward.1} parent=11 // pred_check
          %p207 = pneg %p89
        $region18: #{eegnet_forward.1} parent=11 // pred_check_branch
          %209 = sbr.rel (%p207) target = $region20
        $region19: #{eegnet_forward.1} parent=11 // pred_region
          %211 = vsyncadd [#allocation6], 0
          %s213 = sshll.u32 %s2, 4
          %s214 = int_to_ptr.hbm [resolvable:$true] %s213
          %s215 = sshll.u32 [#allocation7], 4
          %s216 = int_to_ptr.vmem [resolvable:$true] %s215
          %218 = dma.hbm_to_vmem [thread:$0]  %s214, 256, %s216, [#allocation6]
        $region20: #{eegnet_forward.1} parent=11 // pred_fallthru
          _
        // Predicated region
        $region21: #{eegnet_forward.1} parent=11 // pred_check
          %p219 = pneg %p110
        $region22: #{eegnet_forward.1} parent=11 // pred_check_branch
          %221 = sbr.rel (%p219) target = $region24
        $region23: #{eegnet_forward.1} parent=11 // pred_region
          %223 = vsyncadd [#allocation9], 0
          %s224 = sshll.u32 %s3, 4
          %s225 = int_to_ptr.hbm [resolvable:$true] %s224
          %s226 = sshll.u32 [#allocation8], 4
          %s227 = int_to_ptr.vmem [resolvable:$true] %s226
          %232 = dma.hbm_to_vmem [thread:$0]  %s225, 131072, %s227, [#allocation9], 512, 512, 32
        $region24: #{eegnet_forward.1} parent=11 // pred_fallthru
          _
        // Predicated region
        $region25: #{eegnet_forward.1} parent=11 // pred_check
          %p233 = pneg %p131
        $region26: #{eegnet_forward.1} parent=11 // pred_check_branch
          %235 = sbr.rel (%p233) target = $region28
        $region27: #{eegnet_forward.1} parent=11 // pred_region
          %237 = vsyncadd [#allocation9], 0
          %s239 = sshll.u32 %s4, 4
          %s240 = int_to_ptr.hbm [resolvable:$true] %s239
          %s241 = sshll.u32 [#allocation10], 4
          %s242 = int_to_ptr.vmem [resolvable:$true] %s241
          %244 = dma.hbm_to_vmem [thread:$0]  %s240, 64, %s242, [#allocation9]
        $region28: #{eegnet_forward.1} parent=11 // pred_fallthru
          _
        // Predicated region
        $region29: #{eegnet_forward.1} parent=11 // pred_check
          %p245 = pneg %p152
        $region30: #{eegnet_forward.1} parent=11 // pred_check_branch
          %247 = sbr.rel (%p245) target = $region32
        $region31: #{eegnet_forward.1} parent=11 // pred_region
          %249 = vsyncadd [#allocation12], 0
          %s250 = sshll.u32 %s5, 4
          %s251 = int_to_ptr.hbm [resolvable:$true] %s250
          %s252 = sshll.u32 [#allocation11], 4
          %s253 = int_to_ptr.vmem [resolvable:$true] %s252
          %258 = dma.hbm_to_vmem [thread:$0]  %s251, 8192, %s253, [#allocation12], 128, 128, 8
        $region32: #{eegnet_forward.1} parent=11 // pred_fallthru
          _
      $region12: #{eegnet_forward.1} parent=5 // pred_fallthru
        _
      %p259 = scmp.lt.s32.totalorder %s21, 2
      // Predicated region
      $region33: #{eegnet_forward.1} parent=5 // pred_check
        %p260 = pneg %p259
      $region34: #{eegnet_forward.1} parent=5 // pred_check_branch
        %262 = sbr.rel (%p260) target = $region36
      $region35: #{eegnet_forward.1} parent=5 // pred_region
        // Predicated region
        $region37: #{eegnet_forward.1} parent=35 // pred_check
          %p263 = pneg %p41
        $region38: #{eegnet_forward.1} parent=35 // pred_check_branch
          %265 = sbr.rel (%p263) target = $region40
        $region39: #{eegnet_forward.1} parent=35 // pred_region
          %s266 = sand.u32 %s31, 1
          %s267 = scalar_lea.sflag [#allocation3], %s266
          %s268 = sand.u32 %s31, 1
          %s269 = smul.addr %s268, 4
          %s270 = scalar_lea.vmem [#allocation2], %s269
          %272 = vsyncadd %s267, 0
          %s273 = smul.addr %s21, 4
          %s274 = scalar_lea.hbm %s0, %s273
          %s276 = sshll.u32 %s274, 4
          %s277 = int_to_ptr.hbm [resolvable:$true] %s276
          %s278 = sshll.u32 %s270, 4
          %s279 = int_to_ptr.vmem [resolvable:$true] %s278
          %281 = dma.hbm_to_vmem [thread:$0]  %s277, 64, %s279, %s267
        $region40: #{eegnet_forward.1} parent=35 // pred_fallthru
          _
      $region36: #{eegnet_forward.1} parent=5 // pred_fallthru
        _
      %p282 = scmp.le.s32.totalorder 1, %s21
      %p283 = scmp.lt.s32.totalorder %s21, 3
      %p284 = pnand %p282, %p283
      %p285 = pneg %p284
      // Predicated region
      $region41: #{eegnet_forward.1} parent=5 // pred_check
        _
      $region42: #{eegnet_forward.1} parent=5 // pred_check_branch
        %287 = sbr.rel (%p284) target = $region44
      $region43: #{eegnet_forward.1} parent=5 // pred_region
        %s288 = ssub.s32 %s21, 1
        %s289 = sand.u32 %s34, 1
        %s290 = scalar_lea.sflag [#allocation3], %s289
        %s291 = sand.u32 %s34, 1
        %s292 = smul.addr %s291, 4
        %s293 = scalar_lea.vmem [#allocation2], %s292
        // Predicated region
        $region45: #{eegnet_forward.1} parent=43 // pred_check
          %p294 = pneg %p47
        $region46: #{eegnet_forward.1} parent=43 // pred_check_branch
          %296 = sbr.rel (%p294) target = $region48
        $region47: #{eegnet_forward.1} parent=43 // pred_region
          %298 = dma.done %s290, 64
        $region48: #{eegnet_forward.1} parent=43 // pred_fallthru
          _
        // Predicated region
        $region49: #{eegnet_forward.1} parent=43 // pred_check
          %p299 = pneg %p68
        $region50: #{eegnet_forward.1} parent=43 // pred_check_branch
          %301 = sbr.rel (%p299) target = $region52
        $region51: #{eegnet_forward.1} parent=43 // pred_region
          %303 = dma.done [#allocation6], 131072
        $region52: #{eegnet_forward.1} parent=43 // pred_fallthru
          _
        // Predicated region
        $region53: #{eegnet_forward.1} parent=43 // pred_check
          %p304 = pneg %p89
        $region54: #{eegnet_forward.1} parent=43 // pred_check_branch
          %306 = sbr.rel (%p304) target = $region56
        $region55: #{eegnet_forward.1} parent=43 // pred_region
          %308 = dma.done [#allocation6], 256
        $region56: #{eegnet_forward.1} parent=43 // pred_fallthru
          _
        // Predicated region
        $region57: #{eegnet_forward.1} parent=43 // pred_check
          %p309 = pneg %p110
        $region58: #{eegnet_forward.1} parent=43 // pred_check_branch
          %311 = sbr.rel (%p309) target = $region60
        $region59: #{eegnet_forward.1} parent=43 // pred_region
          %313 = dma.done [#allocation9], 131072
        $region60: #{eegnet_forward.1} parent=43 // pred_fallthru
          _
        // Predicated region
        $region61: #{eegnet_forward.1} parent=43 // pred_check
          %p314 = pneg %p131
        $region62: #{eegnet_forward.1} parent=43 // pred_check_branch
          %316 = sbr.rel (%p314) target = $region64
        $region63: #{eegnet_forward.1} parent=43 // pred_region
          %318 = dma.done [#allocation9], 64
        $region64: #{eegnet_forward.1} parent=43 // pred_fallthru
          _
        // Predicated region
        $region65: #{eegnet_forward.1} parent=43 // pred_check
          %p319 = pneg %p152
        $region66: #{eegnet_forward.1} parent=43 // pred_check_branch
          %321 = sbr.rel (%p319) target = $region68
        $region67: #{eegnet_forward.1} parent=43 // pred_region
          %323 = dma.done [#allocation12], 8192
        $region68: #{eegnet_forward.1} parent=43 // pred_fallthru
          _
        %s324 = sand.u32 %s34, 1
        %s325 = scalar_lea.sflag [#allocation3], %s324
        %s326 = sand.u32 %s34, 1
        %s327 = smul.addr %s326, 4
        %s328 = scalar_lea.vmem [#allocation2], %s327
        %p329 = pneg %p47
        %p330 = pneg %p44
        %p331 = pneg %p68
        %p332 = pneg %p65
        %p333 = pneg %p89
        %p334 = pneg %p86
        %p335 = pneg %p110
        %p336 = pneg %p107
        %p337 = pneg %p131
        %p338 = pneg %p128
        %p339 = pneg %p152
        %p340 = pneg %p149
        %p341 = pneg %p178
        %p342 = pneg %p175
        %s343 = sand.u32 %s165, 1
        %s344 = scalar_lea.sflag [#allocation4], %s343
        %s345 = sand.u32 %s165, 1
        %s346 = scalar_lea.vmem [#allocation13], %s345
        %v347 = vld [vmem:[%s293] sm:$0xf]
        %v348 = vld [vmem:[#allocation5] sm:$0xff]
        %v349 = vld [vmem:[#allocation5 + $0x8] sm:$0xff]
        %v350 = vld [vmem:[#allocation5 + $0x10] sm:$0xff]
        %v351 = vld [vmem:[#allocation5 + $0x18] sm:$0xff]
        %v352 = vld [vmem:[#allocation5 + $0x20] sm:$0xff]
        %v353 = vld [vmem:[#allocation5 + $0x28] sm:$0xff]
        %v354 = vld [vmem:[#allocation5 + $0x30] sm:$0xff]
        %v355 = vld [vmem:[#allocation5 + $0x38] sm:$0xff]
        %v356 = vld [vmem:[#allocation5 + $0x40] sm:$0xff]
        %v357 = vld [vmem:[#allocation5 + $0x48] sm:$0xff]
        %v358 = vld [vmem:[#allocation5 + $0x50] sm:$0xff]
        %v359 = vld [vmem:[#allocation5 + $0x58] sm:$0xff]
        %v360 = vld [vmem:[#allocation5 + $0x60] sm:$0xff]
        %v361 = vld [vmem:[#allocation5 + $0x68] sm:$0xff]
        %v362 = vld [vmem:[#allocation5 + $0x70] sm:$0xff]
        %v363 = vld [vmem:[#allocation5 + $0x78] sm:$0xff]
        %v364 = vld [vmem:[#allocation5 + $0x80] sm:$0xff]
        %v365 = vld [vmem:[#allocation5 + $0x88] sm:$0xff]
        %v366 = vld [vmem:[#allocation5 + $0x90] sm:$0xff]
        %v367 = vld [vmem:[#allocation5 + $0x98] sm:$0xff]
        %v368 = vld [vmem:[#allocation5 + $0xa0] sm:$0xff]
        %v369 = vld [vmem:[#allocation5 + $0xa8] sm:$0xff]
        %v370 = vld [vmem:[#allocation5 + $0xb0] sm:$0xff]
        %v371 = vld [vmem:[#allocation5 + $0xb8] sm:$0xff]
        %v372 = vld [vmem:[#allocation5 + $0xc0] sm:$0xff]
        %v373 = vld [vmem:[#allocation5 + $0xc8] sm:$0xff]
        %v374 = vld [vmem:[#allocation5 + $0xd0] sm:$0xff]
        %v375 = vld [vmem:[#allocation5 + $0xd8] sm:$0xff]
        %v376 = vld [vmem:[#allocation5 + $0xe0] sm:$0xff]
        %v377 = vld [vmem:[#allocation5 + $0xe8] sm:$0xff]
        %v378 = vld [vmem:[#allocation5 + $0xf0] sm:$0xff]
        %v379 = vld [vmem:[#allocation5 + $0xf8] sm:$0xff]
        %v380 = vld [vmem:[#allocation5 + $0x100] sm:$0xff]
        %v381 = vld [vmem:[#allocation5 + $0x108] sm:$0xff]
        %v382 = vld [vmem:[#allocation5 + $0x110] sm:$0xff]
        %v383 = vld [vmem:[#allocation5 + $0x118] sm:$0xff]
        %v384 = vld [vmem:[#allocation5 + $0x120] sm:$0xff]
        %v385 = vld [vmem:[#allocation5 + $0x128] sm:$0xff]
        %v386 = vld [vmem:[#allocation5 + $0x130] sm:$0xff]
        %v387 = vld [vmem:[#allocation5 + $0x138] sm:$0xff]
        %v388 = vld [vmem:[#allocation5 + $0x140] sm:$0xff]
        %v389 = vld [vmem:[#allocation5 + $0x148] sm:$0xff]
        %v390 = vld [vmem:[#allocation5 + $0x150] sm:$0xff]
        %v391 = vld [vmem:[#allocation5 + $0x158] sm:$0xff]
        %v392 = vld [vmem:[#allocation5 + $0x160] sm:$0xff]
        %v393 = vld [vmem:[#allocation5 + $0x168] sm:$0xff]
        %v394 = vld [vmem:[#allocation5 + $0x170] sm:$0xff]
        %v395 = vld [vmem:[#allocation5 + $0x178] sm:$0xff]
        %v396 = vld [vmem:[#allocation5 + $0x180] sm:$0xff]
        %v397 = vld [vmem:[#allocation5 + $0x188] sm:$0xff]
        %v398 = vld [vmem:[#allocation5 + $0x190] sm:$0xff]
        %v399 = vld [vmem:[#allocation5 + $0x198] sm:$0xff]
        %v400 = vld [vmem:[#allocation5 + $0x1a0] sm:$0xff]
        %v401 = vld [vmem:[#allocation5 + $0x1a8] sm:$0xff]
        %v402 = vld [vmem:[#allocation5 + $0x1b0] sm:$0xff]
        %v403 = vld [vmem:[#allocation5 + $0x1b8] sm:$0xff]
        %v404 = vld [vmem:[#allocation5 + $0x1c0] sm:$0xff]
        %v405 = vld [vmem:[#allocation5 + $0x1c8] sm:$0xff]
        %v406 = vld [vmem:[#allocation5 + $0x1d0] sm:$0xff]
        %v407 = vld [vmem:[#allocation5 + $0x1d8] sm:$0xff]
        %v408 = vld [vmem:[#allocation5 + $0x1e0] sm:$0xff]
        %v409 = vld [vmem:[#allocation5 + $0x1e8] sm:$0xff]
        %v410 = vld [vmem:[#allocation5 + $0x1f0] sm:$0xff]
        %v411 = vld [vmem:[#allocation5 + $0x1f8] sm:$0xff]
        %v412 = vld [vmem:[#allocation5 + $0x200] sm:$0xff]
        %v413 = vld [vmem:[#allocation5 + $0x208] sm:$0xff]
        %v414 = vld [vmem:[#allocation5 + $0x210] sm:$0xff]
        %v415 = vld [vmem:[#allocation5 + $0x218] sm:$0xff]
        %v416 = vld [vmem:[#allocation5 + $0x220] sm:$0xff]
        %v417 = vld [vmem:[#allocation5 + $0x228] sm:$0xff]
        %v418 = vld [vmem:[#allocation5 + $0x230] sm:$0xff]
        %v419 = vld [vmem:[#allocation5 + $0x238] sm:$0xff]
        %v420 = vld [vmem:[#allocation5 + $0x240] sm:$0xff]
        %v421 = vld [vmem:[#allocation5 + $0x248] sm:$0xff]
        %v422 = vld [vmem:[#allocation5 + $0x250] sm:$0xff]
        %v423 = vld [vmem:[#allocation5 + $0x258] sm:$0xff]
        %v424 = vld [vmem:[#allocation5 + $0x260] sm:$0xff]
        %v425 = vld [vmem:[#allocation5 + $0x268] sm:$0xff]
        %v426 = vld [vmem:[#allocation5 + $0x270] sm:$0xff]
        %v427 = vld [vmem:[#allocation5 + $0x278] sm:$0xff]
        %v428 = vld [vmem:[#allocation5 + $0x280] sm:$0xff]
        %v429 = vld [vmem:[#allocation5 + $0x288] sm:$0xff]
        %v430 = vld [vmem:[#allocation5 + $0x290] sm:$0xff]
        %v431 = vld [vmem:[#allocation5 + $0x298] sm:$0xff]
        %v432 = vld [vmem:[#allocation5 + $0x2a0] sm:$0xff]
        %v433 = vld [vmem:[#allocation5 + $0x2a8] sm:$0xff]
        %v434 = vld [vmem:[#allocation5 + $0x2b0] sm:$0xff]
        %v435 = vld [vmem:[#allocation5 + $0x2b8] sm:$0xff]
        %v436 = vld [vmem:[#allocation5 + $0x2c0] sm:$0xff]
        %v437 = vld [vmem:[#allocation5 + $0x2c8] sm:$0xff]
        %v438 = vld [vmem:[#allocation5 + $0x2d0] sm:$0xff]
        %v439 = vld [vmem:[#allocation5 + $0x2d8] sm:$0xff]
        %v440 = vld [vmem:[#allocation5 + $0x2e0] sm:$0xff]
        %v441 = vld [vmem:[#allocation5 + $0x2e8] sm:$0xff]
        %v442 = vld [vmem:[#allocation5 + $0x2f0] sm:$0xff]
        %v443 = vld [vmem:[#allocation5 + $0x2f8] sm:$0xff]
        %v444 = vld [vmem:[#allocation5 + $0x300] sm:$0xff]
        %v445 = vld [vmem:[#allocation5 + $0x308] sm:$0xff]
        %v446 = vld [vmem:[#allocation5 + $0x310] sm:$0xff]
        %v447 = vld [vmem:[#allocation5 + $0x318] sm:$0xff]
        %v448 = vld [vmem:[#allocation5 + $0x320] sm:$0xff]
        %v449 = vld [vmem:[#allocation5 + $0x328] sm:$0xff]
        %v450 = vld [vmem:[#allocation5 + $0x330] sm:$0xff]
        %v451 = vld [vmem:[#allocation5 + $0x338] sm:$0xff]
        %v452 = vld [vmem:[#allocation5 + $0x340] sm:$0xff]
        %v453 = vld [vmem:[#allocation5 + $0x348] sm:$0xff]
        %v454 = vld [vmem:[#allocation5 + $0x350] sm:$0xff]
        %v455 = vld [vmem:[#allocation5 + $0x358] sm:$0xff]
        %v456 = vld [vmem:[#allocation5 + $0x360] sm:$0xff]
        %v457 = vld [vmem:[#allocation5 + $0x368] sm:$0xff]
        %v458 = vld [vmem:[#allocation5 + $0x370] sm:$0xff]
        %v459 = vld [vmem:[#allocation5 + $0x378] sm:$0xff]
        %v460 = vld [vmem:[#allocation5 + $0x380] sm:$0xff]
        %v461 = vld [vmem:[#allocation5 + $0x388] sm:$0xff]
        %v462 = vld [vmem:[#allocation5 + $0x390] sm:$0xff]
        %v463 = vld [vmem:[#allocation5 + $0x398] sm:$0xff]
        %v464 = vld [vmem:[#allocation5 + $0x3a0] sm:$0xff]
        %v465 = vld [vmem:[#allocation5 + $0x3a8] sm:$0xff]
        %v466 = vld [vmem:[#allocation5 + $0x3b0] sm:$0xff]
        %v467 = vld [vmem:[#allocation5 + $0x3b8] sm:$0xff]
        %v468 = vld [vmem:[#allocation5 + $0x3c0] sm:$0xff]
        %v469 = vld [vmem:[#allocation5 + $0x3c8] sm:$0xff]
        %v470 = vld [vmem:[#allocation5 + $0x3d0] sm:$0xff]
        %v471 = vld [vmem:[#allocation5 + $0x3d8] sm:$0xff]
        %v472 = vld [vmem:[#allocation5 + $0x3e0] sm:$0xff]
        %v473 = vld [vmem:[#allocation5 + $0x3e8] sm:$0xff]
        %v474 = vld [vmem:[#allocation5 + $0x3f0] sm:$0xff]
        %v475 = vld [vmem:[#allocation5 + $0x3f8] sm:$0xff]
        %v476 = vld [vmem:[#allocation5 + $0x400] sm:$0xff]
        %v477 = vld [vmem:[#allocation5 + $0x408] sm:$0xff]
        %v478 = vld [vmem:[#allocation5 + $0x410] sm:$0xff]
        %v479 = vld [vmem:[#allocation5 + $0x418] sm:$0xff]
        %v480 = vld [vmem:[#allocation5 + $0x420] sm:$0xff]
        %v481 = vld [vmem:[#allocation5 + $0x428] sm:$0xff]
        %v482 = vld [vmem:[#allocation5 + $0x430] sm:$0xff]
        %v483 = vld [vmem:[#allocation5 + $0x438] sm:$0xff]
        %v484 = vld [vmem:[#allocation5 + $0x440] sm:$0xff]
        %v485 = vld [vmem:[#allocation5 + $0x448] sm:$0xff]
        %v486 = vld [vmem:[#allocation5 + $0x450] sm:$0xff]
        %v487 = vld [vmem:[#allocation5 + $0x458] sm:$0xff]
        %v488 = vld [vmem:[#allocation5 + $0x460] sm:$0xff]
        %v489 = vld [vmem:[#allocation5 + $0x468] sm:$0xff]
        %v490 = vld [vmem:[#allocation5 + $0x470] sm:$0xff]
        %v491 = vld [vmem:[#allocation5 + $0x478] sm:$0xff]
        %v492 = vld [vmem:[#allocation5 + $0x480] sm:$0xff]
        %v493 = vld [vmem:[#allocation5 + $0x488] sm:$0xff]
        %v494 = vld [vmem:[#allocation5 + $0x490] sm:$0xff]
        %v495 = vld [vmem:[#allocation5 + $0x498] sm:$0xff]
        %v496 = vld [vmem:[#allocation5 + $0x4a0] sm:$0xff]
        %v497 = vld [vmem:[#allocation5 + $0x4a8] sm:$0xff]
        %v498 = vld [vmem:[#allocation5 + $0x4b0] sm:$0xff]
        %v499 = vld [vmem:[#allocation5 + $0x4b8] sm:$0xff]
        %v500 = vld [vmem:[#allocation5 + $0x4c0] sm:$0xff]
        %v501 = vld [vmem:[#allocation5 + $0x4c8] sm:$0xff]
        %v502 = vld [vmem:[#allocation5 + $0x4d0] sm:$0xff]
        %v503 = vld [vmem:[#allocation5 + $0x4d8] sm:$0xff]
        %v504 = vld [vmem:[#allocation5 + $0x4e0] sm:$0xff]
        %v505 = vld [vmem:[#allocation5 + $0x4e8] sm:$0xff]
        %v506 = vld [vmem:[#allocation5 + $0x4f0] sm:$0xff]
        %v507 = vld [vmem:[#allocation5 + $0x4f8] sm:$0xff]
        %v508 = vld [vmem:[#allocation5 + $0x500] sm:$0xff]
        %v509 = vld [vmem:[#allocation5 + $0x508] sm:$0xff]
        %v510 = vld [vmem:[#allocation5 + $0x510] sm:$0xff]
        %v511 = vld [vmem:[#allocation5 + $0x518] sm:$0xff]
        %v512 = vld [vmem:[#allocation5 + $0x520] sm:$0xff]
        %v513 = vld [vmem:[#allocation5 + $0x528] sm:$0xff]
        %v514 = vld [vmem:[#allocation5 + $0x530] sm:$0xff]
        %v515 = vld [vmem:[#allocation5 + $0x538] sm:$0xff]
        %v516 = vld [vmem:[#allocation5 + $0x540] sm:$0xff]
        %v517 = vld [vmem:[#allocation5 + $0x548] sm:$0xff]
        %v518 = vld [vmem:[#allocation5 + $0x550] sm:$0xff]
        %v519 = vld [vmem:[#allocation5 + $0x558] sm:$0xff]
        %v520 = vld [vmem:[#allocation5 + $0x560] sm:$0xff]
        %v521 = vld [vmem:[#allocation5 + $0x568] sm:$0xff]
        %v522 = vld [vmem:[#allocation5 + $0x570] sm:$0xff]
        %v523 = vld [vmem:[#allocation5 + $0x578] sm:$0xff]
        %v524 = vld [vmem:[#allocation5 + $0x580] sm:$0xff]
        %v525 = vld [vmem:[#allocation5 + $0x588] sm:$0xff]
        %v526 = vld [vmem:[#allocation5 + $0x590] sm:$0xff]
        %v527 = vld [vmem:[#allocation5 + $0x598] sm:$0xff]
        %v528 = vld [vmem:[#allocation5 + $0x5a0] sm:$0xff]
        %v529 = vld [vmem:[#allocation5 + $0x5a8] sm:$0xff]
        %v530 = vld [vmem:[#allocation5 + $0x5b0] sm:$0xff]
        %v531 = vld [vmem:[#allocation5 + $0x5b8] sm:$0xff]
        %v532 = vld [vmem:[#allocation5 + $0x5c0] sm:$0xff]
        %v533 = vld [vmem:[#allocation5 + $0x5c8] sm:$0xff]
        %v534 = vld [vmem:[#allocation5 + $0x5d0] sm:$0xff]
        %v535 = vld [vmem:[#allocation5 + $0x5d8] sm:$0xff]
        %v536 = vld [vmem:[#allocation5 + $0x5e0] sm:$0xff]
        %v537 = vld [vmem:[#allocation5 + $0x5e8] sm:$0xff]
        %v538 = vld [vmem:[#allocation5 + $0x5f0] sm:$0xff]
        %v539 = vld [vmem:[#allocation5 + $0x5f8] sm:$0xff]
        %v540 = vld [vmem:[#allocation5 + $0x600] sm:$0xff]
        %v541 = vld [vmem:[#allocation5 + $0x608] sm:$0xff]
        %v542 = vld [vmem:[#allocation5 + $0x610] sm:$0xff]
        %v543 = vld [vmem:[#allocation5 + $0x618] sm:$0xff]
        %v544 = vld [vmem:[#allocation5 + $0x620] sm:$0xff]
        %v545 = vld [vmem:[#allocation5 + $0x628] sm:$0xff]
        %v546 = vld [vmem:[#allocation5 + $0x630] sm:$0xff]
        %v547 = vld [vmem:[#allocation5 + $0x638] sm:$0xff]
        %v548 = vld [vmem:[#allocation5 + $0x640] sm:$0xff]
        %v549 = vld [vmem:[#allocation5 + $0x648] sm:$0xff]
        %v550 = vld [vmem:[#allocation5 + $0x650] sm:$0xff]
        %v551 = vld [vmem:[#allocation5 + $0x658] sm:$0xff]
        %v552 = vld [vmem:[#allocation5 + $0x660] sm:$0xff]
        %v553 = vld [vmem:[#allocation5 + $0x668] sm:$0xff]
        %v554 = vld [vmem:[#allocation5 + $0x670] sm:$0xff]
        %v555 = vld [vmem:[#allocation5 + $0x678] sm:$0xff]
        %v556 = vld [vmem:[#allocation5 + $0x680] sm:$0xff]
        %v557 = vld [vmem:[#allocation5 + $0x688] sm:$0xff]
        %v558 = vld [vmem:[#allocation5 + $0x690] sm:$0xff]
        %v559 = vld [vmem:[#allocation5 + $0x698] sm:$0xff]
        %v560 = vld [vmem:[#allocation5 + $0x6a0] sm:$0xff]
        %v561 = vld [vmem:[#allocation5 + $0x6a8] sm:$0xff]
        %v562 = vld [vmem:[#allocation5 + $0x6b0] sm:$0xff]
        %v563 = vld [vmem:[#allocation5 + $0x6b8] sm:$0xff]
        %v564 = vld [vmem:[#allocation5 + $0x6c0] sm:$0xff]
        %v565 = vld [vmem:[#allocation5 + $0x6c8] sm:$0xff]
        %v566 = vld [vmem:[#allocation5 + $0x6d0] sm:$0xff]
        %v567 = vld [vmem:[#allocation5 + $0x6d8] sm:$0xff]
        %v568 = vld [vmem:[#allocation5 + $0x6e0] sm:$0xff]
        %v569 = vld [vmem:[#allocation5 + $0x6e8] sm:$0xff]
        %v570 = vld [vmem:[#allocation5 + $0x6f0] sm:$0xff]
        %v571 = vld [vmem:[#allocation5 + $0x6f8] sm:$0xff]
        %v572 = vld [vmem:[#allocation5 + $0x700] sm:$0xff]
        %v573 = vld [vmem:[#allocation5 + $0x708] sm:$0xff]
        %v574 = vld [vmem:[#allocation5 + $0x710] sm:$0xff]
        %v575 = vld [vmem:[#allocation5 + $0x718] sm:$0xff]
        %v576 = vld [vmem:[#allocation5 + $0x720] sm:$0xff]
        %v577 = vld [vmem:[#allocation5 + $0x728] sm:$0xff]
        %v578 = vld [vmem:[#allocation5 + $0x730] sm:$0xff]
        %v579 = vld [vmem:[#allocation5 + $0x738] sm:$0xff]
        %v580 = vld [vmem:[#allocation5 + $0x740] sm:$0xff]
        %v581 = vld [vmem:[#allocation5 + $0x748] sm:$0xff]
        %v582 = vld [vmem:[#allocation5 + $0x750] sm:$0xff]
        %v583 = vld [vmem:[#allocation5 + $0x758] sm:$0xff]
        %v584 = vld [vmem:[#allocation5 + $0x760] sm:$0xff]
        %v585 = vld [vmem:[#allocation5 + $0x768] sm:$0xff]
        %v586 = vld [vmem:[#allocation5 + $0x770] sm:$0xff]
        %v587 = vld [vmem:[#allocation5 + $0x778] sm:$0xff]
        %v588 = vld [vmem:[#allocation5 + $0x780] sm:$0xff]
        %v589 = vld [vmem:[#allocation5 + $0x788] sm:$0xff]
        %v590 = vld [vmem:[#allocation5 + $0x790] sm:$0xff]
        %v591 = vld [vmem:[#allocation5 + $0x798] sm:$0xff]
        %v592 = vld [vmem:[#allocation5 + $0x7a0] sm:$0xff]
        %v593 = vld [vmem:[#allocation5 + $0x7a8] sm:$0xff]
        %v594 = vld [vmem:[#allocation5 + $0x7b0] sm:$0xff]
        %v595 = vld [vmem:[#allocation5 + $0x7b8] sm:$0xff]
        %v596 = vld [vmem:[#allocation5 + $0x7c0] sm:$0xff]
        %v597 = vld [vmem:[#allocation5 + $0x7c8] sm:$0xff]
        %v598 = vld [vmem:[#allocation5 + $0x7d0] sm:$0xff]
        %v599 = vld [vmem:[#allocation5 + $0x7d8] sm:$0xff]
        %v600 = vld [vmem:[#allocation5 + $0x7e0] sm:$0xff]
        %v601 = vld [vmem:[#allocation5 + $0x7e8] sm:$0xff]
        %v602 = vld [vmem:[#allocation5 + $0x7f0] sm:$0xff]
        %v603 = vld [vmem:[#allocation5 + $0x7f8] sm:$0xff]
        %v604 = vld [vmem:[#allocation5 + $0x800] sm:$0xff]
        %v605 = vld [vmem:[#allocation5 + $0x808] sm:$0xff]
        %v606 = vld [vmem:[#allocation5 + $0x810] sm:$0xff]
        %v607 = vld [vmem:[#allocation5 + $0x818] sm:$0xff]
        %v608 = vld [vmem:[#allocation5 + $0x820] sm:$0xff]
        %v609 = vld [vmem:[#allocation5 + $0x828] sm:$0xff]
        %v610 = vld [vmem:[#allocation5 + $0x830] sm:$0xff]
        %v611 = vld [vmem:[#allocation5 + $0x838] sm:$0xff]
        %v612 = vld [vmem:[#allocation5 + $0x840] sm:$0xff]
        %v613 = vld [vmem:[#allocation5 + $0x848] sm:$0xff]
        %v614 = vld [vmem:[#allocation5 + $0x850] sm:$0xff]
        %v615 = vld [vmem:[#allocation5 + $0x858] sm:$0xff]
        %v616 = vld [vmem:[#allocation5 + $0x860] sm:$0xff]
        %v617 = vld [vmem:[#allocation5 + $0x868] sm:$0xff]
        %v618 = vld [vmem:[#allocation5 + $0x870] sm:$0xff]
        %v619 = vld [vmem:[#allocation5 + $0x878] sm:$0xff]
        %v620 = vld [vmem:[#allocation5 + $0x880] sm:$0xff]
        %v621 = vld [vmem:[#allocation5 + $0x888] sm:$0xff]
        %v622 = vld [vmem:[#allocation5 + $0x890] sm:$0xff]
        %v623 = vld [vmem:[#allocation5 + $0x898] sm:$0xff]
        %v624 = vld [vmem:[#allocation5 + $0x8a0] sm:$0xff]
        %v625 = vld [vmem:[#allocation5 + $0x8a8] sm:$0xff]
        %v626 = vld [vmem:[#allocation5 + $0x8b0] sm:$0xff]
        %v627 = vld [vmem:[#allocation5 + $0x8b8] sm:$0xff]
        %v628 = vld [vmem:[#allocation5 + $0x8c0] sm:$0xff]
        %v629 = vld [vmem:[#allocation5 + $0x8c8] sm:$0xff]
        %v630 = vld [vmem:[#allocation5 + $0x8d0] sm:$0xff]
        %v631 = vld [vmem:[#allocation5 + $0x8d8] sm:$0xff]
        %v632 = vld [vmem:[#allocation5 + $0x8e0] sm:$0xff]
        %v633 = vld [vmem:[#allocation5 + $0x8e8] sm:$0xff]
        %v634 = vld [vmem:[#allocation5 + $0x8f0] sm:$0xff]
        %v635 = vld [vmem:[#allocation5 + $0x8f8] sm:$0xff]
        %v636 = vld [vmem:[#allocation5 + $0x900] sm:$0xff]
        %v637 = vld [vmem:[#allocation5 + $0x908] sm:$0xff]
        %v638 = vld [vmem:[#allocation5 + $0x910] sm:$0xff]
        %v639 = vld [vmem:[#allocation5 + $0x918] sm:$0xff]
        %v640 = vld [vmem:[#allocation5 + $0x920] sm:$0xff]
        %v641 = vld [vmem:[#allocation5 + $0x928] sm:$0xff]
        %v642 = vld [vmem:[#allocation5 + $0x930] sm:$0xff]
        %v643 = vld [vmem:[#allocation5 + $0x938] sm:$0xff]
        %v644 = vld [vmem:[#allocation5 + $0x940] sm:$0xff]
        %v645 = vld [vmem:[#allocation5 + $0x948] sm:$0xff]
        %v646 = vld [vmem:[#allocation5 + $0x950] sm:$0xff]
        %v647 = vld [vmem:[#allocation5 + $0x958] sm:$0xff]
        %v648 = vld [vmem:[#allocation5 + $0x960] sm:$0xff]
        %v649 = vld [vmem:[#allocation5 + $0x968] sm:$0xff]
        %v650 = vld [vmem:[#allocation5 + $0x970] sm:$0xff]
        %v651 = vld [vmem:[#allocation5 + $0x978] sm:$0xff]
        %v652 = vld [vmem:[#allocation5 + $0x980] sm:$0xff]
        %v653 = vld [vmem:[#allocation5 + $0x988] sm:$0xff]
        %v654 = vld [vmem:[#allocation5 + $0x990] sm:$0xff]
        %v655 = vld [vmem:[#allocation5 + $0x998] sm:$0xff]
        %v656 = vld [vmem:[#allocation5 + $0x9a0] sm:$0xff]
        %v657 = vld [vmem:[#allocation5 + $0x9a8] sm:$0xff]
        %v658 = vld [vmem:[#allocation5 + $0x9b0] sm:$0xff]
        %v659 = vld [vmem:[#allocation5 + $0x9b8] sm:$0xff]
        %v660 = vld [vmem:[#allocation5 + $0x9c0] sm:$0xff]
        %v661 = vld [vmem:[#allocation5 + $0x9c8] sm:$0xff]
        %v662 = vld [vmem:[#allocation5 + $0x9d0] sm:$0xff]
        %v663 = vld [vmem:[#allocation5 + $0x9d8] sm:$0xff]
        %v664 = vld [vmem:[#allocation5 + $0x9e0] sm:$0xff]
        %v665 = vld [vmem:[#allocation5 + $0x9e8] sm:$0xff]
        %v666 = vld [vmem:[#allocation5 + $0x9f0] sm:$0xff]
        %v667 = vld [vmem:[#allocation5 + $0x9f8] sm:$0xff]
        %v668 = vld [vmem:[#allocation5 + $0xa00] sm:$0xff]
        %v669 = vld [vmem:[#allocation5 + $0xa08] sm:$0xff]
        %v670 = vld [vmem:[#allocation5 + $0xa10] sm:$0xff]
        %v671 = vld [vmem:[#allocation5 + $0xa18] sm:$0xff]
        %v672 = vld [vmem:[#allocation5 + $0xa20] sm:$0xff]
        %v673 = vld [vmem:[#allocation5 + $0xa28] sm:$0xff]
        %v674 = vld [vmem:[#allocation5 + $0xa30] sm:$0xff]
        %v675 = vld [vmem:[#allocation5 + $0xa38] sm:$0xff]
        %v676 = vld [vmem:[#allocation5 + $0xa40] sm:$0xff]
        %v677 = vld [vmem:[#allocation5 + $0xa48] sm:$0xff]
        %v678 = vld [vmem:[#allocation5 + $0xa50] sm:$0xff]
        %v679 = vld [vmem:[#allocation5 + $0xa58] sm:$0xff]
        %v680 = vld [vmem:[#allocation5 + $0xa60] sm:$0xff]
        %v681 = vld [vmem:[#allocation5 + $0xa68] sm:$0xff]
        %v682 = vld [vmem:[#allocation5 + $0xa70] sm:$0xff]
        %v683 = vld [vmem:[#allocation5 + $0xa78] sm:$0xff]
        %v684 = vld [vmem:[#allocation5 + $0xa80] sm:$0xff]
        %v685 = vld [vmem:[#allocation5 + $0xa88] sm:$0xff]
        %v686 = vld [vmem:[#allocation5 + $0xa90] sm:$0xff]
        %v687 = vld [vmem:[#allocation5 + $0xa98] sm:$0xff]
        %v688 = vld [vmem:[#allocation5 + $0xaa0] sm:$0xff]
        %v689 = vld [vmem:[#allocation5 + $0xaa8] sm:$0xff]
        %v690 = vld [vmem:[#allocation5 + $0xab0] sm:$0xff]
        %v691 = vld [vmem:[#allocation5 + $0xab8] sm:$0xff]
        %v692 = vld [vmem:[#allocation5 + $0xac0] sm:$0xff]
        %v693 = vld [vmem:[#allocation5 + $0xac8] sm:$0xff]
        %v694 = vld [vmem:[#allocation5 + $0xad0] sm:$0xff]
        %v695 = vld [vmem:[#allocation5 + $0xad8] sm:$0xff]
        %v696 = vld [vmem:[#allocation5 + $0xae0] sm:$0xff]
        %v697 = vld [vmem:[#allocation5 + $0xae8] sm:$0xff]
        %v698 = vld [vmem:[#allocation5 + $0xaf0] sm:$0xff]
        %v699 = vld [vmem:[#allocation5 + $0xaf8] sm:$0xff]
        %v700 = vld [vmem:[#allocation5 + $0xb00] sm:$0xff]
        %v701 = vld [vmem:[#allocation5 + $0xb08] sm:$0xff]
        %v702 = vld [vmem:[#allocation5 + $0xb10] sm:$0xff]
        %v703 = vld [vmem:[#allocation5 + $0xb18] sm:$0xff]
        %v704 = vld [vmem:[#allocation5 + $0xb20] sm:$0xff]
        %v705 = vld [vmem:[#allocation5 + $0xb28] sm:$0xff]
        %v706 = vld [vmem:[#allocation5 + $0xb30] sm:$0xff]
        %v707 = vld [vmem:[#allocation5 + $0xb38] sm:$0xff]
        %v708 = vld [vmem:[#allocation5 + $0xb40] sm:$0xff]
        %v709 = vld [vmem:[#allocation5 + $0xb48] sm:$0xff]
        %v710 = vld [vmem:[#allocation5 + $0xb50] sm:$0xff]
        %v711 = vld [vmem:[#allocation5 + $0xb58] sm:$0xff]
        %v712 = vld [vmem:[#allocation5 + $0xb60] sm:$0xff]
        %v713 = vld [vmem:[#allocation5 + $0xb68] sm:$0xff]
        %v714 = vld [vmem:[#allocation5 + $0xb70] sm:$0xff]
        %v715 = vld [vmem:[#allocation5 + $0xb78] sm:$0xff]
        %v716 = vld [vmem:[#allocation5 + $0xb80] sm:$0xff]
        %v717 = vld [vmem:[#allocation5 + $0xb88] sm:$0xff]
        %v718 = vld [vmem:[#allocation5 + $0xb90] sm:$0xff]
        %v719 = vld [vmem:[#allocation5 + $0xb98] sm:$0xff]
        %v720 = vld [vmem:[#allocation5 + $0xba0] sm:$0xff]
        %v721 = vld [vmem:[#allocation5 + $0xba8] sm:$0xff]
        %v722 = vld [vmem:[#allocation5 + $0xbb0] sm:$0xff]
        %v723 = vld [vmem:[#allocation5 + $0xbb8] sm:$0xff]
        %v724 = vld [vmem:[#allocation5 + $0xbc0] sm:$0xff]
        %v725 = vld [vmem:[#allocation5 + $0xbc8] sm:$0xff]
        %v726 = vld [vmem:[#allocation5 + $0xbd0] sm:$0xff]
        %v727 = vld [vmem:[#allocation5 + $0xbd8] sm:$0xff]
        %v728 = vld [vmem:[#allocation5 + $0xbe0] sm:$0xff]
        %v729 = vld [vmem:[#allocation5 + $0xbe8] sm:$0xff]
        %v730 = vld [vmem:[#allocation5 + $0xbf0] sm:$0xff]
        %v731 = vld [vmem:[#allocation5 + $0xbf8] sm:$0xff]
        %v732 = vld [vmem:[#allocation5 + $0xc00] sm:$0xff]
        %v733 = vld [vmem:[#allocation5 + $0xc08] sm:$0xff]
        %v734 = vld [vmem:[#allocation5 + $0xc10] sm:$0xff]
        %v735 = vld [vmem:[#allocation5 + $0xc18] sm:$0xff]
        %v736 = vld [vmem:[#allocation5 + $0xc20] sm:$0xff]
        %v737 = vld [vmem:[#allocation5 + $0xc28] sm:$0xff]
        %v738 = vld [vmem:[#allocation5 + $0xc30] sm:$0xff]
        %v739 = vld [vmem:[#allocation5 + $0xc38] sm:$0xff]
        %v740 = vld [vmem:[#allocation5 + $0xc40] sm:$0xff]
        %v741 = vld [vmem:[#allocation5 + $0xc48] sm:$0xff]
        %v742 = vld [vmem:[#allocation5 + $0xc50] sm:$0xff]
        %v743 = vld [vmem:[#allocation5 + $0xc58] sm:$0xff]
        %v744 = vld [vmem:[#allocation5 + $0xc60] sm:$0xff]
        %v745 = vld [vmem:[#allocation5 + $0xc68] sm:$0xff]
        %v746 = vld [vmem:[#allocation5 + $0xc70] sm:$0xff]
        %v747 = vld [vmem:[#allocation5 + $0xc78] sm:$0xff]
        %v748 = vld [vmem:[#allocation5 + $0xc80] sm:$0xff]
        %v749 = vld [vmem:[#allocation5 + $0xc88] sm:$0xff]
        %v750 = vld [vmem:[#allocation5 + $0xc90] sm:$0xff]
        %v751 = vld [vmem:[#allocation5 + $0xc98] sm:$0xff]
        %v752 = vld [vmem:[#allocation5 + $0xca0] sm:$0xff]
        %v753 = vld [vmem:[#allocation5 + $0xca8] sm:$0xff]
        %v754 = vld [vmem:[#allocation5 + $0xcb0] sm:$0xff]
        %v755 = vld [vmem:[#allocation5 + $0xcb8] sm:$0xff]
        %v756 = vld [vmem:[#allocation5 + $0xcc0] sm:$0xff]
        %v757 = vld [vmem:[#allocation5 + $0xcc8] sm:$0xff]
        %v758 = vld [vmem:[#allocation5 + $0xcd0] sm:$0xff]
        %v759 = vld [vmem:[#allocation5 + $0xcd8] sm:$0xff]
        %v760 = vld [vmem:[#allocation5 + $0xce0] sm:$0xff]
        %v761 = vld [vmem:[#allocation5 + $0xce8] sm:$0xff]
        %v762 = vld [vmem:[#allocation5 + $0xcf0] sm:$0xff]
        %v763 = vld [vmem:[#allocation5 + $0xcf8] sm:$0xff]
        %v764 = vld [vmem:[#allocation5 + $0xd00] sm:$0xff]
        %v765 = vld [vmem:[#allocation5 + $0xd08] sm:$0xff]
        %v766 = vld [vmem:[#allocation5 + $0xd10] sm:$0xff]
        %v767 = vld [vmem:[#allocation5 + $0xd18] sm:$0xff]
        %v768 = vld [vmem:[#allocation5 + $0xd20] sm:$0xff]
        %v769 = vld [vmem:[#allocation5 + $0xd28] sm:$0xff]
        %v770 = vld [vmem:[#allocation5 + $0xd30] sm:$0xff]
        %v771 = vld [vmem:[#allocation5 + $0xd38] sm:$0xff]
        %v772 = vld [vmem:[#allocation5 + $0xd40] sm:$0xff]
        %v773 = vld [vmem:[#allocation5 + $0xd48] sm:$0xff]
        %v774 = vld [vmem:[#allocation5 + $0xd50] sm:$0xff]
        %v775 = vld [vmem:[#allocation5 + $0xd58] sm:$0xff]
        %v776 = vld [vmem:[#allocation5 + $0xd60] sm:$0xff]
        %v777 = vld [vmem:[#allocation5 + $0xd68] sm:$0xff]
        %v778 = vld [vmem:[#allocation5 + $0xd70] sm:$0xff]
        %v779 = vld [vmem:[#allocation5 + $0xd78] sm:$0xff]
        %v780 = vld [vmem:[#allocation5 + $0xd80] sm:$0xff]
        %v781 = vld [vmem:[#allocation5 + $0xd88] sm:$0xff]
        %v782 = vld [vmem:[#allocation5 + $0xd90] sm:$0xff]
        %v783 = vld [vmem:[#allocation5 + $0xd98] sm:$0xff]
        %v784 = vld [vmem:[#allocation5 + $0xda0] sm:$0xff]
        %v785 = vld [vmem:[#allocation5 + $0xda8] sm:$0xff]
        %v786 = vld [vmem:[#allocation5 + $0xdb0] sm:$0xff]
        %v787 = vld [vmem:[#allocation5 + $0xdb8] sm:$0xff]
        %v788 = vld [vmem:[#allocation5 + $0xdc0] sm:$0xff]
        %v789 = vld [vmem:[#allocation5 + $0xdc8] sm:$0xff]
        %v790 = vld [vmem:[#allocation5 + $0xdd0] sm:$0xff]
        %v791 = vld [vmem:[#allocation5 + $0xdd8] sm:$0xff]
        %v792 = vld [vmem:[#allocation5 + $0xde0] sm:$0xff]
        %v793 = vld [vmem:[#allocation5 + $0xde8] sm:$0xff]
        %v794 = vld [vmem:[#allocation5 + $0xdf0] sm:$0xff]
        %v795 = vld [vmem:[#allocation5 + $0xdf8] sm:$0xff]
        %v796 = vld [vmem:[#allocation5 + $0xe00] sm:$0xff]
        %v797 = vld [vmem:[#allocation5 + $0xe08] sm:$0xff]
        %v798 = vld [vmem:[#allocation5 + $0xe10] sm:$0xff]
        %v799 = vld [vmem:[#allocation5 + $0xe18] sm:$0xff]
        %v800 = vld [vmem:[#allocation5 + $0xe20] sm:$0xff]
        %v801 = vld [vmem:[#allocation5 + $0xe28] sm:$0xff]
        %v802 = vld [vmem:[#allocation5 + $0xe30] sm:$0xff]
        %v803 = vld [vmem:[#allocation5 + $0xe38] sm:$0xff]
        %v804 = vld [vmem:[#allocation5 + $0xe40] sm:$0xff]
        %v805 = vld [vmem:[#allocation5 + $0xe48] sm:$0xff]
        %v806 = vld [vmem:[#allocation5 + $0xe50] sm:$0xff]
        %v807 = vld [vmem:[#allocation5 + $0xe58] sm:$0xff]
        %v808 = vld [vmem:[#allocation5 + $0xe60] sm:$0xff]
        %v809 = vld [vmem:[#allocation5 + $0xe68] sm:$0xff]
        %v810 = vld [vmem:[#allocation5 + $0xe70] sm:$0xff]
        %v811 = vld [vmem:[#allocation5 + $0xe78] sm:$0xff]
        %v812 = vld [vmem:[#allocation5 + $0xe80] sm:$0xff]
        %v813 = vld [vmem:[#allocation5 + $0xe88] sm:$0xff]
        %v814 = vld [vmem:[#allocation5 + $0xe90] sm:$0xff]
        %v815 = vld [vmem:[#allocation5 + $0xe98] sm:$0xff]
        %v816 = vld [vmem:[#allocation5 + $0xea0] sm:$0xff]
        %v817 = vld [vmem:[#allocation5 + $0xea8] sm:$0xff]
        %v818 = vld [vmem:[#allocation5 + $0xeb0] sm:$0xff]
        %v819 = vld [vmem:[#allocation5 + $0xeb8] sm:$0xff]
        %v820 = vld [vmem:[#allocation5 + $0xec0] sm:$0xff]
        %v821 = vld [vmem:[#allocation5 + $0xec8] sm:$0xff]
        %v822 = vld [vmem:[#allocation5 + $0xed0] sm:$0xff]
        %v823 = vld [vmem:[#allocation5 + $0xed8] sm:$0xff]
        %v824 = vld [vmem:[#allocation5 + $0xee0] sm:$0xff]
        %v825 = vld [vmem:[#allocation5 + $0xee8] sm:$0xff]
        %v826 = vld [vmem:[#allocation5 + $0xef0] sm:$0xff]
        %v827 = vld [vmem:[#allocation5 + $0xef8] sm:$0xff]
        %v828 = vld [vmem:[#allocation5 + $0xf00] sm:$0xff]
        %v829 = vld [vmem:[#allocation5 + $0xf08] sm:$0xff]
        %v830 = vld [vmem:[#allocation5 + $0xf10] sm:$0xff]
        %v831 = vld [vmem:[#allocation5 + $0xf18] sm:$0xff]
        %v832 = vld [vmem:[#allocation5 + $0xf20] sm:$0xff]
        %v833 = vld [vmem:[#allocation5 + $0xf28] sm:$0xff]
        %v834 = vld [vmem:[#allocation5 + $0xf30] sm:$0xff]
        %v835 = vld [vmem:[#allocation5 + $0xf38] sm:$0xff]
        %v836 = vld [vmem:[#allocation5 + $0xf40] sm:$0xff]
        %v837 = vld [vmem:[#allocation5 + $0xf48] sm:$0xff]
        %v838 = vld [vmem:[#allocation5 + $0xf50] sm:$0xff]
        %v839 = vld [vmem:[#allocation5 + $0xf58] sm:$0xff]
        %v840 = vld [vmem:[#allocation5 + $0xf60] sm:$0xff]
        %v841 = vld [vmem:[#allocation5 + $0xf68] sm:$0xff]
        %v842 = vld [vmem:[#allocation5 + $0xf70] sm:$0xff]
        %v843 = vld [vmem:[#allocation5 + $0xf78] sm:$0xff]
        %v844 = vld [vmem:[#allocation5 + $0xf80] sm:$0xff]
        %v845 = vld [vmem:[#allocation5 + $0xf88] sm:$0xff]
        %v846 = vld [vmem:[#allocation5 + $0xf90] sm:$0xff]
        %v847 = vld [vmem:[#allocation5 + $0xf98] sm:$0xff]
        %v848 = vld [vmem:[#allocation5 + $0xfa0] sm:$0xff]
        %v849 = vld [vmem:[#allocation5 + $0xfa8] sm:$0xff]
        %v850 = vld [vmem:[#allocation5 + $0xfb0] sm:$0xff]
        %v851 = vld [vmem:[#allocation5 + $0xfb8] sm:$0xff]
        %v852 = vld [vmem:[#allocation5 + $0xfc0] sm:$0xff]
        %v853 = vld [vmem:[#allocation5 + $0xfc8] sm:$0xff]
        %v854 = vld [vmem:[#allocation5 + $0xfd0] sm:$0xff]
        %v855 = vld [vmem:[#allocation5 + $0xfd8] sm:$0xff]
        %v856 = vld [vmem:[#allocation5 + $0xfe0] sm:$0xff]
        %v857 = vld [vmem:[#allocation5 + $0xfe8] sm:$0xff]
        %v858 = vld [vmem:[#allocation5 + $0xff0] sm:$0xff]
        %v859 = vld [vmem:[#allocation5 + $0xff8] sm:$0xff]
        %v860 = vld [vmem:[#allocation5 + $0x1000] sm:$0xff]
        %v861 = vld [vmem:[#allocation5 + $0x1008] sm:$0xff]
        %v862 = vld [vmem:[#allocation5 + $0x1010] sm:$0xff]
        %v863 = vld [vmem:[#allocation5 + $0x1018] sm:$0xff]
        %v864 = vld [vmem:[#allocation5 + $0x1020] sm:$0xff]
        %v865 = vld [vmem:[#allocation5 + $0x1028] sm:$0xff]
        %v866 = vld [vmem:[#allocation5 + $0x1030] sm:$0xff]
        %v867 = vld [vmem:[#allocation5 + $0x1038] sm:$0xff]
        %v868 = vld [vmem:[#allocation5 + $0x1040] sm:$0xff]
        %v869 = vld [vmem:[#allocation5 + $0x1048] sm:$0xff]
        %v870 = vld [vmem:[#allocation5 + $0x1050] sm:$0xff]
        %v871 = vld [vmem:[#allocation5 + $0x1058] sm:$0xff]
        %v872 = vld [vmem:[#allocation5 + $0x1060] sm:$0xff]
        %v873 = vld [vmem:[#allocation5 + $0x1068] sm:$0xff]
        %v874 = vld [vmem:[#allocation5 + $0x1070] sm:$0xff]
        %v875 = vld [vmem:[#allocation5 + $0x1078] sm:$0xff]
        %v876 = vld [vmem:[#allocation5 + $0x1080] sm:$0xff]
        %v877 = vld [vmem:[#allocation5 + $0x1088] sm:$0xff]
        %v878 = vld [vmem:[#allocation5 + $0x1090] sm:$0xff]
        %v879 = vld [vmem:[#allocation5 + $0x1098] sm:$0xff]
        %v880 = vld [vmem:[#allocation5 + $0x10a0] sm:$0xff]
        %v881 = vld [vmem:[#allocation5 + $0x10a8] sm:$0xff]
        %v882 = vld [vmem:[#allocation5 + $0x10b0] sm:$0xff]
        %v883 = vld [vmem:[#allocation5 + $0x10b8] sm:$0xff]
        %v884 = vld [vmem:[#allocation5 + $0x10c0] sm:$0xff]
        %v885 = vld [vmem:[#allocation5 + $0x10c8] sm:$0xff]
        %v886 = vld [vmem:[#allocation5 + $0x10d0] sm:$0xff]
        %v887 = vld [vmem:[#allocation5 + $0x10d8] sm:$0xff]
        %v888 = vld [vmem:[#allocation5 + $0x10e0] sm:$0xff]
        %v889 = vld [vmem:[#allocation5 + $0x10e8] sm:$0xff]
        %v890 = vld [vmem:[#allocation5 + $0x10f0] sm:$0xff]
        %v891 = vld [vmem:[#allocation5 + $0x10f8] sm:$0xff]
        %v892 = vld [vmem:[#allocation5 + $0x1100] sm:$0xff]
        %v893 = vld [vmem:[#allocation5 + $0x1108] sm:$0xff]
        %v894 = vld [vmem:[#allocation5 + $0x1110] sm:$0xff]
        %v895 = vld [vmem:[#allocation5 + $0x1118] sm:$0xff]
        %v896 = vld [vmem:[#allocation5 + $0x1120] sm:$0xff]
        %v897 = vld [vmem:[#allocation5 + $0x1128] sm:$0xff]
        %v898 = vld [vmem:[#allocation5 + $0x1130] sm:$0xff]
        %v899 = vld [vmem:[#allocation5 + $0x1138] sm:$0xff]
        %v900 = vld [vmem:[#allocation5 + $0x1140] sm:$0xff]
        %v901 = vld [vmem:[#allocation5 + $0x1148] sm:$0xff]
        %v902 = vld [vmem:[#allocation5 + $0x1150] sm:$0xff]
        %v903 = vld [vmem:[#allocation5 + $0x1158] sm:$0xff]
        %v904 = vld [vmem:[#allocation5 + $0x1160] sm:$0xff]
        %v905 = vld [vmem:[#allocation5 + $0x1168] sm:$0xff]
        %v906 = vld [vmem:[#allocation5 + $0x1170] sm:$0xff]
        %v907 = vld [vmem:[#allocation5 + $0x1178] sm:$0xff]
        %v908 = vld [vmem:[#allocation5 + $0x1180] sm:$0xff]
        %v909 = vld [vmem:[#allocation5 + $0x1188] sm:$0xff]
        %v910 = vld [vmem:[#allocation5 + $0x1190] sm:$0xff]
        %v911 = vld [vmem:[#allocation5 + $0x1198] sm:$0xff]
        %v912 = vld [vmem:[#allocation5 + $0x11a0] sm:$0xff]
        %v913 = vld [vmem:[#allocation5 + $0x11a8] sm:$0xff]
        %v914 = vld [vmem:[#allocation5 + $0x11b0] sm:$0xff]
        %v915 = vld [vmem:[#allocation5 + $0x11b8] sm:$0xff]
        %v916 = vld [vmem:[#allocation5 + $0x11c0] sm:$0xff]
        %v917 = vld [vmem:[#allocation5 + $0x11c8] sm:$0xff]
        %v918 = vld [vmem:[#allocation5 + $0x11d0] sm:$0xff]
        %v919 = vld [vmem:[#allocation5 + $0x11d8] sm:$0xff]
        %v920 = vld [vmem:[#allocation5 + $0x11e0] sm:$0xff]
        %v921 = vld [vmem:[#allocation5 + $0x11e8] sm:$0xff]
        %v922 = vld [vmem:[#allocation5 + $0x11f0] sm:$0xff]
        %v923 = vld [vmem:[#allocation5 + $0x11f8] sm:$0xff]
        %v924 = vld [vmem:[#allocation5 + $0x1200] sm:$0xff]
        %v925 = vld [vmem:[#allocation5 + $0x1208] sm:$0xff]
        %v926 = vld [vmem:[#allocation5 + $0x1210] sm:$0xff]
        %v927 = vld [vmem:[#allocation5 + $0x1218] sm:$0xff]
        %v928 = vld [vmem:[#allocation5 + $0x1220] sm:$0xff]
        %v929 = vld [vmem:[#allocation5 + $0x1228] sm:$0xff]
        %v930 = vld [vmem:[#allocation5 + $0x1230] sm:$0xff]
        %v931 = vld [vmem:[#allocation5 + $0x1238] sm:$0xff]
        %v932 = vld [vmem:[#allocation5 + $0x1240] sm:$0xff]
        %v933 = vld [vmem:[#allocation5 + $0x1248] sm:$0xff]
        %v934 = vld [vmem:[#allocation5 + $0x1250] sm:$0xff]
        %v935 = vld [vmem:[#allocation5 + $0x1258] sm:$0xff]
        %v936 = vld [vmem:[#allocation5 + $0x1260] sm:$0xff]
        %v937 = vld [vmem:[#allocation5 + $0x1268] sm:$0xff]
        %v938 = vld [vmem:[#allocation5 + $0x1270] sm:$0xff]
        %v939 = vld [vmem:[#allocation5 + $0x1278] sm:$0xff]
        %v940 = vld [vmem:[#allocation5 + $0x1280] sm:$0xff]
        %v941 = vld [vmem:[#allocation5 + $0x1288] sm:$0xff]
        %v942 = vld [vmem:[#allocation5 + $0x1290] sm:$0xff]
        %v943 = vld [vmem:[#allocation5 + $0x1298] sm:$0xff]
        %v944 = vld [vmem:[#allocation5 + $0x12a0] sm:$0xff]
        %v945 = vld [vmem:[#allocation5 + $0x12a8] sm:$0xff]
        %v946 = vld [vmem:[#allocation5 + $0x12b0] sm:$0xff]
        %v947 = vld [vmem:[#allocation5 + $0x12b8] sm:$0xff]
        %v948 = vld [vmem:[#allocation5 + $0x12c0] sm:$0xff]
        %v949 = vld [vmem:[#allocation5 + $0x12c8] sm:$0xff]
        %v950 = vld [vmem:[#allocation5 + $0x12d0] sm:$0xff]
        %v951 = vld [vmem:[#allocation5 + $0x12d8] sm:$0xff]
        %v952 = vld [vmem:[#allocation5 + $0x12e0] sm:$0xff]
        %v953 = vld [vmem:[#allocation5 + $0x12e8] sm:$0xff]
        %v954 = vld [vmem:[#allocation5 + $0x12f0] sm:$0xff]
        %v955 = vld [vmem:[#allocation5 + $0x12f8] sm:$0xff]
        %v956 = vld [vmem:[#allocation5 + $0x1300] sm:$0xff]
        %v957 = vld [vmem:[#allocation5 + $0x1308] sm:$0xff]
        %v958 = vld [vmem:[#allocation5 + $0x1310] sm:$0xff]
        %v959 = vld [vmem:[#allocation5 + $0x1318] sm:$0xff]
        %v960 = vld [vmem:[#allocation5 + $0x1320] sm:$0xff]
        %v961 = vld [vmem:[#allocation5 + $0x1328] sm:$0xff]
        %v962 = vld [vmem:[#allocation5 + $0x1330] sm:$0xff]
        %v963 = vld [vmem:[#allocation5 + $0x1338] sm:$0xff]
        %v964 = vld [vmem:[#allocation5 + $0x1340] sm:$0xff]
        %v965 = vld [vmem:[#allocation5 + $0x1348] sm:$0xff]
        %v966 = vld [vmem:[#allocation5 + $0x1350] sm:$0xff]
        %v967 = vld [vmem:[#allocation5 + $0x1358] sm:$0xff]
        %v968 = vld [vmem:[#allocation5 + $0x1360] sm:$0xff]
        %v969 = vld [vmem:[#allocation5 + $0x1368] sm:$0xff]
        %v970 = vld [vmem:[#allocation5 + $0x1370] sm:$0xff]
        %v971 = vld [vmem:[#allocation5 + $0x1378] sm:$0xff]
        %v972 = vld [vmem:[#allocation5 + $0x1380] sm:$0xff]
        %v973 = vld [vmem:[#allocation5 + $0x1388] sm:$0xff]
        %v974 = vld [vmem:[#allocation5 + $0x1390] sm:$0xff]
        %v975 = vld [vmem:[#allocation5 + $0x1398] sm:$0xff]
        %v976 = vld [vmem:[#allocation5 + $0x13a0] sm:$0xff]
        %v977 = vld [vmem:[#allocation5 + $0x13a8] sm:$0xff]
        %v978 = vld [vmem:[#allocation5 + $0x13b0] sm:$0xff]
        %v979 = vld [vmem:[#allocation5 + $0x13b8] sm:$0xff]
        %v980 = vld [vmem:[#allocation5 + $0x13c0] sm:$0xff]
        %v981 = vld [vmem:[#allocation5 + $0x13c8] sm:$0xff]
        %v982 = vld [vmem:[#allocation5 + $0x13d0] sm:$0xff]
        %v983 = vld [vmem:[#allocation5 + $0x13d8] sm:$0xff]
        %v984 = vld [vmem:[#allocation5 + $0x13e0] sm:$0xff]
        %v985 = vld [vmem:[#allocation5 + $0x13e8] sm:$0xff]
        %v986 = vld [vmem:[#allocation5 + $0x13f0] sm:$0xff]
        %v987 = vld [vmem:[#allocation5 + $0x13f8] sm:$0xff]
        %v988 = vld [vmem:[#allocation5 + $0x1400] sm:$0xff]
        %v989 = vld [vmem:[#allocation5 + $0x1408] sm:$0xff]
        %v990 = vld [vmem:[#allocation5 + $0x1410] sm:$0xff]
        %v991 = vld [vmem:[#allocation5 + $0x1418] sm:$0xff]
        %v992 = vld [vmem:[#allocation5 + $0x1420] sm:$0xff]
        %v993 = vld [vmem:[#allocation5 + $0x1428] sm:$0xff]
        %v994 = vld [vmem:[#allocation5 + $0x1430] sm:$0xff]
        %v995 = vld [vmem:[#allocation5 + $0x1438] sm:$0xff]
        %v996 = vld [vmem:[#allocation5 + $0x1440] sm:$0xff]
        %v997 = vld [vmem:[#allocation5 + $0x1448] sm:$0xff]
        %v998 = vld [vmem:[#allocation5 + $0x1450] sm:$0xff]
        %v999 = vld [vmem:[#allocation5 + $0x1458] sm:$0xff]
        %v1000 = vld [vmem:[#allocation5 + $0x1460] sm:$0xff]
        %v1001 = vld [vmem:[#allocation5 + $0x1468] sm:$0xff]
        %v1002 = vld [vmem:[#allocation5 + $0x1470] sm:$0xff]
        %v1003 = vld [vmem:[#allocation5 + $0x1478] sm:$0xff]
        %v1004 = vld [vmem:[#allocation5 + $0x1480] sm:$0xff]
        %v1005 = vld [vmem:[#allocation5 + $0x1488] sm:$0xff]
        %v1006 = vld [vmem:[#allocation5 + $0x1490] sm:$0xff]
        %v1007 = vld [vmem:[#allocation5 + $0x1498] sm:$0xff]
        %v1008 = vld [vmem:[#allocation5 + $0x14a0] sm:$0xff]
        %v1009 = vld [vmem:[#allocation5 + $0x14a8] sm:$0xff]
        %v1010 = vld [vmem:[#allocation5 + $0x14b0] sm:$0xff]
        %v1011 = vld [vmem:[#allocation5 + $0x14b8] sm:$0xff]
        %v1012 = vld [vmem:[#allocation5 + $0x14c0] sm:$0xff]
        %v1013 = vld [vmem:[#allocation5 + $0x14c8] sm:$0xff]
        %v1014 = vld [vmem:[#allocation5 + $0x14d0] sm:$0xff]
        %v1015 = vld [vmem:[#allocation5 + $0x14d8] sm:$0xff]
        %v1016 = vld [vmem:[#allocation5 + $0x14e0] sm:$0xff]
        %v1017 = vld [vmem:[#allocation5 + $0x14e8] sm:$0xff]
        %v1018 = vld [vmem:[#allocation5 + $0x14f0] sm:$0xff]
        %v1019 = vld [vmem:[#allocation5 + $0x14f8] sm:$0xff]
        %v1020 = vld [vmem:[#allocation5 + $0x1500] sm:$0xff]
        %v1021 = vld [vmem:[#allocation5 + $0x1508] sm:$0xff]
        %v1022 = vld [vmem:[#allocation5 + $0x1510] sm:$0xff]
        %v1023 = vld [vmem:[#allocation5 + $0x1518] sm:$0xff]
        %v1024 = vld [vmem:[#allocation5 + $0x1520] sm:$0xff]
        %v1025 = vld [vmem:[#allocation5 + $0x1528] sm:$0xff]
        %v1026 = vld [vmem:[#allocation5 + $0x1530] sm:$0xff]
        %v1027 = vld [vmem:[#allocation5 + $0x1538] sm:$0xff]
        %v1028 = vld [vmem:[#allocation5 + $0x1540] sm:$0xff]
        %v1029 = vld [vmem:[#allocation5 + $0x1548] sm:$0xff]
        %v1030 = vld [vmem:[#allocation5 + $0x1550] sm:$0xff]
        %v1031 = vld [vmem:[#allocation5 + $0x1558] sm:$0xff]
        %v1032 = vld [vmem:[#allocation5 + $0x1560] sm:$0xff]
        %v1033 = vld [vmem:[#allocation5 + $0x1568] sm:$0xff]
        %v1034 = vld [vmem:[#allocation5 + $0x1570] sm:$0xff]
        %v1035 = vld [vmem:[#allocation5 + $0x1578] sm:$0xff]
        %v1036 = vld [vmem:[#allocation5 + $0x1580] sm:$0xff]
        %v1037 = vld [vmem:[#allocation5 + $0x1588] sm:$0xff]
        %v1038 = vld [vmem:[#allocation5 + $0x1590] sm:$0xff]
        %v1039 = vld [vmem:[#allocation5 + $0x1598] sm:$0xff]
        %v1040 = vld [vmem:[#allocation5 + $0x15a0] sm:$0xff]
        %v1041 = vld [vmem:[#allocation5 + $0x15a8] sm:$0xff]
        %v1042 = vld [vmem:[#allocation5 + $0x15b0] sm:$0xff]
        %v1043 = vld [vmem:[#allocation5 + $0x15b8] sm:$0xff]
        %v1044 = vld [vmem:[#allocation5 + $0x15c0] sm:$0xff]
        %v1045 = vld [vmem:[#allocation5 + $0x15c8] sm:$0xff]
        %v1046 = vld [vmem:[#allocation5 + $0x15d0] sm:$0xff]
        %v1047 = vld [vmem:[#allocation5 + $0x15d8] sm:$0xff]
        %v1048 = vld [vmem:[#allocation5 + $0x15e0] sm:$0xff]
        %v1049 = vld [vmem:[#allocation5 + $0x15e8] sm:$0xff]
        %v1050 = vld [vmem:[#allocation5 + $0x15f0] sm:$0xff]
        %v1051 = vld [vmem:[#allocation5 + $0x15f8] sm:$0xff]
        %v1052 = vld [vmem:[#allocation5 + $0x1600] sm:$0xff]
        %v1053 = vld [vmem:[#allocation5 + $0x1608] sm:$0xff]
        %v1054 = vld [vmem:[#allocation5 + $0x1610] sm:$0xff]
        %v1055 = vld [vmem:[#allocation5 + $0x1618] sm:$0xff]
        %v1056 = vld [vmem:[#allocation5 + $0x1620] sm:$0xff]
        %v1057 = vld [vmem:[#allocation5 + $0x1628] sm:$0xff]
        %v1058 = vld [vmem:[#allocation5 + $0x1630] sm:$0xff]
        %v1059 = vld [vmem:[#allocation5 + $0x1638] sm:$0xff]
        %v1060 = vld [vmem:[#allocation5 + $0x1640] sm:$0xff]
        %v1061 = vld [vmem:[#allocation5 + $0x1648] sm:$0xff]
        %v1062 = vld [vmem:[#allocation5 + $0x1650] sm:$0xff]
        %v1063 = vld [vmem:[#allocation5 + $0x1658] sm:$0xff]
        %v1064 = vld [vmem:[#allocation5 + $0x1660] sm:$0xff]
        %v1065 = vld [vmem:[#allocation5 + $0x1668] sm:$0xff]
        %v1066 = vld [vmem:[#allocation5 + $0x1670] sm:$0xff]
        %v1067 = vld [vmem:[#allocation5 + $0x1678] sm:$0xff]
        %v1068 = vld [vmem:[#allocation5 + $0x1680] sm:$0xff]
        %v1069 = vld [vmem:[#allocation5 + $0x1688] sm:$0xff]
        %v1070 = vld [vmem:[#allocation5 + $0x1690] sm:$0xff]
        %v1071 = vld [vmem:[#allocation5 + $0x1698] sm:$0xff]
        %v1072 = vld [vmem:[#allocation5 + $0x16a0] sm:$0xff]
        %v1073 = vld [vmem:[#allocation5 + $0x16a8] sm:$0xff]
        %v1074 = vld [vmem:[#allocation5 + $0x16b0] sm:$0xff]
        %v1075 = vld [vmem:[#allocation5 + $0x16b8] sm:$0xff]
        %v1076 = vld [vmem:[#allocation5 + $0x16c0] sm:$0xff]
        %v1077 = vld [vmem:[#allocation5 + $0x16c8] sm:$0xff]
        %v1078 = vld [vmem:[#allocation5 + $0x16d0] sm:$0xff]
        %v1079 = vld [vmem:[#allocation5 + $0x16d8] sm:$0xff]
        %v1080 = vld [vmem:[#allocation5 + $0x16e0] sm:$0xff]
        %v1081 = vld [vmem:[#allocation5 + $0x16e8] sm:$0xff]
        %v1082 = vld [vmem:[#allocation5 + $0x16f0] sm:$0xff]
        %v1083 = vld [vmem:[#allocation5 + $0x16f8] sm:$0xff]
        %v1084 = vld [vmem:[#allocation5 + $0x1700] sm:$0xff]
        %v1085 = vld [vmem:[#allocation5 + $0x1708] sm:$0xff]
        %v1086 = vld [vmem:[#allocation5 + $0x1710] sm:$0xff]
        %v1087 = vld [vmem:[#allocation5 + $0x1718] sm:$0xff]
        %v1088 = vld [vmem:[#allocation5 + $0x1720] sm:$0xff]
        %v1089 = vld [vmem:[#allocation5 + $0x1728] sm:$0xff]
        %v1090 = vld [vmem:[#allocation5 + $0x1730] sm:$0xff]
        %v1091 = vld [vmem:[#allocation5 + $0x1738] sm:$0xff]
        %v1092 = vld [vmem:[#allocation5 + $0x1740] sm:$0xff]
        %v1093 = vld [vmem:[#allocation5 + $0x1748] sm:$0xff]
        %v1094 = vld [vmem:[#allocation5 + $0x1750] sm:$0xff]
        %v1095 = vld [vmem:[#allocation5 + $0x1758] sm:$0xff]
        %v1096 = vld [vmem:[#allocation5 + $0x1760] sm:$0xff]
        %v1097 = vld [vmem:[#allocation5 + $0x1768] sm:$0xff]
        %v1098 = vld [vmem:[#allocation5 + $0x1770] sm:$0xff]
        %v1099 = vld [vmem:[#allocation5 + $0x1778] sm:$0xff]
        %v1100 = vld [vmem:[#allocation5 + $0x1780] sm:$0xff]
        %v1101 = vld [vmem:[#allocation5 + $0x1788] sm:$0xff]
        %v1102 = vld [vmem:[#allocation5 + $0x1790] sm:$0xff]
        %v1103 = vld [vmem:[#allocation5 + $0x1798] sm:$0xff]
        %v1104 = vld [vmem:[#allocation5 + $0x17a0] sm:$0xff]
        %v1105 = vld [vmem:[#allocation5 + $0x17a8] sm:$0xff]
        %v1106 = vld [vmem:[#allocation5 + $0x17b0] sm:$0xff]
        %v1107 = vld [vmem:[#allocation5 + $0x17b8] sm:$0xff]
        %v1108 = vld [vmem:[#allocation5 + $0x17c0] sm:$0xff]
        %v1109 = vld [vmem:[#allocation5 + $0x17c8] sm:$0xff]
        %v1110 = vld [vmem:[#allocation5 + $0x17d0] sm:$0xff]
        %v1111 = vld [vmem:[#allocation5 + $0x17d8] sm:$0xff]
        %v1112 = vld [vmem:[#allocation5 + $0x17e0] sm:$0xff]
        %v1113 = vld [vmem:[#allocation5 + $0x17e8] sm:$0xff]
        %v1114 = vld [vmem:[#allocation5 + $0x17f0] sm:$0xff]
        %v1115 = vld [vmem:[#allocation5 + $0x17f8] sm:$0xff]
        %v1116 = vld [vmem:[#allocation5 + $0x1800] sm:$0xff]
        %v1117 = vld [vmem:[#allocation5 + $0x1808] sm:$0xff]
        %v1118 = vld [vmem:[#allocation5 + $0x1810] sm:$0xff]
        %v1119 = vld [vmem:[#allocation5 + $0x1818] sm:$0xff]
        %v1120 = vld [vmem:[#allocation5 + $0x1820] sm:$0xff]
        %v1121 = vld [vmem:[#allocation5 + $0x1828] sm:$0xff]
        %v1122 = vld [vmem:[#allocation5 + $0x1830] sm:$0xff]
        %v1123 = vld [vmem:[#allocation5 + $0x1838] sm:$0xff]
        %v1124 = vld [vmem:[#allocation5 + $0x1840] sm:$0xff]
        %v1125 = vld [vmem:[#allocation5 + $0x1848] sm:$0xff]
        %v1126 = vld [vmem:[#allocation5 + $0x1850] sm:$0xff]
        %v1127 = vld [vmem:[#allocation5 + $0x1858] sm:$0xff]
        %v1128 = vld [vmem:[#allocation5 + $0x1860] sm:$0xff]
        %v1129 = vld [vmem:[#allocation5 + $0x1868] sm:$0xff]
        %v1130 = vld [vmem:[#allocation5 + $0x1870] sm:$0xff]
        %v1131 = vld [vmem:[#allocation5 + $0x1878] sm:$0xff]
        %v1132 = vld [vmem:[#allocation5 + $0x1880] sm:$0xff]
        %v1133 = vld [vmem:[#allocation5 + $0x1888] sm:$0xff]
        %v1134 = vld [vmem:[#allocation5 + $0x1890] sm:$0xff]
        %v1135 = vld [vmem:[#allocation5 + $0x1898] sm:$0xff]
        %v1136 = vld [vmem:[#allocation5 + $0x18a0] sm:$0xff]
        %v1137 = vld [vmem:[#allocation5 + $0x18a8] sm:$0xff]
        %v1138 = vld [vmem:[#allocation5 + $0x18b0] sm:$0xff]
        %v1139 = vld [vmem:[#allocation5 + $0x18b8] sm:$0xff]
        %v1140 = vld [vmem:[#allocation5 + $0x18c0] sm:$0xff]
        %v1141 = vld [vmem:[#allocation5 + $0x18c8] sm:$0xff]
        %v1142 = vld [vmem:[#allocation5 + $0x18d0] sm:$0xff]
        %v1143 = vld [vmem:[#allocation5 + $0x18d8] sm:$0xff]
        %v1144 = vld [vmem:[#allocation5 + $0x18e0] sm:$0xff]
        %v1145 = vld [vmem:[#allocation5 + $0x18e8] sm:$0xff]
        %v1146 = vld [vmem:[#allocation5 + $0x18f0] sm:$0xff]
        %v1147 = vld [vmem:[#allocation5 + $0x18f8] sm:$0xff]
        %v1148 = vld [vmem:[#allocation5 + $0x1900] sm:$0xff]
        %v1149 = vld [vmem:[#allocation5 + $0x1908] sm:$0xff]
        %v1150 = vld [vmem:[#allocation5 + $0x1910] sm:$0xff]
        %v1151 = vld [vmem:[#allocation5 + $0x1918] sm:$0xff]
        %v1152 = vld [vmem:[#allocation5 + $0x1920] sm:$0xff]
        %v1153 = vld [vmem:[#allocation5 + $0x1928] sm:$0xff]
        %v1154 = vld [vmem:[#allocation5 + $0x1930] sm:$0xff]
        %v1155 = vld [vmem:[#allocation5 + $0x1938] sm:$0xff]
        %v1156 = vld [vmem:[#allocation5 + $0x1940] sm:$0xff]
        %v1157 = vld [vmem:[#allocation5 + $0x1948] sm:$0xff]
        %v1158 = vld [vmem:[#allocation5 + $0x1950] sm:$0xff]
        %v1159 = vld [vmem:[#allocation5 + $0x1958] sm:$0xff]
        %v1160 = vld [vmem:[#allocation5 + $0x1960] sm:$0xff]
        %v1161 = vld [vmem:[#allocation5 + $0x1968] sm:$0xff]
        %v1162 = vld [vmem:[#allocation5 + $0x1970] sm:$0xff]
        %v1163 = vld [vmem:[#allocation5 + $0x1978] sm:$0xff]
        %v1164 = vld [vmem:[#allocation5 + $0x1980] sm:$0xff]
        %v1165 = vld [vmem:[#allocation5 + $0x1988] sm:$0xff]
        %v1166 = vld [vmem:[#allocation5 + $0x1990] sm:$0xff]
        %v1167 = vld [vmem:[#allocation5 + $0x1998] sm:$0xff]
        %v1168 = vld [vmem:[#allocation5 + $0x19a0] sm:$0xff]
        %v1169 = vld [vmem:[#allocation5 + $0x19a8] sm:$0xff]
        %v1170 = vld [vmem:[#allocation5 + $0x19b0] sm:$0xff]
        %v1171 = vld [vmem:[#allocation5 + $0x19b8] sm:$0xff]
        %v1172 = vld [vmem:[#allocation5 + $0x19c0] sm:$0xff]
        %v1173 = vld [vmem:[#allocation5 + $0x19c8] sm:$0xff]
        %v1174 = vld [vmem:[#allocation5 + $0x19d0] sm:$0xff]
        %v1175 = vld [vmem:[#allocation5 + $0x19d8] sm:$0xff]
        %v1176 = vld [vmem:[#allocation5 + $0x19e0] sm:$0xff]
        %v1177 = vld [vmem:[#allocation5 + $0x19e8] sm:$0xff]
        %v1178 = vld [vmem:[#allocation5 + $0x19f0] sm:$0xff]
        %v1179 = vld [vmem:[#allocation5 + $0x19f8] sm:$0xff]
        %v1180 = vld [vmem:[#allocation5 + $0x1a00] sm:$0xff]
        %v1181 = vld [vmem:[#allocation5 + $0x1a08] sm:$0xff]
        %v1182 = vld [vmem:[#allocation5 + $0x1a10] sm:$0xff]
        %v1183 = vld [vmem:[#allocation5 + $0x1a18] sm:$0xff]
        %v1184 = vld [vmem:[#allocation5 + $0x1a20] sm:$0xff]
        %v1185 = vld [vmem:[#allocation5 + $0x1a28] sm:$0xff]
        %v1186 = vld [vmem:[#allocation5 + $0x1a30] sm:$0xff]
        %v1187 = vld [vmem:[#allocation5 + $0x1a38] sm:$0xff]
        %v1188 = vld [vmem:[#allocation5 + $0x1a40] sm:$0xff]
        %v1189 = vld [vmem:[#allocation5 + $0x1a48] sm:$0xff]
        %v1190 = vld [vmem:[#allocation5 + $0x1a50] sm:$0xff]
        %v1191 = vld [vmem:[#allocation5 + $0x1a58] sm:$0xff]
        %v1192 = vld [vmem:[#allocation5 + $0x1a60] sm:$0xff]
        %v1193 = vld [vmem:[#allocation5 + $0x1a68] sm:$0xff]
        %v1194 = vld [vmem:[#allocation5 + $0x1a70] sm:$0xff]
        %v1195 = vld [vmem:[#allocation5 + $0x1a78] sm:$0xff]
        %v1196 = vld [vmem:[#allocation5 + $0x1a80] sm:$0xff]
        %v1197 = vld [vmem:[#allocation5 + $0x1a88] sm:$0xff]
        %v1198 = vld [vmem:[#allocation5 + $0x1a90] sm:$0xff]
        %v1199 = vld [vmem:[#allocation5 + $0x1a98] sm:$0xff]
        %v1200 = vld [vmem:[#allocation5 + $0x1aa0] sm:$0xff]
        %v1201 = vld [vmem:[#allocation5 + $0x1aa8] sm:$0xff]
        %v1202 = vld [vmem:[#allocation5 + $0x1ab0] sm:$0xff]
        %v1203 = vld [vmem:[#allocation5 + $0x1ab8] sm:$0xff]
        %v1204 = vld [vmem:[#allocation5 + $0x1ac0] sm:$0xff]
        %v1205 = vld [vmem:[#allocation5 + $0x1ac8] sm:$0xff]
        %v1206 = vld [vmem:[#allocation5 + $0x1ad0] sm:$0xff]
        %v1207 = vld [vmem:[#allocation5 + $0x1ad8] sm:$0xff]
        %v1208 = vld [vmem:[#allocation5 + $0x1ae0] sm:$0xff]
        %v1209 = vld [vmem:[#allocation5 + $0x1ae8] sm:$0xff]
        %v1210 = vld [vmem:[#allocation5 + $0x1af0] sm:$0xff]
        %v1211 = vld [vmem:[#allocation5 + $0x1af8] sm:$0xff]
        %v1212 = vld [vmem:[#allocation5 + $0x1b00] sm:$0xff]
        %v1213 = vld [vmem:[#allocation5 + $0x1b08] sm:$0xff]
        %v1214 = vld [vmem:[#allocation5 + $0x1b10] sm:$0xff]
        %v1215 = vld [vmem:[#allocation5 + $0x1b18] sm:$0xff]
        %v1216 = vld [vmem:[#allocation5 + $0x1b20] sm:$0xff]
        %v1217 = vld [vmem:[#allocation5 + $0x1b28] sm:$0xff]
        %v1218 = vld [vmem:[#allocation5 + $0x1b30] sm:$0xff]
        %v1219 = vld [vmem:[#allocation5 + $0x1b38] sm:$0xff]
        %v1220 = vld [vmem:[#allocation5 + $0x1b40] sm:$0xff]
        %v1221 = vld [vmem:[#allocation5 + $0x1b48] sm:$0xff]
        %v1222 = vld [vmem:[#allocation5 + $0x1b50] sm:$0xff]
        %v1223 = vld [vmem:[#allocation5 + $0x1b58] sm:$0xff]
        %v1224 = vld [vmem:[#allocation5 + $0x1b60] sm:$0xff]
        %v1225 = vld [vmem:[#allocation5 + $0x1b68] sm:$0xff]
        %v1226 = vld [vmem:[#allocation5 + $0x1b70] sm:$0xff]
        %v1227 = vld [vmem:[#allocation5 + $0x1b78] sm:$0xff]
        %v1228 = vld [vmem:[#allocation5 + $0x1b80] sm:$0xff]
        %v1229 = vld [vmem:[#allocation5 + $0x1b88] sm:$0xff]
        %v1230 = vld [vmem:[#allocation5 + $0x1b90] sm:$0xff]
        %v1231 = vld [vmem:[#allocation5 + $0x1b98] sm:$0xff]
        %v1232 = vld [vmem:[#allocation5 + $0x1ba0] sm:$0xff]
        %v1233 = vld [vmem:[#allocation5 + $0x1ba8] sm:$0xff]
        %v1234 = vld [vmem:[#allocation5 + $0x1bb0] sm:$0xff]
        %v1235 = vld [vmem:[#allocation5 + $0x1bb8] sm:$0xff]
        %v1236 = vld [vmem:[#allocation5 + $0x1bc0] sm:$0xff]
        %v1237 = vld [vmem:[#allocation5 + $0x1bc8] sm:$0xff]
        %v1238 = vld [vmem:[#allocation5 + $0x1bd0] sm:$0xff]
        %v1239 = vld [vmem:[#allocation5 + $0x1bd8] sm:$0xff]
        %v1240 = vld [vmem:[#allocation5 + $0x1be0] sm:$0xff]
        %v1241 = vld [vmem:[#allocation5 + $0x1be8] sm:$0xff]
        %v1242 = vld [vmem:[#allocation5 + $0x1bf0] sm:$0xff]
        %v1243 = vld [vmem:[#allocation5 + $0x1bf8] sm:$0xff]
        %v1244 = vld [vmem:[#allocation5 + $0x1c00] sm:$0xff]
        %v1245 = vld [vmem:[#allocation5 + $0x1c08] sm:$0xff]
        %v1246 = vld [vmem:[#allocation5 + $0x1c10] sm:$0xff]
        %v1247 = vld [vmem:[#allocation5 + $0x1c18] sm:$0xff]
        %v1248 = vld [vmem:[#allocation5 + $0x1c20] sm:$0xff]
        %v1249 = vld [vmem:[#allocation5 + $0x1c28] sm:$0xff]
        %v1250 = vld [vmem:[#allocation5 + $0x1c30] sm:$0xff]
        %v1251 = vld [vmem:[#allocation5 + $0x1c38] sm:$0xff]
        %v1252 = vld [vmem:[#allocation5 + $0x1c40] sm:$0xff]
        %v1253 = vld [vmem:[#allocation5 + $0x1c48] sm:$0xff]
        %v1254 = vld [vmem:[#allocation5 + $0x1c50] sm:$0xff]
        %v1255 = vld [vmem:[#allocation5 + $0x1c58] sm:$0xff]
        %v1256 = vld [vmem:[#allocation5 + $0x1c60] sm:$0xff]
        %v1257 = vld [vmem:[#allocation5 + $0x1c68] sm:$0xff]
        %v1258 = vld [vmem:[#allocation5 + $0x1c70] sm:$0xff]
        %v1259 = vld [vmem:[#allocation5 + $0x1c78] sm:$0xff]
        %v1260 = vld [vmem:[#allocation5 + $0x1c80] sm:$0xff]
        %v1261 = vld [vmem:[#allocation5 + $0x1c88] sm:$0xff]
        %v1262 = vld [vmem:[#allocation5 + $0x1c90] sm:$0xff]
        %v1263 = vld [vmem:[#allocation5 + $0x1c98] sm:$0xff]
        %v1264 = vld [vmem:[#allocation5 + $0x1ca0] sm:$0xff]
        %v1265 = vld [vmem:[#allocation5 + $0x1ca8] sm:$0xff]
        %v1266 = vld [vmem:[#allocation5 + $0x1cb0] sm:$0xff]
        %v1267 = vld [vmem:[#allocation5 + $0x1cb8] sm:$0xff]
        %v1268 = vld [vmem:[#allocation5 + $0x1cc0] sm:$0xff]
        %v1269 = vld [vmem:[#allocation5 + $0x1cc8] sm:$0xff]
        %v1270 = vld [vmem:[#allocation5 + $0x1cd0] sm:$0xff]
        %v1271 = vld [vmem:[#allocation5 + $0x1cd8] sm:$0xff]
        %v1272 = vld [vmem:[#allocation5 + $0x1ce0] sm:$0xff]
        %v1273 = vld [vmem:[#allocation5 + $0x1ce8] sm:$0xff]
        %v1274 = vld [vmem:[#allocation5 + $0x1cf0] sm:$0xff]
        %v1275 = vld [vmem:[#allocation5 + $0x1cf8] sm:$0xff]
        %v1276 = vld [vmem:[#allocation5 + $0x1d00] sm:$0xff]
        %v1277 = vld [vmem:[#allocation5 + $0x1d08] sm:$0xff]
        %v1278 = vld [vmem:[#allocation5 + $0x1d10] sm:$0xff]
        %v1279 = vld [vmem:[#allocation5 + $0x1d18] sm:$0xff]
        %v1280 = vld [vmem:[#allocation5 + $0x1d20] sm:$0xff]
        %v1281 = vld [vmem:[#allocation5 + $0x1d28] sm:$0xff]
        %v1282 = vld [vmem:[#allocation5 + $0x1d30] sm:$0xff]
        %v1283 = vld [vmem:[#allocation5 + $0x1d38] sm:$0xff]
        %v1284 = vld [vmem:[#allocation5 + $0x1d40] sm:$0xff]
        %v1285 = vld [vmem:[#allocation5 + $0x1d48] sm:$0xff]
        %v1286 = vld [vmem:[#allocation5 + $0x1d50] sm:$0xff]
        %v1287 = vld [vmem:[#allocation5 + $0x1d58] sm:$0xff]
        %v1288 = vld [vmem:[#allocation5 + $0x1d60] sm:$0xff]
        %v1289 = vld [vmem:[#allocation5 + $0x1d68] sm:$0xff]
        %v1290 = vld [vmem:[#allocation5 + $0x1d70] sm:$0xff]
        %v1291 = vld [vmem:[#allocation5 + $0x1d78] sm:$0xff]
        %v1292 = vld [vmem:[#allocation5 + $0x1d80] sm:$0xff]
        %v1293 = vld [vmem:[#allocation5 + $0x1d88] sm:$0xff]
        %v1294 = vld [vmem:[#allocation5 + $0x1d90] sm:$0xff]
        %v1295 = vld [vmem:[#allocation5 + $0x1d98] sm:$0xff]
        %v1296 = vld [vmem:[#allocation5 + $0x1da0] sm:$0xff]
        %v1297 = vld [vmem:[#allocation5 + $0x1da8] sm:$0xff]
        %v1298 = vld [vmem:[#allocation5 + $0x1db0] sm:$0xff]
        %v1299 = vld [vmem:[#allocation5 + $0x1db8] sm:$0xff]
        %v1300 = vld [vmem:[#allocation5 + $0x1dc0] sm:$0xff]
        %v1301 = vld [vmem:[#allocation5 + $0x1dc8] sm:$0xff]
        %v1302 = vld [vmem:[#allocation5 + $0x1dd0] sm:$0xff]
        %v1303 = vld [vmem:[#allocation5 + $0x1dd8] sm:$0xff]
        %v1304 = vld [vmem:[#allocation5 + $0x1de0] sm:$0xff]
        %v1305 = vld [vmem:[#allocation5 + $0x1de8] sm:$0xff]
        %v1306 = vld [vmem:[#allocation5 + $0x1df0] sm:$0xff]
        %v1307 = vld [vmem:[#allocation5 + $0x1df8] sm:$0xff]
        %v1308 = vld [vmem:[#allocation5 + $0x1e00] sm:$0xff]
        %v1309 = vld [vmem:[#allocation5 + $0x1e08] sm:$0xff]
        %v1310 = vld [vmem:[#allocation5 + $0x1e10] sm:$0xff]
        %v1311 = vld [vmem:[#allocation5 + $0x1e18] sm:$0xff]
        %v1312 = vld [vmem:[#allocation5 + $0x1e20] sm:$0xff]
        %v1313 = vld [vmem:[#allocation5 + $0x1e28] sm:$0xff]
        %v1314 = vld [vmem:[#allocation5 + $0x1e30] sm:$0xff]
        %v1315 = vld [vmem:[#allocation5 + $0x1e38] sm:$0xff]
        %v1316 = vld [vmem:[#allocation5 + $0x1e40] sm:$0xff]
        %v1317 = vld [vmem:[#allocation5 + $0x1e48] sm:$0xff]
        %v1318 = vld [vmem:[#allocation5 + $0x1e50] sm:$0xff]
        %v1319 = vld [vmem:[#allocation5 + $0x1e58] sm:$0xff]
        %v1320 = vld [vmem:[#allocation5 + $0x1e60] sm:$0xff]
        %v1321 = vld [vmem:[#allocation5 + $0x1e68] sm:$0xff]
        %v1322 = vld [vmem:[#allocation5 + $0x1e70] sm:$0xff]
        %v1323 = vld [vmem:[#allocation5 + $0x1e78] sm:$0xff]
        %v1324 = vld [vmem:[#allocation5 + $0x1e80] sm:$0xff]
        %v1325 = vld [vmem:[#allocation5 + $0x1e88] sm:$0xff]
        %v1326 = vld [vmem:[#allocation5 + $0x1e90] sm:$0xff]
        %v1327 = vld [vmem:[#allocation5 + $0x1e98] sm:$0xff]
        %v1328 = vld [vmem:[#allocation5 + $0x1ea0] sm:$0xff]
        %v1329 = vld [vmem:[#allocation5 + $0x1ea8] sm:$0xff]
        %v1330 = vld [vmem:[#allocation5 + $0x1eb0] sm:$0xff]
        %v1331 = vld [vmem:[#allocation5 + $0x1eb8] sm:$0xff]
        %v1332 = vld [vmem:[#allocation5 + $0x1ec0] sm:$0xff]
        %v1333 = vld [vmem:[#allocation5 + $0x1ec8] sm:$0xff]
        %v1334 = vld [vmem:[#allocation5 + $0x1ed0] sm:$0xff]
        %v1335 = vld [vmem:[#allocation5 + $0x1ed8] sm:$0xff]
        %v1336 = vld [vmem:[#allocation5 + $0x1ee0] sm:$0xff]
        %v1337 = vld [vmem:[#allocation5 + $0x1ee8] sm:$0xff]
        %v1338 = vld [vmem:[#allocation5 + $0x1ef0] sm:$0xff]
        %v1339 = vld [vmem:[#allocation5 + $0x1ef8] sm:$0xff]
        %v1340 = vld [vmem:[#allocation5 + $0x1f00] sm:$0xff]
        %v1341 = vld [vmem:[#allocation5 + $0x1f08] sm:$0xff]
        %v1342 = vld [vmem:[#allocation5 + $0x1f10] sm:$0xff]
        %v1343 = vld [vmem:[#allocation5 + $0x1f18] sm:$0xff]
        %v1344 = vld [vmem:[#allocation5 + $0x1f20] sm:$0xff]
        %v1345 = vld [vmem:[#allocation5 + $0x1f28] sm:$0xff]
        %v1346 = vld [vmem:[#allocation5 + $0x1f30] sm:$0xff]
        %v1347 = vld [vmem:[#allocation5 + $0x1f38] sm:$0xff]
        %v1348 = vld [vmem:[#allocation5 + $0x1f40] sm:$0xff]
        %v1349 = vld [vmem:[#allocation5 + $0x1f48] sm:$0xff]
        %v1350 = vld [vmem:[#allocation5 + $0x1f50] sm:$0xff]
        %v1351 = vld [vmem:[#allocation5 + $0x1f58] sm:$0xff]
        %v1352 = vld [vmem:[#allocation5 + $0x1f60] sm:$0xff]
        %v1353 = vld [vmem:[#allocation5 + $0x1f68] sm:$0xff]
        %v1354 = vld [vmem:[#allocation5 + $0x1f70] sm:$0xff]
        %v1355 = vld [vmem:[#allocation5 + $0x1f78] sm:$0xff]
        %v1356 = vld [vmem:[#allocation5 + $0x1f80] sm:$0xff]
        %v1357 = vld [vmem:[#allocation5 + $0x1f88] sm:$0xff]
        %v1358 = vld [vmem:[#allocation5 + $0x1f90] sm:$0xff]
        %v1359 = vld [vmem:[#allocation5 + $0x1f98] sm:$0xff]
        %v1360 = vld [vmem:[#allocation5 + $0x1fa0] sm:$0xff]
        %v1361 = vld [vmem:[#allocation5 + $0x1fa8] sm:$0xff]
        %v1362 = vld [vmem:[#allocation5 + $0x1fb0] sm:$0xff]
        %v1363 = vld [vmem:[#allocation5 + $0x1fb8] sm:$0xff]
        %v1364 = vld [vmem:[#allocation5 + $0x1fc0] sm:$0xff]
        %v1365 = vld [vmem:[#allocation5 + $0x1fc8] sm:$0xff]
        %v1366 = vld [vmem:[#allocation5 + $0x1fd0] sm:$0xff]
        %v1367 = vld [vmem:[#allocation5 + $0x1fd8] sm:$0xff]
        %v1368 = vld [vmem:[#allocation5 + $0x1fe0] sm:$0xff]
        %v1369 = vld [vmem:[#allocation5 + $0x1fe8] sm:$0xff]
        %v1370 = vld [vmem:[#allocation5 + $0x1ff0] sm:$0xff]
        %v1371 = vld [vmem:[#allocation5 + $0x1ff8] sm:$0xff]
        %v1372 = vld [vmem:[#allocation7] sm:$0xff]
        %v1373 = vld [vmem:[#allocation7 + $0x8] sm:$0xff]
        %v1375 = vperm.slane %v347, 0
        %v1376 = vperm.slane %v347, 1
        %v1377 = vperm.slane %v347, 2
        %v1378 = vperm.slane %v347, 3
        %v1385 = vperm.slane %v1372, 0
        %v1386 = vperm.slane %v1372, 1
        %v1387 = vperm.slane %v1372, 2
        %v1388 = vperm.slane %v1372, 3
        %v1389 = vperm.slane %v1372, 4
        %v1390 = vperm.slane %v1372, 5
        %v1391 = vperm.slane %v1372, 6
        %v1392 = vperm.slane %v1372, 7
        %v1393 = vperm.slane %v1373, 0
        %v1394 = vperm.slane %v1373, 1
        %v1395 = vperm.slane %v1373, 2
        %v1396 = vperm.slane %v1373, 3
        %v1397 = vperm.slane %v1373, 4
        %v1398 = vperm.slane %v1373, 5
        %v1399 = vperm.slane %v1373, 6
        %v1400 = vperm.slane %v1373, 7
        %1417 = vmatpush.msra.mxu0 %v588
        %1418 = vmatpush.msra.mxu0 %v572
        %1419 = vmatpush.msra.mxu0 %v556
        %1420 = vmatpush.msra.mxu0 %v540
        %1421 = vmatpush.msra.mxu0 %v524
        %1422 = vmatpush.msra.mxu0 %v508
        %1423 = vmatpush.msra.mxu0 %v492
        %1424 = vmatpush.msra.mxu0 %v476
        %1425 = vmatpush.msra.mxu0 %v460
        %1426 = vmatpush.msra.mxu0 %v444
        %1427 = vmatpush.msra.mxu0 %v428
        %1428 = vmatpush.msra.mxu0 %v412
        %1429 = vmatpush.msra.mxu0 %v396
        %1430 = vmatpush.msra.mxu0 %v380
        %1431 = vmatpush.msra.mxu0 %v364
        %1432 = vmatpush.msra.mxu0 %v348
        %1433 = vmatmul.f32.gmra.mxu0 %v1375
        %v1434 = vpop.f32.mrf.mxu0
        %v1435 = vadd.f32 %v1385, %v1434
        %1436 = vdwg.mxu0
        %1437 = vmatpush.msra.mxu0 %v844
        %1438 = vmatpush.msra.mxu0 %v828
        %1439 = vmatpush.msra.mxu0 %v812
        %1440 = vmatpush.msra.mxu0 %v796
        %1441 = vmatpush.msra.mxu0 %v780
        %1442 = vmatpush.msra.mxu0 %v764
        %1443 = vmatpush.msra.mxu0 %v748
        %1444 = vmatpush.msra.mxu0 %v732
        %1445 = vmatpush.msra.mxu0 %v716
        %1446 = vmatpush.msra.mxu0 %v700
        %1447 = vmatpush.msra.mxu0 %v684
        %1448 = vmatpush.msra.mxu0 %v668
        %1449 = vmatpush.msra.mxu0 %v652
        %1450 = vmatpush.msra.mxu0 %v636
        %1451 = vmatpush.msra.mxu0 %v620
        %1452 = vmatpush.msra.mxu0 %v604
        %1453 = vmatmul.f32.gmra.mxu0 %v1376
        %v1454 = vpop.f32.mrf.mxu0
        %v1455 = vadd.f32 %v1435, %v1454
        %1456 = vdwg.mxu0
        %1457 = vmatpush.msra.mxu0 %v1100
        %1458 = vmatpush.msra.mxu0 %v1084
        %1459 = vmatpush.msra.mxu0 %v1068
        %1460 = vmatpush.msra.mxu0 %v1052
        %1461 = vmatpush.msra.mxu0 %v1036
        %1462 = vmatpush.msra.mxu0 %v1020
        %1463 = vmatpush.msra.mxu0 %v1004
        %1464 = vmatpush.msra.mxu0 %v988
        %1465 = vmatpush.msra.mxu0 %v972
        %1466 = vmatpush.msra.mxu0 %v956
        %1467 = vmatpush.msra.mxu0 %v940
        %1468 = vmatpush.msra.mxu0 %v924
        %1469 = vmatpush.msra.mxu0 %v908
        %1470 = vmatpush.msra.mxu0 %v892
        %1471 = vmatpush.msra.mxu0 %v876
        %1472 = vmatpush.msra.mxu0 %v860
        %1473 = vmatmul.f32.gmra.mxu0 %v1377
        %v1474 = vpop.f32.mrf.mxu0
        %v1475 = vadd.f32 %v1455, %v1474
        %1476 = vdwg.mxu0
        %1477 = vmatpush.msra.mxu0 %v1356
        %1478 = vmatpush.msra.mxu0 %v1340
        %1479 = vmatpush.msra.mxu0 %v1324
        %1480 = vmatpush.msra.mxu0 %v1308
        %1481 = vmatpush.msra.mxu0 %v1292
        %1482 = vmatpush.msra.mxu0 %v1276
        %1483 = vmatpush.msra.mxu0 %v1260
        %1484 = vmatpush.msra.mxu0 %v1244
        %1485 = vmatpush.msra.mxu0 %v1228
        %1486 = vmatpush.msra.mxu0 %v1212
        %1487 = vmatpush.msra.mxu0 %v1196
        %1488 = vmatpush.msra.mxu0 %v1180
        %1489 = vmatpush.msra.mxu0 %v1164
        %1490 = vmatpush.msra.mxu0 %v1148
        %1491 = vmatpush.msra.mxu0 %v1132
        %1492 = vmatpush.msra.mxu0 %v1116
        %1493 = vmatmul.f32.gmra.mxu0 %v1378
        %v1494 = vpop.f32.mrf.mxu0
        %v1495 = vadd.f32 %v1475, %v1494
        %1496 = vdwg.mxu0
        %1497 = vmatpush.msra.mxu0 %v589
        %1498 = vmatpush.msra.mxu0 %v573
        %1499 = vmatpush.msra.mxu0 %v557
        %1500 = vmatpush.msra.mxu0 %v541
        %1501 = vmatpush.msra.mxu0 %v525
        %1502 = vmatpush.msra.mxu0 %v509
        %1503 = vmatpush.msra.mxu0 %v493
        %1504 = vmatpush.msra.mxu0 %v477
        %1505 = vmatpush.msra.mxu0 %v461
        %1506 = vmatpush.msra.mxu0 %v445
        %1507 = vmatpush.msra.mxu0 %v429
        %1508 = vmatpush.msra.mxu0 %v413
        %1509 = vmatpush.msra.mxu0 %v397
        %1510 = vmatpush.msra.mxu0 %v381
        %1511 = vmatpush.msra.mxu0 %v365
        %1512 = vmatpush.msra.mxu0 %v349
        %1513 = vmatmul.f32.gmra.mxu0 %v1375
        %v1514 = vpop.f32.mrf.mxu0
        %v1515 = vadd.f32 %v1386, %v1514
        %1516 = vdwg.mxu0
        %1517 = vmatpush.msra.mxu0 %v845
        %1518 = vmatpush.msra.mxu0 %v829
        %1519 = vmatpush.msra.mxu0 %v813
        %1520 = vmatpush.msra.mxu0 %v797
        %1521 = vmatpush.msra.mxu0 %v781
        %1522 = vmatpush.msra.mxu0 %v765
        %1523 = vmatpush.msra.mxu0 %v749
        %1524 = vmatpush.msra.mxu0 %v733
        %1525 = vmatpush.msra.mxu0 %v717
        %1526 = vmatpush.msra.mxu0 %v701
        %1527 = vmatpush.msra.mxu0 %v685
        %1528 = vmatpush.msra.mxu0 %v669
        %1529 = vmatpush.msra.mxu0 %v653
        %1530 = vmatpush.msra.mxu0 %v637
        %1531 = vmatpush.msra.mxu0 %v621
        %1532 = vmatpush.msra.mxu0 %v605
        %1533 = vmatmul.f32.gmra.mxu0 %v1376
        %v1534 = vpop.f32.mrf.mxu0
        %v1535 = vadd.f32 %v1515, %v1534
        %1536 = vdwg.mxu0
        %1537 = vmatpush.msra.mxu0 %v1101
        %1538 = vmatpush.msra.mxu0 %v1085
        %1539 = vmatpush.msra.mxu0 %v1069
        %1540 = vmatpush.msra.mxu0 %v1053
        %1541 = vmatpush.msra.mxu0 %v1037
        %1542 = vmatpush.msra.mxu0 %v1021
        %1543 = vmatpush.msra.mxu0 %v1005
        %1544 = vmatpush.msra.mxu0 %v989
        %1545 = vmatpush.msra.mxu0 %v973
        %1546 = vmatpush.msra.mxu0 %v957
        %1547 = vmatpush.msra.mxu0 %v941
        %1548 = vmatpush.msra.mxu0 %v925
        %1549 = vmatpush.msra.mxu0 %v909
        %1550 = vmatpush.msra.mxu0 %v893
        %1551 = vmatpush.msra.mxu0 %v877
        %1552 = vmatpush.msra.mxu0 %v861
        %1553 = vmatmul.f32.gmra.mxu0 %v1377
        %v1554 = vpop.f32.mrf.mxu0
        %v1555 = vadd.f32 %v1535, %v1554
        %1556 = vdwg.mxu0
        %1557 = vmatpush.msra.mxu0 %v1357
        %1558 = vmatpush.msra.mxu0 %v1341
        %1559 = vmatpush.msra.mxu0 %v1325
        %1560 = vmatpush.msra.mxu0 %v1309
        %1561 = vmatpush.msra.mxu0 %v1293
        %1562 = vmatpush.msra.mxu0 %v1277
        %1563 = vmatpush.msra.mxu0 %v1261
        %1564 = vmatpush.msra.mxu0 %v1245
        %1565 = vmatpush.msra.mxu0 %v1229
        %1566 = vmatpush.msra.mxu0 %v1213
        %1567 = vmatpush.msra.mxu0 %v1197
        %1568 = vmatpush.msra.mxu0 %v1181
        %1569 = vmatpush.msra.mxu0 %v1165
        %1570 = vmatpush.msra.mxu0 %v1149
        %1571 = vmatpush.msra.mxu0 %v1133
        %1572 = vmatpush.msra.mxu0 %v1117
        %1573 = vmatmul.f32.gmra.mxu0 %v1378
        %v1574 = vpop.f32.mrf.mxu0
        %v1575 = vadd.f32 %v1555, %v1574
        %1576 = vdwg.mxu0
        %1577 = vmatpush.msra.mxu0 %v590
        %1578 = vmatpush.msra.mxu0 %v574
        %1579 = vmatpush.msra.mxu0 %v558
        %1580 = vmatpush.msra.mxu0 %v542
        %1581 = vmatpush.msra.mxu0 %v526
        %1582 = vmatpush.msra.mxu0 %v510
        %1583 = vmatpush.msra.mxu0 %v494
        %1584 = vmatpush.msra.mxu0 %v478
        %1585 = vmatpush.msra.mxu0 %v462
        %1586 = vmatpush.msra.mxu0 %v446
        %1587 = vmatpush.msra.mxu0 %v430
        %1588 = vmatpush.msra.mxu0 %v414
        %1589 = vmatpush.msra.mxu0 %v398
        %1590 = vmatpush.msra.mxu0 %v382
        %1591 = vmatpush.msra.mxu0 %v366
        %1592 = vmatpush.msra.mxu0 %v350
        %1593 = vmatmul.f32.gmra.mxu0 %v1375
        %v1594 = vpop.f32.mrf.mxu0
        %v1595 = vadd.f32 %v1387, %v1594
        %1596 = vdwg.mxu0
        %1597 = vmatpush.msra.mxu0 %v846
        %1598 = vmatpush.msra.mxu0 %v830
        %1599 = vmatpush.msra.mxu0 %v814
        %1600 = vmatpush.msra.mxu0 %v798
        %1601 = vmatpush.msra.mxu0 %v782
        %1602 = vmatpush.msra.mxu0 %v766
        %1603 = vmatpush.msra.mxu0 %v750
        %1604 = vmatpush.msra.mxu0 %v734
        %1605 = vmatpush.msra.mxu0 %v718
        %1606 = vmatpush.msra.mxu0 %v702
        %1607 = vmatpush.msra.mxu0 %v686
        %1608 = vmatpush.msra.mxu0 %v670
        %1609 = vmatpush.msra.mxu0 %v654
        %1610 = vmatpush.msra.mxu0 %v638
        %1611 = vmatpush.msra.mxu0 %v622
        %1612 = vmatpush.msra.mxu0 %v606
        %1613 = vmatmul.f32.gmra.mxu0 %v1376
        %v1614 = vpop.f32.mrf.mxu0
        %v1615 = vadd.f32 %v1595, %v1614
        %1616 = vdwg.mxu0
        %1617 = vmatpush.msra.mxu0 %v1102
        %1618 = vmatpush.msra.mxu0 %v1086
        %1619 = vmatpush.msra.mxu0 %v1070
        %1620 = vmatpush.msra.mxu0 %v1054
        %1621 = vmatpush.msra.mxu0 %v1038
        %1622 = vmatpush.msra.mxu0 %v1022
        %1623 = vmatpush.msra.mxu0 %v1006
        %1624 = vmatpush.msra.mxu0 %v990
        %1625 = vmatpush.msra.mxu0 %v974
        %1626 = vmatpush.msra.mxu0 %v958
        %1627 = vmatpush.msra.mxu0 %v942
        %1628 = vmatpush.msra.mxu0 %v926
        %1629 = vmatpush.msra.mxu0 %v910
        %1630 = vmatpush.msra.mxu0 %v894
        %1631 = vmatpush.msra.mxu0 %v878
        %1632 = vmatpush.msra.mxu0 %v862
        %1633 = vmatmul.f32.gmra.mxu0 %v1377
        %v1634 = vpop.f32.mrf.mxu0
        %v1635 = vadd.f32 %v1615, %v1634
        %1636 = vdwg.mxu0
        %1637 = vmatpush.msra.mxu0 %v1358
        %1638 = vmatpush.msra.mxu0 %v1342
        %1639 = vmatpush.msra.mxu0 %v1326
        %1640 = vmatpush.msra.mxu0 %v1310
        %1641 = vmatpush.msra.mxu0 %v1294
        %1642 = vmatpush.msra.mxu0 %v1278
        %1643 = vmatpush.msra.mxu0 %v1262
        %1644 = vmatpush.msra.mxu0 %v1246
        %1645 = vmatpush.msra.mxu0 %v1230
        %1646 = vmatpush.msra.mxu0 %v1214
        %1647 = vmatpush.msra.mxu0 %v1198
        %1648 = vmatpush.msra.mxu0 %v1182
        %1649 = vmatpush.msra.mxu0 %v1166
        %1650 = vmatpush.msra.mxu0 %v1150
        %1651 = vmatpush.msra.mxu0 %v1134
        %1652 = vmatpush.msra.mxu0 %v1118
        %1653 = vmatmul.f32.gmra.mxu0 %v1378
        %v1654 = vpop.f32.mrf.mxu0
        %v1655 = vadd.f32 %v1635, %v1654
        %1656 = vdwg.mxu0
        %1657 = vmatpush.msra.mxu0 %v591
        %1658 = vmatpush.msra.mxu0 %v575
        %1659 = vmatpush.msra.mxu0 %v559
        %1660 = vmatpush.msra.mxu0 %v543
        %1661 = vmatpush.msra.mxu0 %v527
        %1662 = vmatpush.msra.mxu0 %v511
        %1663 = vmatpush.msra.mxu0 %v495
        %1664 = vmatpush.msra.mxu0 %v479
        %1665 = vmatpush.msra.mxu0 %v463
        %1666 = vmatpush.msra.mxu0 %v447
        %1667 = vmatpush.msra.mxu0 %v431
        %1668 = vmatpush.msra.mxu0 %v415
        %1669 = vmatpush.msra.mxu0 %v399
        %1670 = vmatpush.msra.mxu0 %v383
        %1671 = vmatpush.msra.mxu0 %v367
        %1672 = vmatpush.msra.mxu0 %v351
        %1673 = vmatmul.f32.gmra.mxu0 %v1375
        %v1674 = vpop.f32.mrf.mxu0
        %v1675 = vadd.f32 %v1388, %v1674
        %1676 = vdwg.mxu0
        %1677 = vmatpush.msra.mxu0 %v847
        %1678 = vmatpush.msra.mxu0 %v831
        %1679 = vmatpush.msra.mxu0 %v815
        %1680 = vmatpush.msra.mxu0 %v799
        %1681 = vmatpush.msra.mxu0 %v783
        %1682 = vmatpush.msra.mxu0 %v767
        %1683 = vmatpush.msra.mxu0 %v751
        %1684 = vmatpush.msra.mxu0 %v735
        %1685 = vmatpush.msra.mxu0 %v719
        %1686 = vmatpush.msra.mxu0 %v703
        %1687 = vmatpush.msra.mxu0 %v687
        %1688 = vmatpush.msra.mxu0 %v671
        %1689 = vmatpush.msra.mxu0 %v655
        %1690 = vmatpush.msra.mxu0 %v639
        %1691 = vmatpush.msra.mxu0 %v623
        %1692 = vmatpush.msra.mxu0 %v607
        %1693 = vmatmul.f32.gmra.mxu0 %v1376
        %v1694 = vpop.f32.mrf.mxu0
        %v1695 = vadd.f32 %v1675, %v1694
        %1696 = vdwg.mxu0
        %1697 = vmatpush.msra.mxu0 %v1103
        %1698 = vmatpush.msra.mxu0 %v1087
        %1699 = vmatpush.msra.mxu0 %v1071
        %1700 = vmatpush.msra.mxu0 %v1055
        %1701 = vmatpush.msra.mxu0 %v1039
        %1702 = vmatpush.msra.mxu0 %v1023
        %1703 = vmatpush.msra.mxu0 %v1007
        %1704 = vmatpush.msra.mxu0 %v991
        %1705 = vmatpush.msra.mxu0 %v975
        %1706 = vmatpush.msra.mxu0 %v959
        %1707 = vmatpush.msra.mxu0 %v943
        %1708 = vmatpush.msra.mxu0 %v927
        %1709 = vmatpush.msra.mxu0 %v911
        %1710 = vmatpush.msra.mxu0 %v895
        %1711 = vmatpush.msra.mxu0 %v879
        %1712 = vmatpush.msra.mxu0 %v863
        %1713 = vmatmul.f32.gmra.mxu0 %v1377
        %v1714 = vpop.f32.mrf.mxu0
        %v1715 = vadd.f32 %v1695, %v1714
        %1716 = vdwg.mxu0
        %1717 = vmatpush.msra.mxu0 %v1359
        %1718 = vmatpush.msra.mxu0 %v1343
        %1719 = vmatpush.msra.mxu0 %v1327
        %1720 = vmatpush.msra.mxu0 %v1311
        %1721 = vmatpush.msra.mxu0 %v1295
        %1722 = vmatpush.msra.mxu0 %v1279
        %1723 = vmatpush.msra.mxu0 %v1263
        %1724 = vmatpush.msra.mxu0 %v1247
        %1725 = vmatpush.msra.mxu0 %v1231
        %1726 = vmatpush.msra.mxu0 %v1215
        %1727 = vmatpush.msra.mxu0 %v1199
        %1728 = vmatpush.msra.mxu0 %v1183
        %1729 = vmatpush.msra.mxu0 %v1167
        %1730 = vmatpush.msra.mxu0 %v1151
        %1731 = vmatpush.msra.mxu0 %v1135
        %1732 = vmatpush.msra.mxu0 %v1119
        %1733 = vmatmul.f32.gmra.mxu0 %v1378
        %v1734 = vpop.f32.mrf.mxu0
        %v1735 = vadd.f32 %v1715, %v1734
        %1736 = vdwg.mxu0
        %1737 = vmatpush.msra.mxu0 %v592
        %1738 = vmatpush.msra.mxu0 %v576
        %1739 = vmatpush.msra.mxu0 %v560
        %1740 = vmatpush.msra.mxu0 %v544
        %1741 = vmatpush.msra.mxu0 %v528
        %1742 = vmatpush.msra.mxu0 %v512
        %1743 = vmatpush.msra.mxu0 %v496
        %1744 = vmatpush.msra.mxu0 %v480
        %1745 = vmatpush.msra.mxu0 %v464
        %1746 = vmatpush.msra.mxu0 %v448
        %1747 = vmatpush.msra.mxu0 %v432
        %1748 = vmatpush.msra.mxu0 %v416
        %1749 = vmatpush.msra.mxu0 %v400
        %1750 = vmatpush.msra.mxu0 %v384
        %1751 = vmatpush.msra.mxu0 %v368
        %1752 = vmatpush.msra.mxu0 %v352
        %1753 = vmatmul.f32.gmra.mxu0 %v1375
        %v1754 = vpop.f32.mrf.mxu0
        %v1755 = vadd.f32 %v1389, %v1754
        %1756 = vdwg.mxu0
        %1757 = vmatpush.msra.mxu0 %v848
        %1758 = vmatpush.msra.mxu0 %v832
        %1759 = vmatpush.msra.mxu0 %v816
        %1760 = vmatpush.msra.mxu0 %v800
        %1761 = vmatpush.msra.mxu0 %v784
        %1762 = vmatpush.msra.mxu0 %v768
        %1763 = vmatpush.msra.mxu0 %v752
        %1764 = vmatpush.msra.mxu0 %v736
        %1765 = vmatpush.msra.mxu0 %v720
        %1766 = vmatpush.msra.mxu0 %v704
        %1767 = vmatpush.msra.mxu0 %v688
        %1768 = vmatpush.msra.mxu0 %v672
        %1769 = vmatpush.msra.mxu0 %v656
        %1770 = vmatpush.msra.mxu0 %v640
        %1771 = vmatpush.msra.mxu0 %v624
        %1772 = vmatpush.msra.mxu0 %v608
        %1773 = vmatmul.f32.gmra.mxu0 %v1376
        %v1774 = vpop.f32.mrf.mxu0
        %v1775 = vadd.f32 %v1755, %v1774
        %1776 = vdwg.mxu0
        %1777 = vmatpush.msra.mxu0 %v1104
        %1778 = vmatpush.msra.mxu0 %v1088
        %1779 = vmatpush.msra.mxu0 %v1072
        %1780 = vmatpush.msra.mxu0 %v1056
        %1781 = vmatpush.msra.mxu0 %v1040
        %1782 = vmatpush.msra.mxu0 %v1024
        %1783 = vmatpush.msra.mxu0 %v1008
        %1784 = vmatpush.msra.mxu0 %v992
        %1785 = vmatpush.msra.mxu0 %v976
        %1786 = vmatpush.msra.mxu0 %v960
        %1787 = vmatpush.msra.mxu0 %v944
        %1788 = vmatpush.msra.mxu0 %v928
        %1789 = vmatpush.msra.mxu0 %v912
        %1790 = vmatpush.msra.mxu0 %v896
        %1791 = vmatpush.msra.mxu0 %v880
        %1792 = vmatpush.msra.mxu0 %v864
        %1793 = vmatmul.f32.gmra.mxu0 %v1377
        %v1794 = vpop.f32.mrf.mxu0
        %v1795 = vadd.f32 %v1775, %v1794
        %1796 = vdwg.mxu0
        %1797 = vmatpush.msra.mxu0 %v1360
        %1798 = vmatpush.msra.mxu0 %v1344
        %1799 = vmatpush.msra.mxu0 %v1328
        %1800 = vmatpush.msra.mxu0 %v1312
        %1801 = vmatpush.msra.mxu0 %v1296
        %1802 = vmatpush.msra.mxu0 %v1280
        %1803 = vmatpush.msra.mxu0 %v1264
        %1804 = vmatpush.msra.mxu0 %v1248
        %1805 = vmatpush.msra.mxu0 %v1232
        %1806 = vmatpush.msra.mxu0 %v1216
        %1807 = vmatpush.msra.mxu0 %v1200
        %1808 = vmatpush.msra.mxu0 %v1184
        %1809 = vmatpush.msra.mxu0 %v1168
        %1810 = vmatpush.msra.mxu0 %v1152
        %1811 = vmatpush.msra.mxu0 %v1136
        %1812 = vmatpush.msra.mxu0 %v1120
        %1813 = vmatmul.f32.gmra.mxu0 %v1378
        %v1814 = vpop.f32.mrf.mxu0
        %v1815 = vadd.f32 %v1795, %v1814
        %1816 = vdwg.mxu0
        %1817 = vmatpush.msra.mxu0 %v593
        %1818 = vmatpush.msra.mxu0 %v577
        %1819 = vmatpush.msra.mxu0 %v561
        %1820 = vmatpush.msra.mxu0 %v545
        %1821 = vmatpush.msra.mxu0 %v529
        %1822 = vmatpush.msra.mxu0 %v513
        %1823 = vmatpush.msra.mxu0 %v497
        %1824 = vmatpush.msra.mxu0 %v481
        %1825 = vmatpush.msra.mxu0 %v465
        %1826 = vmatpush.msra.mxu0 %v449
        %1827 = vmatpush.msra.mxu0 %v433
        %1828 = vmatpush.msra.mxu0 %v417
        %1829 = vmatpush.msra.mxu0 %v401
        %1830 = vmatpush.msra.mxu0 %v385
        %1831 = vmatpush.msra.mxu0 %v369
        %1832 = vmatpush.msra.mxu0 %v353
        %1833 = vmatmul.f32.gmra.mxu0 %v1375
        %v1834 = vpop.f32.mrf.mxu0
        %v1835 = vadd.f32 %v1390, %v1834
        %1836 = vdwg.mxu0
        %1837 = vmatpush.msra.mxu0 %v849
        %1838 = vmatpush.msra.mxu0 %v833
        %1839 = vmatpush.msra.mxu0 %v817
        %1840 = vmatpush.msra.mxu0 %v801
        %1841 = vmatpush.msra.mxu0 %v785
        %1842 = vmatpush.msra.mxu0 %v769
        %1843 = vmatpush.msra.mxu0 %v753
        %1844 = vmatpush.msra.mxu0 %v737
        %1845 = vmatpush.msra.mxu0 %v721
        %1846 = vmatpush.msra.mxu0 %v705
        %1847 = vmatpush.msra.mxu0 %v689
        %1848 = vmatpush.msra.mxu0 %v673
        %1849 = vmatpush.msra.mxu0 %v657
        %1850 = vmatpush.msra.mxu0 %v641
        %1851 = vmatpush.msra.mxu0 %v625
        %1852 = vmatpush.msra.mxu0 %v609
        %1853 = vmatmul.f32.gmra.mxu0 %v1376
        %v1854 = vpop.f32.mrf.mxu0
        %v1855 = vadd.f32 %v1835, %v1854
        %1856 = vdwg.mxu0
        %1857 = vmatpush.msra.mxu0 %v1105
        %1858 = vmatpush.msra.mxu0 %v1089
        %1859 = vmatpush.msra.mxu0 %v1073
        %1860 = vmatpush.msra.mxu0 %v1057
        %1861 = vmatpush.msra.mxu0 %v1041
        %1862 = vmatpush.msra.mxu0 %v1025
        %1863 = vmatpush.msra.mxu0 %v1009
        %1864 = vmatpush.msra.mxu0 %v993
        %1865 = vmatpush.msra.mxu0 %v977
        %1866 = vmatpush.msra.mxu0 %v961
        %1867 = vmatpush.msra.mxu0 %v945
        %1868 = vmatpush.msra.mxu0 %v929
        %1869 = vmatpush.msra.mxu0 %v913
        %1870 = vmatpush.msra.mxu0 %v897
        %1871 = vmatpush.msra.mxu0 %v881
        %1872 = vmatpush.msra.mxu0 %v865
        %1873 = vmatmul.f32.gmra.mxu0 %v1377
        %v1874 = vpop.f32.mrf.mxu0
        %v1875 = vadd.f32 %v1855, %v1874
        %1876 = vdwg.mxu0
        %1877 = vmatpush.msra.mxu0 %v1361
        %1878 = vmatpush.msra.mxu0 %v1345
        %1879 = vmatpush.msra.mxu0 %v1329
        %1880 = vmatpush.msra.mxu0 %v1313
        %1881 = vmatpush.msra.mxu0 %v1297
        %1882 = vmatpush.msra.mxu0 %v1281
        %1883 = vmatpush.msra.mxu0 %v1265
        %1884 = vmatpush.msra.mxu0 %v1249
        %1885 = vmatpush.msra.mxu0 %v1233
        %1886 = vmatpush.msra.mxu0 %v1217
        %1887 = vmatpush.msra.mxu0 %v1201
        %1888 = vmatpush.msra.mxu0 %v1185
        %1889 = vmatpush.msra.mxu0 %v1169
        %1890 = vmatpush.msra.mxu0 %v1153
        %1891 = vmatpush.msra.mxu0 %v1137
        %1892 = vmatpush.msra.mxu0 %v1121
        %1893 = vmatmul.f32.gmra.mxu0 %v1378
        %v1894 = vpop.f32.mrf.mxu0
        %v1895 = vadd.f32 %v1875, %v1894
        %1896 = vdwg.mxu0
        %1897 = vmatpush.msra.mxu0 %v594
        %1898 = vmatpush.msra.mxu0 %v578
        %1899 = vmatpush.msra.mxu0 %v562
        %1900 = vmatpush.msra.mxu0 %v546
        %1901 = vmatpush.msra.mxu0 %v530
        %1902 = vmatpush.msra.mxu0 %v514
        %1903 = vmatpush.msra.mxu0 %v498
        %1904 = vmatpush.msra.mxu0 %v482
        %1905 = vmatpush.msra.mxu0 %v466
        %1906 = vmatpush.msra.mxu0 %v450
        %1907 = vmatpush.msra.mxu0 %v434
        %1908 = vmatpush.msra.mxu0 %v418
        %1909 = vmatpush.msra.mxu0 %v402
        %1910 = vmatpush.msra.mxu0 %v386
        %1911 = vmatpush.msra.mxu0 %v370
        %1912 = vmatpush.msra.mxu0 %v354
        %1913 = vmatmul.f32.gmra.mxu0 %v1375
        %v1914 = vpop.f32.mrf.mxu0
        %v1915 = vadd.f32 %v1391, %v1914
        %1916 = vdwg.mxu0
        %1917 = vmatpush.msra.mxu0 %v850
        %1918 = vmatpush.msra.mxu0 %v834
        %1919 = vmatpush.msra.mxu0 %v818
        %1920 = vmatpush.msra.mxu0 %v802
        %1921 = vmatpush.msra.mxu0 %v786
        %1922 = vmatpush.msra.mxu0 %v770
        %1923 = vmatpush.msra.mxu0 %v754
        %1924 = vmatpush.msra.mxu0 %v738
        %1925 = vmatpush.msra.mxu0 %v722
        %1926 = vmatpush.msra.mxu0 %v706
        %1927 = vmatpush.msra.mxu0 %v690
        %1928 = vmatpush.msra.mxu0 %v674
        %1929 = vmatpush.msra.mxu0 %v658
        %1930 = vmatpush.msra.mxu0 %v642
        %1931 = vmatpush.msra.mxu0 %v626
        %1932 = vmatpush.msra.mxu0 %v610
        %1933 = vmatmul.f32.gmra.mxu0 %v1376
        %v1934 = vpop.f32.mrf.mxu0
        %v1935 = vadd.f32 %v1915, %v1934
        %1936 = vdwg.mxu0
        %1937 = vmatpush.msra.mxu0 %v1106
        %1938 = vmatpush.msra.mxu0 %v1090
        %1939 = vmatpush.msra.mxu0 %v1074
        %1940 = vmatpush.msra.mxu0 %v1058
        %1941 = vmatpush.msra.mxu0 %v1042
        %1942 = vmatpush.msra.mxu0 %v1026
        %1943 = vmatpush.msra.mxu0 %v1010
        %1944 = vmatpush.msra.mxu0 %v994
        %1945 = vmatpush.msra.mxu0 %v978
        %1946 = vmatpush.msra.mxu0 %v962
        %1947 = vmatpush.msra.mxu0 %v946
        %1948 = vmatpush.msra.mxu0 %v930
        %1949 = vmatpush.msra.mxu0 %v914
        %1950 = vmatpush.msra.mxu0 %v898
        %1951 = vmatpush.msra.mxu0 %v882
        %1952 = vmatpush.msra.mxu0 %v866
        %1953 = vmatmul.f32.gmra.mxu0 %v1377
        %v1954 = vpop.f32.mrf.mxu0
        %v1955 = vadd.f32 %v1935, %v1954
        %1956 = vdwg.mxu0
        %1957 = vmatpush.msra.mxu0 %v1362
        %1958 = vmatpush.msra.mxu0 %v1346
        %1959 = vmatpush.msra.mxu0 %v1330
        %1960 = vmatpush.msra.mxu0 %v1314
        %1961 = vmatpush.msra.mxu0 %v1298
        %1962 = vmatpush.msra.mxu0 %v1282
        %1963 = vmatpush.msra.mxu0 %v1266
        %1964 = vmatpush.msra.mxu0 %v1250
        %1965 = vmatpush.msra.mxu0 %v1234
        %1966 = vmatpush.msra.mxu0 %v1218
        %1967 = vmatpush.msra.mxu0 %v1202
        %1968 = vmatpush.msra.mxu0 %v1186
        %1969 = vmatpush.msra.mxu0 %v1170
        %1970 = vmatpush.msra.mxu0 %v1154
        %1971 = vmatpush.msra.mxu0 %v1138
        %1972 = vmatpush.msra.mxu0 %v1122
        %1973 = vmatmul.f32.gmra.mxu0 %v1378
        %v1974 = vpop.f32.mrf.mxu0
        %v1975 = vadd.f32 %v1955, %v1974
        %1976 = vdwg.mxu0
        %1977 = vmatpush.msra.mxu0 %v595
        %1978 = vmatpush.msra.mxu0 %v579
        %1979 = vmatpush.msra.mxu0 %v563
        %1980 = vmatpush.msra.mxu0 %v547
        %1981 = vmatpush.msra.mxu0 %v531
        %1982 = vmatpush.msra.mxu0 %v515
        %1983 = vmatpush.msra.mxu0 %v499
        %1984 = vmatpush.msra.mxu0 %v483
        %1985 = vmatpush.msra.mxu0 %v467
        %1986 = vmatpush.msra.mxu0 %v451
        %1987 = vmatpush.msra.mxu0 %v435
        %1988 = vmatpush.msra.mxu0 %v419
        %1989 = vmatpush.msra.mxu0 %v403
        %1990 = vmatpush.msra.mxu0 %v387
        %1991 = vmatpush.msra.mxu0 %v371
        %1992 = vmatpush.msra.mxu0 %v355
        %1993 = vmatmul.f32.gmra.mxu0 %v1375
        %v1994 = vpop.f32.mrf.mxu0
        %v1995 = vadd.f32 %v1392, %v1994
        %1996 = vdwg.mxu0
        %1997 = vmatpush.msra.mxu0 %v851
        %1998 = vmatpush.msra.mxu0 %v835
        %1999 = vmatpush.msra.mxu0 %v819
        %2000 = vmatpush.msra.mxu0 %v803
        %2001 = vmatpush.msra.mxu0 %v787
        %2002 = vmatpush.msra.mxu0 %v771
        %2003 = vmatpush.msra.mxu0 %v755
        %2004 = vmatpush.msra.mxu0 %v739
        %2005 = vmatpush.msra.mxu0 %v723
        %2006 = vmatpush.msra.mxu0 %v707
        %2007 = vmatpush.msra.mxu0 %v691
        %2008 = vmatpush.msra.mxu0 %v675
        %2009 = vmatpush.msra.mxu0 %v659
        %2010 = vmatpush.msra.mxu0 %v643
        %2011 = vmatpush.msra.mxu0 %v627
        %2012 = vmatpush.msra.mxu0 %v611
        %2013 = vmatmul.f32.gmra.mxu0 %v1376
        %v2014 = vpop.f32.mrf.mxu0
        %v2015 = vadd.f32 %v1995, %v2014
        %2016 = vdwg.mxu0
        %2017 = vmatpush.msra.mxu0 %v1107
        %2018 = vmatpush.msra.mxu0 %v1091
        %2019 = vmatpush.msra.mxu0 %v1075
        %2020 = vmatpush.msra.mxu0 %v1059
        %2021 = vmatpush.msra.mxu0 %v1043
        %2022 = vmatpush.msra.mxu0 %v1027
        %2023 = vmatpush.msra.mxu0 %v1011
        %2024 = vmatpush.msra.mxu0 %v995
        %2025 = vmatpush.msra.mxu0 %v979
        %2026 = vmatpush.msra.mxu0 %v963
        %2027 = vmatpush.msra.mxu0 %v947
        %2028 = vmatpush.msra.mxu0 %v931
        %2029 = vmatpush.msra.mxu0 %v915
        %2030 = vmatpush.msra.mxu0 %v899
        %2031 = vmatpush.msra.mxu0 %v883
        %2032 = vmatpush.msra.mxu0 %v867
        %2033 = vmatmul.f32.gmra.mxu0 %v1377
        %v2034 = vpop.f32.mrf.mxu0
        %v2035 = vadd.f32 %v2015, %v2034
        %2036 = vdwg.mxu0
        %2037 = vmatpush.msra.mxu0 %v1363
        %2038 = vmatpush.msra.mxu0 %v1347
        %2039 = vmatpush.msra.mxu0 %v1331
        %2040 = vmatpush.msra.mxu0 %v1315
        %2041 = vmatpush.msra.mxu0 %v1299
        %2042 = vmatpush.msra.mxu0 %v1283
        %2043 = vmatpush.msra.mxu0 %v1267
        %2044 = vmatpush.msra.mxu0 %v1251
        %2045 = vmatpush.msra.mxu0 %v1235
        %2046 = vmatpush.msra.mxu0 %v1219
        %2047 = vmatpush.msra.mxu0 %v1203
        %2048 = vmatpush.msra.mxu0 %v1187
        %2049 = vmatpush.msra.mxu0 %v1171
        %2050 = vmatpush.msra.mxu0 %v1155
        %2051 = vmatpush.msra.mxu0 %v1139
        %2052 = vmatpush.msra.mxu0 %v1123
        %2053 = vmatmul.f32.gmra.mxu0 %v1378
        %v2054 = vpop.f32.mrf.mxu0
        %v2055 = vadd.f32 %v2035, %v2054
        %2056 = vdwg.mxu0
        %2057 = vmatpush.msra.mxu0 %v596
        %2058 = vmatpush.msra.mxu0 %v580
        %2059 = vmatpush.msra.mxu0 %v564
        %2060 = vmatpush.msra.mxu0 %v548
        %2061 = vmatpush.msra.mxu0 %v532
        %2062 = vmatpush.msra.mxu0 %v516
        %2063 = vmatpush.msra.mxu0 %v500
        %2064 = vmatpush.msra.mxu0 %v484
        %2065 = vmatpush.msra.mxu0 %v468
        %2066 = vmatpush.msra.mxu0 %v452
        %2067 = vmatpush.msra.mxu0 %v436
        %2068 = vmatpush.msra.mxu0 %v420
        %2069 = vmatpush.msra.mxu0 %v404
        %2070 = vmatpush.msra.mxu0 %v388
        %2071 = vmatpush.msra.mxu0 %v372
        %2072 = vmatpush.msra.mxu0 %v356
        %2073 = vmatmul.f32.gmra.mxu0 %v1375
        %v2074 = vpop.f32.mrf.mxu0
        %v2075 = vadd.f32 %v1393, %v2074
        %2076 = vdwg.mxu0
        %2077 = vmatpush.msra.mxu0 %v852
        %2078 = vmatpush.msra.mxu0 %v836
        %2079 = vmatpush.msra.mxu0 %v820
        %2080 = vmatpush.msra.mxu0 %v804
        %2081 = vmatpush.msra.mxu0 %v788
        %2082 = vmatpush.msra.mxu0 %v772
        %2083 = vmatpush.msra.mxu0 %v756
        %2084 = vmatpush.msra.mxu0 %v740
        %2085 = vmatpush.msra.mxu0 %v724
        %2086 = vmatpush.msra.mxu0 %v708
        %2087 = vmatpush.msra.mxu0 %v692
        %2088 = vmatpush.msra.mxu0 %v676
        %2089 = vmatpush.msra.mxu0 %v660
        %2090 = vmatpush.msra.mxu0 %v644
        %2091 = vmatpush.msra.mxu0 %v628
        %2092 = vmatpush.msra.mxu0 %v612
        %2093 = vmatmul.f32.gmra.mxu0 %v1376
        %v2094 = vpop.f32.mrf.mxu0
        %v2095 = vadd.f32 %v2075, %v2094
        %2096 = vdwg.mxu0
        %2097 = vmatpush.msra.mxu0 %v1108
        %2098 = vmatpush.msra.mxu0 %v1092
        %2099 = vmatpush.msra.mxu0 %v1076
        %2100 = vmatpush.msra.mxu0 %v1060
        %2101 = vmatpush.msra.mxu0 %v1044
        %2102 = vmatpush.msra.mxu0 %v1028
        %2103 = vmatpush.msra.mxu0 %v1012
        %2104 = vmatpush.msra.mxu0 %v996
        %2105 = vmatpush.msra.mxu0 %v980
        %2106 = vmatpush.msra.mxu0 %v964
        %2107 = vmatpush.msra.mxu0 %v948
        %2108 = vmatpush.msra.mxu0 %v932
        %2109 = vmatpush.msra.mxu0 %v916
        %2110 = vmatpush.msra.mxu0 %v900
        %2111 = vmatpush.msra.mxu0 %v884
        %2112 = vmatpush.msra.mxu0 %v868
        %2113 = vmatmul.f32.gmra.mxu0 %v1377
        %v2114 = vpop.f32.mrf.mxu0
        %v2115 = vadd.f32 %v2095, %v2114
        %2116 = vdwg.mxu0
        %2117 = vmatpush.msra.mxu0 %v1364
        %2118 = vmatpush.msra.mxu0 %v1348
        %2119 = vmatpush.msra.mxu0 %v1332
        %2120 = vmatpush.msra.mxu0 %v1316
        %2121 = vmatpush.msra.mxu0 %v1300
        %2122 = vmatpush.msra.mxu0 %v1284
        %2123 = vmatpush.msra.mxu0 %v1268
        %2124 = vmatpush.msra.mxu0 %v1252
        %2125 = vmatpush.msra.mxu0 %v1236
        %2126 = vmatpush.msra.mxu0 %v1220
        %2127 = vmatpush.msra.mxu0 %v1204
        %2128 = vmatpush.msra.mxu0 %v1188
        %2129 = vmatpush.msra.mxu0 %v1172
        %2130 = vmatpush.msra.mxu0 %v1156
        %2131 = vmatpush.msra.mxu0 %v1140
        %2132 = vmatpush.msra.mxu0 %v1124
        %2133 = vmatmul.f32.gmra.mxu0 %v1378
        %v2134 = vpop.f32.mrf.mxu0
        %v2135 = vadd.f32 %v2115, %v2134
        %2136 = vdwg.mxu0
        %2137 = vmatpush.msra.mxu0 %v597
        %2138 = vmatpush.msra.mxu0 %v581
        %2139 = vmatpush.msra.mxu0 %v565
        %2140 = vmatpush.msra.mxu0 %v549
        %2141 = vmatpush.msra.mxu0 %v533
        %2142 = vmatpush.msra.mxu0 %v517
        %2143 = vmatpush.msra.mxu0 %v501
        %2144 = vmatpush.msra.mxu0 %v485
        %2145 = vmatpush.msra.mxu0 %v469
        %2146 = vmatpush.msra.mxu0 %v453
        %2147 = vmatpush.msra.mxu0 %v437
        %2148 = vmatpush.msra.mxu0 %v421
        %2149 = vmatpush.msra.mxu0 %v405
        %2150 = vmatpush.msra.mxu0 %v389
        %2151 = vmatpush.msra.mxu0 %v373
        %2152 = vmatpush.msra.mxu0 %v357
        %2153 = vmatmul.f32.gmra.mxu0 %v1375
        %v2154 = vpop.f32.mrf.mxu0
        %v2155 = vadd.f32 %v1394, %v2154
        %2156 = vdwg.mxu0
        %2157 = vmatpush.msra.mxu0 %v853
        %2158 = vmatpush.msra.mxu0 %v837
        %2159 = vmatpush.msra.mxu0 %v821
        %2160 = vmatpush.msra.mxu0 %v805
        %2161 = vmatpush.msra.mxu0 %v789
        %2162 = vmatpush.msra.mxu0 %v773
        %2163 = vmatpush.msra.mxu0 %v757
        %2164 = vmatpush.msra.mxu0 %v741
        %2165 = vmatpush.msra.mxu0 %v725
        %2166 = vmatpush.msra.mxu0 %v709
        %2167 = vmatpush.msra.mxu0 %v693
        %2168 = vmatpush.msra.mxu0 %v677
        %2169 = vmatpush.msra.mxu0 %v661
        %2170 = vmatpush.msra.mxu0 %v645
        %2171 = vmatpush.msra.mxu0 %v629
        %2172 = vmatpush.msra.mxu0 %v613
        %2173 = vmatmul.f32.gmra.mxu0 %v1376
        %v2174 = vpop.f32.mrf.mxu0
        %v2175 = vadd.f32 %v2155, %v2174
        %2176 = vdwg.mxu0
        %2177 = vmatpush.msra.mxu0 %v1109
        %2178 = vmatpush.msra.mxu0 %v1093
        %2179 = vmatpush.msra.mxu0 %v1077
        %2180 = vmatpush.msra.mxu0 %v1061
        %2181 = vmatpush.msra.mxu0 %v1045
        %2182 = vmatpush.msra.mxu0 %v1029
        %2183 = vmatpush.msra.mxu0 %v1013
        %2184 = vmatpush.msra.mxu0 %v997
        %2185 = vmatpush.msra.mxu0 %v981
        %2186 = vmatpush.msra.mxu0 %v965
        %2187 = vmatpush.msra.mxu0 %v949
        %2188 = vmatpush.msra.mxu0 %v933
        %2189 = vmatpush.msra.mxu0 %v917
        %2190 = vmatpush.msra.mxu0 %v901
        %2191 = vmatpush.msra.mxu0 %v885
        %2192 = vmatpush.msra.mxu0 %v869
        %2193 = vmatmul.f32.gmra.mxu0 %v1377
        %v2194 = vpop.f32.mrf.mxu0
        %v2195 = vadd.f32 %v2175, %v2194
        %2196 = vdwg.mxu0
        %2197 = vmatpush.msra.mxu0 %v1365
        %2198 = vmatpush.msra.mxu0 %v1349
        %2199 = vmatpush.msra.mxu0 %v1333
        %2200 = vmatpush.msra.mxu0 %v1317
        %2201 = vmatpush.msra.mxu0 %v1301
        %2202 = vmatpush.msra.mxu0 %v1285
        %2203 = vmatpush.msra.mxu0 %v1269
        %2204 = vmatpush.msra.mxu0 %v1253
        %2205 = vmatpush.msra.mxu0 %v1237
        %2206 = vmatpush.msra.mxu0 %v1221
        %2207 = vmatpush.msra.mxu0 %v1205
        %2208 = vmatpush.msra.mxu0 %v1189
        %2209 = vmatpush.msra.mxu0 %v1173
        %2210 = vmatpush.msra.mxu0 %v1157
        %2211 = vmatpush.msra.mxu0 %v1141
        %2212 = vmatpush.msra.mxu0 %v1125
        %2213 = vmatmul.f32.gmra.mxu0 %v1378
        %v2214 = vpop.f32.mrf.mxu0
        %v2215 = vadd.f32 %v2195, %v2214
        %2216 = vdwg.mxu0
        %2217 = vmatpush.msra.mxu0 %v598
        %2218 = vmatpush.msra.mxu0 %v582
        %2219 = vmatpush.msra.mxu0 %v566
        %2220 = vmatpush.msra.mxu0 %v550
        %2221 = vmatpush.msra.mxu0 %v534
        %2222 = vmatpush.msra.mxu0 %v518
        %2223 = vmatpush.msra.mxu0 %v502
        %2224 = vmatpush.msra.mxu0 %v486
        %2225 = vmatpush.msra.mxu0 %v470
        %2226 = vmatpush.msra.mxu0 %v454
        %2227 = vmatpush.msra.mxu0 %v438
        %2228 = vmatpush.msra.mxu0 %v422
        %2229 = vmatpush.msra.mxu0 %v406
        %2230 = vmatpush.msra.mxu0 %v390
        %2231 = vmatpush.msra.mxu0 %v374
        %2232 = vmatpush.msra.mxu0 %v358
        %2233 = vmatmul.f32.gmra.mxu0 %v1375
        %v2234 = vpop.f32.mrf.mxu0
        %v2235 = vadd.f32 %v1395, %v2234
        %2236 = vdwg.mxu0
        %2237 = vmatpush.msra.mxu0 %v854
        %2238 = vmatpush.msra.mxu0 %v838
        %2239 = vmatpush.msra.mxu0 %v822
        %2240 = vmatpush.msra.mxu0 %v806
        %2241 = vmatpush.msra.mxu0 %v790
        %2242 = vmatpush.msra.mxu0 %v774
        %2243 = vmatpush.msra.mxu0 %v758
        %2244 = vmatpush.msra.mxu0 %v742
        %2245 = vmatpush.msra.mxu0 %v726
        %2246 = vmatpush.msra.mxu0 %v710
        %2247 = vmatpush.msra.mxu0 %v694
        %2248 = vmatpush.msra.mxu0 %v678
        %2249 = vmatpush.msra.mxu0 %v662
        %2250 = vmatpush.msra.mxu0 %v646
        %2251 = vmatpush.msra.mxu0 %v630
        %2252 = vmatpush.msra.mxu0 %v614
        %2253 = vmatmul.f32.gmra.mxu0 %v1376
        %v2254 = vpop.f32.mrf.mxu0
        %v2255 = vadd.f32 %v2235, %v2254
        %2256 = vdwg.mxu0
        %2257 = vmatpush.msra.mxu0 %v1110
        %2258 = vmatpush.msra.mxu0 %v1094
        %2259 = vmatpush.msra.mxu0 %v1078
        %2260 = vmatpush.msra.mxu0 %v1062
        %2261 = vmatpush.msra.mxu0 %v1046
        %2262 = vmatpush.msra.mxu0 %v1030
        %2263 = vmatpush.msra.mxu0 %v1014
        %2264 = vmatpush.msra.mxu0 %v998
        %2265 = vmatpush.msra.mxu0 %v982
        %2266 = vmatpush.msra.mxu0 %v966
        %2267 = vmatpush.msra.mxu0 %v950
        %2268 = vmatpush.msra.mxu0 %v934
        %2269 = vmatpush.msra.mxu0 %v918
        %2270 = vmatpush.msra.mxu0 %v902
        %2271 = vmatpush.msra.mxu0 %v886
        %2272 = vmatpush.msra.mxu0 %v870
        %2273 = vmatmul.f32.gmra.mxu0 %v1377
        %v2274 = vpop.f32.mrf.mxu0
        %v2275 = vadd.f32 %v2255, %v2274
        %2276 = vdwg.mxu0
        %2277 = vmatpush.msra.mxu0 %v1366
        %2278 = vmatpush.msra.mxu0 %v1350
        %2279 = vmatpush.msra.mxu0 %v1334
        %2280 = vmatpush.msra.mxu0 %v1318
        %2281 = vmatpush.msra.mxu0 %v1302
        %2282 = vmatpush.msra.mxu0 %v1286
        %2283 = vmatpush.msra.mxu0 %v1270
        %2284 = vmatpush.msra.mxu0 %v1254
        %2285 = vmatpush.msra.mxu0 %v1238
        %2286 = vmatpush.msra.mxu0 %v1222
        %2287 = vmatpush.msra.mxu0 %v1206
        %2288 = vmatpush.msra.mxu0 %v1190
        %2289 = vmatpush.msra.mxu0 %v1174
        %2290 = vmatpush.msra.mxu0 %v1158
        %2291 = vmatpush.msra.mxu0 %v1142
        %2292 = vmatpush.msra.mxu0 %v1126
        %2293 = vmatmul.f32.gmra.mxu0 %v1378
        %v2294 = vpop.f32.mrf.mxu0
        %v2295 = vadd.f32 %v2275, %v2294
        %2296 = vdwg.mxu0
        %2297 = vmatpush.msra.mxu0 %v599
        %2298 = vmatpush.msra.mxu0 %v583
        %2299 = vmatpush.msra.mxu0 %v567
        %2300 = vmatpush.msra.mxu0 %v551
        %2301 = vmatpush.msra.mxu0 %v535
        %2302 = vmatpush.msra.mxu0 %v519
        %2303 = vmatpush.msra.mxu0 %v503
        %2304 = vmatpush.msra.mxu0 %v487
        %2305 = vmatpush.msra.mxu0 %v471
        %2306 = vmatpush.msra.mxu0 %v455
        %2307 = vmatpush.msra.mxu0 %v439
        %2308 = vmatpush.msra.mxu0 %v423
        %2309 = vmatpush.msra.mxu0 %v407
        %2310 = vmatpush.msra.mxu0 %v391
        %2311 = vmatpush.msra.mxu0 %v375
        %2312 = vmatpush.msra.mxu0 %v359
        %2313 = vmatmul.f32.gmra.mxu0 %v1375
        %v2314 = vpop.f32.mrf.mxu0
        %v2315 = vadd.f32 %v1396, %v2314
        %2316 = vdwg.mxu0
        %2317 = vmatpush.msra.mxu0 %v855
        %2318 = vmatpush.msra.mxu0 %v839
        %2319 = vmatpush.msra.mxu0 %v823
        %2320 = vmatpush.msra.mxu0 %v807
        %2321 = vmatpush.msra.mxu0 %v791
        %2322 = vmatpush.msra.mxu0 %v775
        %2323 = vmatpush.msra.mxu0 %v759
        %2324 = vmatpush.msra.mxu0 %v743
        %2325 = vmatpush.msra.mxu0 %v727
        %2326 = vmatpush.msra.mxu0 %v711
        %2327 = vmatpush.msra.mxu0 %v695
        %2328 = vmatpush.msra.mxu0 %v679
        %2329 = vmatpush.msra.mxu0 %v663
        %2330 = vmatpush.msra.mxu0 %v647
        %2331 = vmatpush.msra.mxu0 %v631
        %2332 = vmatpush.msra.mxu0 %v615
        %2333 = vmatmul.f32.gmra.mxu0 %v1376
        %v2334 = vpop.f32.mrf.mxu0
        %v2335 = vadd.f32 %v2315, %v2334
        %2336 = vdwg.mxu0
        %2337 = vmatpush.msra.mxu0 %v1111
        %2338 = vmatpush.msra.mxu0 %v1095
        %2339 = vmatpush.msra.mxu0 %v1079
        %2340 = vmatpush.msra.mxu0 %v1063
        %2341 = vmatpush.msra.mxu0 %v1047
        %2342 = vmatpush.msra.mxu0 %v1031
        %2343 = vmatpush.msra.mxu0 %v1015
        %2344 = vmatpush.msra.mxu0 %v999
        %2345 = vmatpush.msra.mxu0 %v983
        %2346 = vmatpush.msra.mxu0 %v967
        %2347 = vmatpush.msra.mxu0 %v951
        %2348 = vmatpush.msra.mxu0 %v935
        %2349 = vmatpush.msra.mxu0 %v919
        %2350 = vmatpush.msra.mxu0 %v903
        %2351 = vmatpush.msra.mxu0 %v887
        %2352 = vmatpush.msra.mxu0 %v871
        %2353 = vmatmul.f32.gmra.mxu0 %v1377
        %v2354 = vpop.f32.mrf.mxu0
        %v2355 = vadd.f32 %v2335, %v2354
        %2356 = vdwg.mxu0
        %2357 = vmatpush.msra.mxu0 %v1367
        %2358 = vmatpush.msra.mxu0 %v1351
        %2359 = vmatpush.msra.mxu0 %v1335
        %2360 = vmatpush.msra.mxu0 %v1319
        %2361 = vmatpush.msra.mxu0 %v1303
        %2362 = vmatpush.msra.mxu0 %v1287
        %2363 = vmatpush.msra.mxu0 %v1271
        %2364 = vmatpush.msra.mxu0 %v1255
        %2365 = vmatpush.msra.mxu0 %v1239
        %2366 = vmatpush.msra.mxu0 %v1223
        %2367 = vmatpush.msra.mxu0 %v1207
        %2368 = vmatpush.msra.mxu0 %v1191
        %2369 = vmatpush.msra.mxu0 %v1175
        %2370 = vmatpush.msra.mxu0 %v1159
        %2371 = vmatpush.msra.mxu0 %v1143
        %2372 = vmatpush.msra.mxu0 %v1127
        %2373 = vmatmul.f32.gmra.mxu0 %v1378
        %v2374 = vpop.f32.mrf.mxu0
        %v2375 = vadd.f32 %v2355, %v2374
        %2376 = vdwg.mxu0
        %2377 = vmatpush.msra.mxu0 %v600
        %2378 = vmatpush.msra.mxu0 %v584
        %2379 = vmatpush.msra.mxu0 %v568
        %2380 = vmatpush.msra.mxu0 %v552
        %2381 = vmatpush.msra.mxu0 %v536
        %2382 = vmatpush.msra.mxu0 %v520
        %2383 = vmatpush.msra.mxu0 %v504
        %2384 = vmatpush.msra.mxu0 %v488
        %2385 = vmatpush.msra.mxu0 %v472
        %2386 = vmatpush.msra.mxu0 %v456
        %2387 = vmatpush.msra.mxu0 %v440
        %2388 = vmatpush.msra.mxu0 %v424
        %2389 = vmatpush.msra.mxu0 %v408
        %2390 = vmatpush.msra.mxu0 %v392
        %2391 = vmatpush.msra.mxu0 %v376
        %2392 = vmatpush.msra.mxu0 %v360
        %2393 = vmatmul.f32.gmra.mxu0 %v1375
        %v2394 = vpop.f32.mrf.mxu0
        %v2395 = vadd.f32 %v1397, %v2394
        %2396 = vdwg.mxu0
        %2397 = vmatpush.msra.mxu0 %v856
        %2398 = vmatpush.msra.mxu0 %v840
        %2399 = vmatpush.msra.mxu0 %v824
        %2400 = vmatpush.msra.mxu0 %v808
        %2401 = vmatpush.msra.mxu0 %v792
        %2402 = vmatpush.msra.mxu0 %v776
        %2403 = vmatpush.msra.mxu0 %v760
        %2404 = vmatpush.msra.mxu0 %v744
        %2405 = vmatpush.msra.mxu0 %v728
        %2406 = vmatpush.msra.mxu0 %v712
        %2407 = vmatpush.msra.mxu0 %v696
        %2408 = vmatpush.msra.mxu0 %v680
        %2409 = vmatpush.msra.mxu0 %v664
        %2410 = vmatpush.msra.mxu0 %v648
        %2411 = vmatpush.msra.mxu0 %v632
        %2412 = vmatpush.msra.mxu0 %v616
        %2413 = vmatmul.f32.gmra.mxu0 %v1376
        %v2414 = vpop.f32.mrf.mxu0
        %v2415 = vadd.f32 %v2395, %v2414
        %2416 = vdwg.mxu0
        %2417 = vmatpush.msra.mxu0 %v1112
        %2418 = vmatpush.msra.mxu0 %v1096
        %2419 = vmatpush.msra.mxu0 %v1080
        %2420 = vmatpush.msra.mxu0 %v1064
        %2421 = vmatpush.msra.mxu0 %v1048
        %2422 = vmatpush.msra.mxu0 %v1032
        %2423 = vmatpush.msra.mxu0 %v1016
        %2424 = vmatpush.msra.mxu0 %v1000
        %2425 = vmatpush.msra.mxu0 %v984
        %2426 = vmatpush.msra.mxu0 %v968
        %2427 = vmatpush.msra.mxu0 %v952
        %2428 = vmatpush.msra.mxu0 %v936
        %2429 = vmatpush.msra.mxu0 %v920
        %2430 = vmatpush.msra.mxu0 %v904
        %2431 = vmatpush.msra.mxu0 %v888
        %2432 = vmatpush.msra.mxu0 %v872
        %2433 = vmatmul.f32.gmra.mxu0 %v1377
        %v2434 = vpop.f32.mrf.mxu0
        %v2435 = vadd.f32 %v2415, %v2434
        %2436 = vdwg.mxu0
        %2437 = vmatpush.msra.mxu0 %v1368
        %2438 = vmatpush.msra.mxu0 %v1352
        %2439 = vmatpush.msra.mxu0 %v1336
        %2440 = vmatpush.msra.mxu0 %v1320
        %2441 = vmatpush.msra.mxu0 %v1304
        %2442 = vmatpush.msra.mxu0 %v1288
        %2443 = vmatpush.msra.mxu0 %v1272
        %2444 = vmatpush.msra.mxu0 %v1256
        %2445 = vmatpush.msra.mxu0 %v1240
        %2446 = vmatpush.msra.mxu0 %v1224
        %2447 = vmatpush.msra.mxu0 %v1208
        %2448 = vmatpush.msra.mxu0 %v1192
        %2449 = vmatpush.msra.mxu0 %v1176
        %2450 = vmatpush.msra.mxu0 %v1160
        %2451 = vmatpush.msra.mxu0 %v1144
        %2452 = vmatpush.msra.mxu0 %v1128
        %2453 = vmatmul.f32.gmra.mxu0 %v1378
        %v2454 = vpop.f32.mrf.mxu0
        %v2455 = vadd.f32 %v2435, %v2454
        %2456 = vdwg.mxu0
        %2457 = vmatpush.msra.mxu0 %v601
        %2458 = vmatpush.msra.mxu0 %v585
        %2459 = vmatpush.msra.mxu0 %v569
        %2460 = vmatpush.msra.mxu0 %v553
        %2461 = vmatpush.msra.mxu0 %v537
        %2462 = vmatpush.msra.mxu0 %v521
        %2463 = vmatpush.msra.mxu0 %v505
        %2464 = vmatpush.msra.mxu0 %v489
        %2465 = vmatpush.msra.mxu0 %v473
        %2466 = vmatpush.msra.mxu0 %v457
        %2467 = vmatpush.msra.mxu0 %v441
        %2468 = vmatpush.msra.mxu0 %v425
        %2469 = vmatpush.msra.mxu0 %v409
        %2470 = vmatpush.msra.mxu0 %v393
        %2471 = vmatpush.msra.mxu0 %v377
        %2472 = vmatpush.msra.mxu0 %v361
        %2473 = vmatmul.f32.gmra.mxu0 %v1375
        %v2474 = vpop.f32.mrf.mxu0
        %v2475 = vadd.f32 %v1398, %v2474
        %2476 = vdwg.mxu0
        %2477 = vmatpush.msra.mxu0 %v857
        %2478 = vmatpush.msra.mxu0 %v841
        %2479 = vmatpush.msra.mxu0 %v825
        %2480 = vmatpush.msra.mxu0 %v809
        %2481 = vmatpush.msra.mxu0 %v793
        %2482 = vmatpush.msra.mxu0 %v777
        %2483 = vmatpush.msra.mxu0 %v761
        %2484 = vmatpush.msra.mxu0 %v745
        %2485 = vmatpush.msra.mxu0 %v729
        %2486 = vmatpush.msra.mxu0 %v713
        %2487 = vmatpush.msra.mxu0 %v697
        %2488 = vmatpush.msra.mxu0 %v681
        %2489 = vmatpush.msra.mxu0 %v665
        %2490 = vmatpush.msra.mxu0 %v649
        %2491 = vmatpush.msra.mxu0 %v633
        %2492 = vmatpush.msra.mxu0 %v617
        %2493 = vmatmul.f32.gmra.mxu0 %v1376
        %v2494 = vpop.f32.mrf.mxu0
        %v2495 = vadd.f32 %v2475, %v2494
        %2496 = vdwg.mxu0
        %2497 = vmatpush.msra.mxu0 %v1113
        %2498 = vmatpush.msra.mxu0 %v1097
        %2499 = vmatpush.msra.mxu0 %v1081
        %2500 = vmatpush.msra.mxu0 %v1065
        %2501 = vmatpush.msra.mxu0 %v1049
        %2502 = vmatpush.msra.mxu0 %v1033
        %2503 = vmatpush.msra.mxu0 %v1017
        %2504 = vmatpush.msra.mxu0 %v1001
        %2505 = vmatpush.msra.mxu0 %v985
        %2506 = vmatpush.msra.mxu0 %v969
        %2507 = vmatpush.msra.mxu0 %v953
        %2508 = vmatpush.msra.mxu0 %v937
        %2509 = vmatpush.msra.mxu0 %v921
        %2510 = vmatpush.msra.mxu0 %v905
        %2511 = vmatpush.msra.mxu0 %v889
        %2512 = vmatpush.msra.mxu0 %v873
        %2513 = vmatmul.f32.gmra.mxu0 %v1377
        %v2514 = vpop.f32.mrf.mxu0
        %v2515 = vadd.f32 %v2495, %v2514
        %2516 = vdwg.mxu0
        %2517 = vmatpush.msra.mxu0 %v1369
        %2518 = vmatpush.msra.mxu0 %v1353
        %2519 = vmatpush.msra.mxu0 %v1337
        %2520 = vmatpush.msra.mxu0 %v1321
        %2521 = vmatpush.msra.mxu0 %v1305
        %2522 = vmatpush.msra.mxu0 %v1289
        %2523 = vmatpush.msra.mxu0 %v1273
        %2524 = vmatpush.msra.mxu0 %v1257
        %2525 = vmatpush.msra.mxu0 %v1241
        %2526 = vmatpush.msra.mxu0 %v1225
        %2527 = vmatpush.msra.mxu0 %v1209
        %2528 = vmatpush.msra.mxu0 %v1193
        %2529 = vmatpush.msra.mxu0 %v1177
        %2530 = vmatpush.msra.mxu0 %v1161
        %2531 = vmatpush.msra.mxu0 %v1145
        %2532 = vmatpush.msra.mxu0 %v1129
        %2533 = vmatmul.f32.gmra.mxu0 %v1378
        %v2534 = vpop.f32.mrf.mxu0
        %v2535 = vadd.f32 %v2515, %v2534
        %2536 = vdwg.mxu0
        %2537 = vmatpush.msra.mxu0 %v602
        %2538 = vmatpush.msra.mxu0 %v586
        %2539 = vmatpush.msra.mxu0 %v570
        %2540 = vmatpush.msra.mxu0 %v554
        %2541 = vmatpush.msra.mxu0 %v538
        %2542 = vmatpush.msra.mxu0 %v522
        %2543 = vmatpush.msra.mxu0 %v506
        %2544 = vmatpush.msra.mxu0 %v490
        %2545 = vmatpush.msra.mxu0 %v474
        %2546 = vmatpush.msra.mxu0 %v458
        %2547 = vmatpush.msra.mxu0 %v442
        %2548 = vmatpush.msra.mxu0 %v426
        %2549 = vmatpush.msra.mxu0 %v410
        %2550 = vmatpush.msra.mxu0 %v394
        %2551 = vmatpush.msra.mxu0 %v378
        %2552 = vmatpush.msra.mxu0 %v362
        %2553 = vmatmul.f32.gmra.mxu0 %v1375
        %v2554 = vpop.f32.mrf.mxu0
        %v2555 = vadd.f32 %v1399, %v2554
        %2556 = vdwg.mxu0
        %2557 = vmatpush.msra.mxu0 %v858
        %2558 = vmatpush.msra.mxu0 %v842
        %2559 = vmatpush.msra.mxu0 %v826
        %2560 = vmatpush.msra.mxu0 %v810
        %2561 = vmatpush.msra.mxu0 %v794
        %2562 = vmatpush.msra.mxu0 %v778
        %2563 = vmatpush.msra.mxu0 %v762
        %2564 = vmatpush.msra.mxu0 %v746
        %2565 = vmatpush.msra.mxu0 %v730
        %2566 = vmatpush.msra.mxu0 %v714
        %2567 = vmatpush.msra.mxu0 %v698
        %2568 = vmatpush.msra.mxu0 %v682
        %2569 = vmatpush.msra.mxu0 %v666
        %2570 = vmatpush.msra.mxu0 %v650
        %2571 = vmatpush.msra.mxu0 %v634
        %2572 = vmatpush.msra.mxu0 %v618
        %2573 = vmatmul.f32.gmra.mxu0 %v1376
        %v2574 = vpop.f32.mrf.mxu0
        %v2575 = vadd.f32 %v2555, %v2574
        %2576 = vdwg.mxu0
        %2577 = vmatpush.msra.mxu0 %v1114
        %2578 = vmatpush.msra.mxu0 %v1098
        %2579 = vmatpush.msra.mxu0 %v1082
        %2580 = vmatpush.msra.mxu0 %v1066
        %2581 = vmatpush.msra.mxu0 %v1050
        %2582 = vmatpush.msra.mxu0 %v1034
        %2583 = vmatpush.msra.mxu0 %v1018
        %2584 = vmatpush.msra.mxu0 %v1002
        %2585 = vmatpush.msra.mxu0 %v986
        %2586 = vmatpush.msra.mxu0 %v970
        %2587 = vmatpush.msra.mxu0 %v954
        %2588 = vmatpush.msra.mxu0 %v938
        %2589 = vmatpush.msra.mxu0 %v922
        %2590 = vmatpush.msra.mxu0 %v906
        %2591 = vmatpush.msra.mxu0 %v890
        %2592 = vmatpush.msra.mxu0 %v874
        %2593 = vmatmul.f32.gmra.mxu0 %v1377
        %v2594 = vpop.f32.mrf.mxu0
        %v2595 = vadd.f32 %v2575, %v2594
        %2596 = vdwg.mxu0
        %2597 = vmatpush.msra.mxu0 %v1370
        %2598 = vmatpush.msra.mxu0 %v1354
        %2599 = vmatpush.msra.mxu0 %v1338
        %2600 = vmatpush.msra.mxu0 %v1322
        %2601 = vmatpush.msra.mxu0 %v1306
        %2602 = vmatpush.msra.mxu0 %v1290
        %2603 = vmatpush.msra.mxu0 %v1274
        %2604 = vmatpush.msra.mxu0 %v1258
        %2605 = vmatpush.msra.mxu0 %v1242
        %2606 = vmatpush.msra.mxu0 %v1226
        %2607 = vmatpush.msra.mxu0 %v1210
        %2608 = vmatpush.msra.mxu0 %v1194
        %2609 = vmatpush.msra.mxu0 %v1178
        %2610 = vmatpush.msra.mxu0 %v1162
        %2611 = vmatpush.msra.mxu0 %v1146
        %2612 = vmatpush.msra.mxu0 %v1130
        %2613 = vmatmul.f32.gmra.mxu0 %v1378
        %v2614 = vpop.f32.mrf.mxu0
        %v2615 = vadd.f32 %v2595, %v2614
        %2616 = vdwg.mxu0
        %2617 = vmatpush.msra.mxu0 %v603
        %2618 = vmatpush.msra.mxu0 %v587
        %2619 = vmatpush.msra.mxu0 %v571
        %2620 = vmatpush.msra.mxu0 %v555
        %2621 = vmatpush.msra.mxu0 %v539
        %2622 = vmatpush.msra.mxu0 %v523
        %2623 = vmatpush.msra.mxu0 %v507
        %2624 = vmatpush.msra.mxu0 %v491
        %2625 = vmatpush.msra.mxu0 %v475
        %2626 = vmatpush.msra.mxu0 %v459
        %2627 = vmatpush.msra.mxu0 %v443
        %2628 = vmatpush.msra.mxu0 %v427
        %2629 = vmatpush.msra.mxu0 %v411
        %2630 = vmatpush.msra.mxu0 %v395
        %2631 = vmatpush.msra.mxu0 %v379
        %2632 = vmatpush.msra.mxu0 %v363
        %2633 = vmatmul.f32.gmra.mxu0 %v1375
        %v2634 = vpop.f32.mrf.mxu0
        %v2635 = vadd.f32 %v1400, %v2634
        %2636 = vdwg.mxu0
        %2637 = vmatpush.msra.mxu0 %v859
        %2638 = vmatpush.msra.mxu0 %v843
        %2639 = vmatpush.msra.mxu0 %v827
        %2640 = vmatpush.msra.mxu0 %v811
        %2641 = vmatpush.msra.mxu0 %v795
        %2642 = vmatpush.msra.mxu0 %v779
        %2643 = vmatpush.msra.mxu0 %v763
        %2644 = vmatpush.msra.mxu0 %v747
        %2645 = vmatpush.msra.mxu0 %v731
        %2646 = vmatpush.msra.mxu0 %v715
        %2647 = vmatpush.msra.mxu0 %v699
        %2648 = vmatpush.msra.mxu0 %v683
        %2649 = vmatpush.msra.mxu0 %v667
        %2650 = vmatpush.msra.mxu0 %v651
        %2651 = vmatpush.msra.mxu0 %v635
        %2652 = vmatpush.msra.mxu0 %v619
        %2653 = vmatmul.f32.gmra.mxu0 %v1376
        %v2654 = vpop.f32.mrf.mxu0
        %v2655 = vadd.f32 %v2635, %v2654
        %2656 = vdwg.mxu0
        %2657 = vmatpush.msra.mxu0 %v1115
        %2658 = vmatpush.msra.mxu0 %v1099
        %2659 = vmatpush.msra.mxu0 %v1083
        %2660 = vmatpush.msra.mxu0 %v1067
        %2661 = vmatpush.msra.mxu0 %v1051
        %2662 = vmatpush.msra.mxu0 %v1035
        %2663 = vmatpush.msra.mxu0 %v1019
        %2664 = vmatpush.msra.mxu0 %v1003
        %2665 = vmatpush.msra.mxu0 %v987
        %2666 = vmatpush.msra.mxu0 %v971
        %2667 = vmatpush.msra.mxu0 %v955
        %2668 = vmatpush.msra.mxu0 %v939
        %2669 = vmatpush.msra.mxu0 %v923
        %2670 = vmatpush.msra.mxu0 %v907
        %2671 = vmatpush.msra.mxu0 %v891
        %2672 = vmatpush.msra.mxu0 %v875
        %2673 = vmatmul.f32.gmra.mxu0 %v1377
        %v2674 = vpop.f32.mrf.mxu0
        %v2675 = vadd.f32 %v2655, %v2674
        %2676 = vdwg.mxu0
        %2677 = vmatpush.msra.mxu0 %v1371
        %2678 = vmatpush.msra.mxu0 %v1355
        %2679 = vmatpush.msra.mxu0 %v1339
        %2680 = vmatpush.msra.mxu0 %v1323
        %2681 = vmatpush.msra.mxu0 %v1307
        %2682 = vmatpush.msra.mxu0 %v1291
        %2683 = vmatpush.msra.mxu0 %v1275
        %2684 = vmatpush.msra.mxu0 %v1259
        %2685 = vmatpush.msra.mxu0 %v1243
        %2686 = vmatpush.msra.mxu0 %v1227
        %2687 = vmatpush.msra.mxu0 %v1211
        %2688 = vmatpush.msra.mxu0 %v1195
        %2689 = vmatpush.msra.mxu0 %v1179
        %2690 = vmatpush.msra.mxu0 %v1163
        %2691 = vmatpush.msra.mxu0 %v1147
        %2692 = vmatpush.msra.mxu0 %v1131
        %2693 = vmatmul.f32.gmra.mxu0 %v1378
        %v2694 = vpop.f32.mrf.mxu0
        %v2695 = vadd.f32 %v2675, %v2694
        %2696 = vdwg.mxu0
        %vm2697 = vcmp.gt.f32.partialorder %v1495, 0.0
        %vm2698 = vcmp.gt.f32.partialorder %v1575, 0.0
        %vm2699 = vcmp.gt.f32.partialorder %v1655, 0.0
        %vm2700 = vcmp.gt.f32.partialorder %v1735, 0.0
        %vm2701 = vcmp.gt.f32.partialorder %v1815, 0.0
        %vm2702 = vcmp.gt.f32.partialorder %v1895, 0.0
        %vm2703 = vcmp.gt.f32.partialorder %v1975, 0.0
        %vm2704 = vcmp.gt.f32.partialorder %v2055, 0.0
        %vm2705 = vcmp.gt.f32.partialorder %v2135, 0.0
        %vm2706 = vcmp.gt.f32.partialorder %v2215, 0.0
        %vm2707 = vcmp.gt.f32.partialorder %v2295, 0.0
        %vm2708 = vcmp.gt.f32.partialorder %v2375, 0.0
        %vm2709 = vcmp.gt.f32.partialorder %v2455, 0.0
        %vm2710 = vcmp.gt.f32.partialorder %v2535, 0.0
        %vm2711 = vcmp.gt.f32.partialorder %v2615, 0.0
        %vm2712 = vcmp.gt.f32.partialorder %v2695, 0.0
        %v2713 = vmul.f32 %v1495, 1.442695
        %v2714 = vpow.pop %v2713
        %v2715 = vmul.f32 %v1575, 1.442695
        %v2716 = vpow.pop %v2715
        %v2717 = vmul.f32 %v1655, 1.442695
        %v2718 = vpow.pop %v2717
        %v2719 = vmul.f32 %v1735, 1.442695
        %v2720 = vpow.pop %v2719
        %v2721 = vmul.f32 %v1815, 1.442695
        %v2722 = vpow.pop %v2721
        %v2723 = vmul.f32 %v1895, 1.442695
        %v2724 = vpow.pop %v2723
        %v2725 = vmul.f32 %v1975, 1.442695
        %v2726 = vpow.pop %v2725
        %v2727 = vmul.f32 %v2055, 1.442695
        %v2728 = vpow.pop %v2727
        %v2729 = vmul.f32 %v2135, 1.442695
        %v2730 = vpow.pop %v2729
        %v2731 = vmul.f32 %v2215, 1.442695
        %v2732 = vpow.pop %v2731
        %v2733 = vmul.f32 %v2295, 1.442695
        %v2734 = vpow.pop %v2733
        %v2735 = vmul.f32 %v2375, 1.442695
        %v2736 = vpow.pop %v2735
        %v2737 = vmul.f32 %v2455, 1.442695
        %v2738 = vpow.pop %v2737
        %v2739 = vmul.f32 %v2535, 1.442695
        %v2740 = vpow.pop %v2739
        %v2741 = vmul.f32 %v2615, 1.442695
        %v2742 = vpow.pop %v2741
        %v2743 = vmul.f32 %v2695, 1.442695
        %v2744 = vpow.pop %v2743
        %v2745 = vsub.f32 %v2714, 1.0
        %v2746 = vsub.f32 %v2716, 1.0
        %v2747 = vsub.f32 %v2718, 1.0
        %v2748 = vsub.f32 %v2720, 1.0
        %v2749 = vsub.f32 %v2722, 1.0
        %v2750 = vsub.f32 %v2724, 1.0
        %v2751 = vsub.f32 %v2726, 1.0
        %v2752 = vsub.f32 %v2728, 1.0
        %v2753 = vsub.f32 %v2730, 1.0
        %v2754 = vsub.f32 %v2732, 1.0
        %v2755 = vsub.f32 %v2734, 1.0
        %v2756 = vsub.f32 %v2736, 1.0
        %v2757 = vsub.f32 %v2738, 1.0
        %v2758 = vsub.f32 %v2740, 1.0
        %v2759 = vsub.f32 %v2742, 1.0
        %v2760 = vsub.f32 %v2744, 1.0
        %v2761 = vsel %vm2697, %v1495, %v2745
        %v2762 = vsel %vm2698, %v1575, %v2746
        %v2763 = vsel %vm2699, %v1655, %v2747
        %v2764 = vsel %vm2700, %v1735, %v2748
        %v2765 = vsel %vm2701, %v1815, %v2749
        %v2766 = vsel %vm2702, %v1895, %v2750
        %v2767 = vsel %vm2703, %v1975, %v2751
        %v2768 = vsel %vm2704, %v2055, %v2752
        %v2769 = vsel %vm2705, %v2135, %v2753
        %v2770 = vsel %vm2706, %v2215, %v2754
        %v2771 = vsel %vm2707, %v2295, %v2755
        %v2772 = vsel %vm2708, %v2375, %v2756
        %v2773 = vsel %vm2709, %v2455, %v2757
        %v2774 = vsel %vm2710, %v2535, %v2758
        %v2775 = vsel %vm2711, %v2615, %v2759
        %v2776 = vsel %vm2712, %v2695, %v2760
        %v2777 = vld [vmem:[#allocation8] sm:$0xff]
        %v2778 = vld [vmem:[#allocation8 + $0x8] sm:$0xff]
        %v2779 = vld [vmem:[#allocation8 + $0x10] sm:$0xff]
        %v2780 = vld [vmem:[#allocation8 + $0x18] sm:$0xff]
        %v2781 = vld [vmem:[#allocation8 + $0x20] sm:$0xff]
        %v2782 = vld [vmem:[#allocation8 + $0x28] sm:$0xff]
        %v2783 = vld [vmem:[#allocation8 + $0x30] sm:$0xff]
        %v2784 = vld [vmem:[#allocation8 + $0x38] sm:$0xff]
        %v2785 = vld [vmem:[#allocation8 + $0x40] sm:$0xff]
        %v2786 = vld [vmem:[#allocation8 + $0x48] sm:$0xff]
        %v2787 = vld [vmem:[#allocation8 + $0x50] sm:$0xff]
        %v2788 = vld [vmem:[#allocation8 + $0x58] sm:$0xff]
        %v2789 = vld [vmem:[#allocation8 + $0x60] sm:$0xff]
        %v2790 = vld [vmem:[#allocation8 + $0x68] sm:$0xff]
        %v2791 = vld [vmem:[#allocation8 + $0x70] sm:$0xff]
        %v2792 = vld [vmem:[#allocation8 + $0x78] sm:$0xff]
        %v2793 = vld [vmem:[#allocation8 + $0x80] sm:$0xff]
        %v2794 = vld [vmem:[#allocation8 + $0x88] sm:$0xff]
        %v2795 = vld [vmem:[#allocation8 + $0x90] sm:$0xff]
        %v2796 = vld [vmem:[#allocation8 + $0x98] sm:$0xff]
        %v2797 = vld [vmem:[#allocation8 + $0xa0] sm:$0xff]
        %v2798 = vld [vmem:[#allocation8 + $0xa8] sm:$0xff]
        %v2799 = vld [vmem:[#allocation8 + $0xb0] sm:$0xff]
        %v2800 = vld [vmem:[#allocation8 + $0xb8] sm:$0xff]
        %v2801 = vld [vmem:[#allocation8 + $0xc0] sm:$0xff]
        %v2802 = vld [vmem:[#allocation8 + $0xc8] sm:$0xff]
        %v2803 = vld [vmem:[#allocation8 + $0xd0] sm:$0xff]
        %v2804 = vld [vmem:[#allocation8 + $0xd8] sm:$0xff]
        %v2805 = vld [vmem:[#allocation8 + $0xe0] sm:$0xff]
        %v2806 = vld [vmem:[#allocation8 + $0xe8] sm:$0xff]
        %v2807 = vld [vmem:[#allocation8 + $0xf0] sm:$0xff]
        %v2808 = vld [vmem:[#allocation8 + $0xf8] sm:$0xff]
        %v2809 = vld [vmem:[#allocation8 + $0x100] sm:$0xff]
        %v2810 = vld [vmem:[#allocation8 + $0x108] sm:$0xff]
        %v2811 = vld [vmem:[#allocation8 + $0x110] sm:$0xff]
        %v2812 = vld [vmem:[#allocation8 + $0x118] sm:$0xff]
        %v2813 = vld [vmem:[#allocation8 + $0x120] sm:$0xff]
        %v2814 = vld [vmem:[#allocation8 + $0x128] sm:$0xff]
        %v2815 = vld [vmem:[#allocation8 + $0x130] sm:$0xff]
        %v2816 = vld [vmem:[#allocation8 + $0x138] sm:$0xff]
        %v2817 = vld [vmem:[#allocation8 + $0x140] sm:$0xff]
        %v2818 = vld [vmem:[#allocation8 + $0x148] sm:$0xff]
        %v2819 = vld [vmem:[#allocation8 + $0x150] sm:$0xff]
        %v2820 = vld [vmem:[#allocation8 + $0x158] sm:$0xff]
        %v2821 = vld [vmem:[#allocation8 + $0x160] sm:$0xff]
        %v2822 = vld [vmem:[#allocation8 + $0x168] sm:$0xff]
        %v2823 = vld [vmem:[#allocation8 + $0x170] sm:$0xff]
        %v2824 = vld [vmem:[#allocation8 + $0x178] sm:$0xff]
        %v2825 = vld [vmem:[#allocation8 + $0x180] sm:$0xff]
        %v2826 = vld [vmem:[#allocation8 + $0x188] sm:$0xff]
        %v2827 = vld [vmem:[#allocation8 + $0x190] sm:$0xff]
        %v2828 = vld [vmem:[#allocation8 + $0x198] sm:$0xff]
        %v2829 = vld [vmem:[#allocation8 + $0x1a0] sm:$0xff]
        %v2830 = vld [vmem:[#allocation8 + $0x1a8] sm:$0xff]
        %v2831 = vld [vmem:[#allocation8 + $0x1b0] sm:$0xff]
        %v2832 = vld [vmem:[#allocation8 + $0x1b8] sm:$0xff]
        %v2833 = vld [vmem:[#allocation8 + $0x1c0] sm:$0xff]
        %v2834 = vld [vmem:[#allocation8 + $0x1c8] sm:$0xff]
        %v2835 = vld [vmem:[#allocation8 + $0x1d0] sm:$0xff]
        %v2836 = vld [vmem:[#allocation8 + $0x1d8] sm:$0xff]
        %v2837 = vld [vmem:[#allocation8 + $0x1e0] sm:$0xff]
        %v2838 = vld [vmem:[#allocation8 + $0x1e8] sm:$0xff]
        %v2839 = vld [vmem:[#allocation8 + $0x1f0] sm:$0xff]
        %v2840 = vld [vmem:[#allocation8 + $0x1f8] sm:$0xff]
        %v2841 = vld [vmem:[#allocation8 + $0x200] sm:$0xff]
        %v2842 = vld [vmem:[#allocation8 + $0x208] sm:$0xff]
        %v2843 = vld [vmem:[#allocation8 + $0x210] sm:$0xff]
        %v2844 = vld [vmem:[#allocation8 + $0x218] sm:$0xff]
        %v2845 = vld [vmem:[#allocation8 + $0x220] sm:$0xff]
        %v2846 = vld [vmem:[#allocation8 + $0x228] sm:$0xff]
        %v2847 = vld [vmem:[#allocation8 + $0x230] sm:$0xff]
        %v2848 = vld [vmem:[#allocation8 + $0x238] sm:$0xff]
        %v2849 = vld [vmem:[#allocation8 + $0x240] sm:$0xff]
        %v2850 = vld [vmem:[#allocation8 + $0x248] sm:$0xff]
        %v2851 = vld [vmem:[#allocation8 + $0x250] sm:$0xff]
        %v2852 = vld [vmem:[#allocation8 + $0x258] sm:$0xff]
        %v2853 = vld [vmem:[#allocation8 + $0x260] sm:$0xff]
        %v2854 = vld [vmem:[#allocation8 + $0x268] sm:$0xff]
        %v2855 = vld [vmem:[#allocation8 + $0x270] sm:$0xff]
        %v2856 = vld [vmem:[#allocation8 + $0x278] sm:$0xff]
        %v2857 = vld [vmem:[#allocation8 + $0x280] sm:$0xff]
        %v2858 = vld [vmem:[#allocation8 + $0x288] sm:$0xff]
        %v2859 = vld [vmem:[#allocation8 + $0x290] sm:$0xff]
        %v2860 = vld [vmem:[#allocation8 + $0x298] sm:$0xff]
        %v2861 = vld [vmem:[#allocation8 + $0x2a0] sm:$0xff]
        %v2862 = vld [vmem:[#allocation8 + $0x2a8] sm:$0xff]
        %v2863 = vld [vmem:[#allocation8 + $0x2b0] sm:$0xff]
        %v2864 = vld [vmem:[#allocation8 + $0x2b8] sm:$0xff]
        %v2865 = vld [vmem:[#allocation8 + $0x2c0] sm:$0xff]
        %v2866 = vld [vmem:[#allocation8 + $0x2c8] sm:$0xff]
        %v2867 = vld [vmem:[#allocation8 + $0x2d0] sm:$0xff]
        %v2868 = vld [vmem:[#allocation8 + $0x2d8] sm:$0xff]
        %v2869 = vld [vmem:[#allocation8 + $0x2e0] sm:$0xff]
        %v2870 = vld [vmem:[#allocation8 + $0x2e8] sm:$0xff]
        %v2871 = vld [vmem:[#allocation8 + $0x2f0] sm:$0xff]
        %v2872 = vld [vmem:[#allocation8 + $0x2f8] sm:$0xff]
        %v2873 = vld [vmem:[#allocation8 + $0x300] sm:$0xff]
        %v2874 = vld [vmem:[#allocation8 + $0x308] sm:$0xff]
        %v2875 = vld [vmem:[#allocation8 + $0x310] sm:$0xff]
        %v2876 = vld [vmem:[#allocation8 + $0x318] sm:$0xff]
        %v2877 = vld [vmem:[#allocation8 + $0x320] sm:$0xff]
        %v2878 = vld [vmem:[#allocation8 + $0x328] sm:$0xff]
        %v2879 = vld [vmem:[#allocation8 + $0x330] sm:$0xff]
        %v2880 = vld [vmem:[#allocation8 + $0x338] sm:$0xff]
        %v2881 = vld [vmem:[#allocation8 + $0x340] sm:$0xff]
        %v2882 = vld [vmem:[#allocation8 + $0x348] sm:$0xff]
        %v2883 = vld [vmem:[#allocation8 + $0x350] sm:$0xff]
        %v2884 = vld [vmem:[#allocation8 + $0x358] sm:$0xff]
        %v2885 = vld [vmem:[#allocation8 + $0x360] sm:$0xff]
        %v2886 = vld [vmem:[#allocation8 + $0x368] sm:$0xff]
        %v2887 = vld [vmem:[#allocation8 + $0x370] sm:$0xff]
        %v2888 = vld [vmem:[#allocation8 + $0x378] sm:$0xff]
        %v2889 = vld [vmem:[#allocation8 + $0x380] sm:$0xff]
        %v2890 = vld [vmem:[#allocation8 + $0x388] sm:$0xff]
        %v2891 = vld [vmem:[#allocation8 + $0x390] sm:$0xff]
        %v2892 = vld [vmem:[#allocation8 + $0x398] sm:$0xff]
        %v2893 = vld [vmem:[#allocation8 + $0x3a0] sm:$0xff]
        %v2894 = vld [vmem:[#allocation8 + $0x3a8] sm:$0xff]
        %v2895 = vld [vmem:[#allocation8 + $0x3b0] sm:$0xff]
        %v2896 = vld [vmem:[#allocation8 + $0x3b8] sm:$0xff]
        %v2897 = vld [vmem:[#allocation8 + $0x3c0] sm:$0xff]
        %v2898 = vld [vmem:[#allocation8 + $0x3c8] sm:$0xff]
        %v2899 = vld [vmem:[#allocation8 + $0x3d0] sm:$0xff]
        %v2900 = vld [vmem:[#allocation8 + $0x3d8] sm:$0xff]
        %v2901 = vld [vmem:[#allocation8 + $0x3e0] sm:$0xff]
        %v2902 = vld [vmem:[#allocation8 + $0x3e8] sm:$0xff]
        %v2903 = vld [vmem:[#allocation8 + $0x3f0] sm:$0xff]
        %v2904 = vld [vmem:[#allocation8 + $0x3f8] sm:$0xff]
        %v2905 = vld [vmem:[#allocation8 + $0x400] sm:$0xff]
        %v2906 = vld [vmem:[#allocation8 + $0x408] sm:$0xff]
        %v2907 = vld [vmem:[#allocation8 + $0x410] sm:$0xff]
        %v2908 = vld [vmem:[#allocation8 + $0x418] sm:$0xff]
        %v2909 = vld [vmem:[#allocation8 + $0x420] sm:$0xff]
        %v2910 = vld [vmem:[#allocation8 + $0x428] sm:$0xff]
        %v2911 = vld [vmem:[#allocation8 + $0x430] sm:$0xff]
        %v2912 = vld [vmem:[#allocation8 + $0x438] sm:$0xff]
        %v2913 = vld [vmem:[#allocation8 + $0x440] sm:$0xff]
        %v2914 = vld [vmem:[#allocation8 + $0x448] sm:$0xff]
        %v2915 = vld [vmem:[#allocation8 + $0x450] sm:$0xff]
        %v2916 = vld [vmem:[#allocation8 + $0x458] sm:$0xff]
        %v2917 = vld [vmem:[#allocation8 + $0x460] sm:$0xff]
        %v2918 = vld [vmem:[#allocation8 + $0x468] sm:$0xff]
        %v2919 = vld [vmem:[#allocation8 + $0x470] sm:$0xff]
        %v2920 = vld [vmem:[#allocation8 + $0x478] sm:$0xff]
        %v2921 = vld [vmem:[#allocation8 + $0x480] sm:$0xff]
        %v2922 = vld [vmem:[#allocation8 + $0x488] sm:$0xff]
        %v2923 = vld [vmem:[#allocation8 + $0x490] sm:$0xff]
        %v2924 = vld [vmem:[#allocation8 + $0x498] sm:$0xff]
        %v2925 = vld [vmem:[#allocation8 + $0x4a0] sm:$0xff]
        %v2926 = vld [vmem:[#allocation8 + $0x4a8] sm:$0xff]
        %v2927 = vld [vmem:[#allocation8 + $0x4b0] sm:$0xff]
        %v2928 = vld [vmem:[#allocation8 + $0x4b8] sm:$0xff]
        %v2929 = vld [vmem:[#allocation8 + $0x4c0] sm:$0xff]
        %v2930 = vld [vmem:[#allocation8 + $0x4c8] sm:$0xff]
        %v2931 = vld [vmem:[#allocation8 + $0x4d0] sm:$0xff]
        %v2932 = vld [vmem:[#allocation8 + $0x4d8] sm:$0xff]
        %v2933 = vld [vmem:[#allocation8 + $0x4e0] sm:$0xff]
        %v2934 = vld [vmem:[#allocation8 + $0x4e8] sm:$0xff]
        %v2935 = vld [vmem:[#allocation8 + $0x4f0] sm:$0xff]
        %v2936 = vld [vmem:[#allocation8 + $0x4f8] sm:$0xff]
        %v2937 = vld [vmem:[#allocation8 + $0x500] sm:$0xff]
        %v2938 = vld [vmem:[#allocation8 + $0x508] sm:$0xff]
        %v2939 = vld [vmem:[#allocation8 + $0x510] sm:$0xff]
        %v2940 = vld [vmem:[#allocation8 + $0x518] sm:$0xff]
        %v2941 = vld [vmem:[#allocation8 + $0x520] sm:$0xff]
        %v2942 = vld [vmem:[#allocation8 + $0x528] sm:$0xff]
        %v2943 = vld [vmem:[#allocation8 + $0x530] sm:$0xff]
        %v2944 = vld [vmem:[#allocation8 + $0x538] sm:$0xff]
        %v2945 = vld [vmem:[#allocation8 + $0x540] sm:$0xff]
        %v2946 = vld [vmem:[#allocation8 + $0x548] sm:$0xff]
        %v2947 = vld [vmem:[#allocation8 + $0x550] sm:$0xff]
        %v2948 = vld [vmem:[#allocation8 + $0x558] sm:$0xff]
        %v2949 = vld [vmem:[#allocation8 + $0x560] sm:$0xff]
        %v2950 = vld [vmem:[#allocation8 + $0x568] sm:$0xff]
        %v2951 = vld [vmem:[#allocation8 + $0x570] sm:$0xff]
        %v2952 = vld [vmem:[#allocation8 + $0x578] sm:$0xff]
        %v2953 = vld [vmem:[#allocation8 + $0x580] sm:$0xff]
        %v2954 = vld [vmem:[#allocation8 + $0x588] sm:$0xff]
        %v2955 = vld [vmem:[#allocation8 + $0x590] sm:$0xff]
        %v2956 = vld [vmem:[#allocation8 + $0x598] sm:$0xff]
        %v2957 = vld [vmem:[#allocation8 + $0x5a0] sm:$0xff]
        %v2958 = vld [vmem:[#allocation8 + $0x5a8] sm:$0xff]
        %v2959 = vld [vmem:[#allocation8 + $0x5b0] sm:$0xff]
        %v2960 = vld [vmem:[#allocation8 + $0x5b8] sm:$0xff]
        %v2961 = vld [vmem:[#allocation8 + $0x5c0] sm:$0xff]
        %v2962 = vld [vmem:[#allocation8 + $0x5c8] sm:$0xff]
        %v2963 = vld [vmem:[#allocation8 + $0x5d0] sm:$0xff]
        %v2964 = vld [vmem:[#allocation8 + $0x5d8] sm:$0xff]
        %v2965 = vld [vmem:[#allocation8 + $0x5e0] sm:$0xff]
        %v2966 = vld [vmem:[#allocation8 + $0x5e8] sm:$0xff]
        %v2967 = vld [vmem:[#allocation8 + $0x5f0] sm:$0xff]
        %v2968 = vld [vmem:[#allocation8 + $0x5f8] sm:$0xff]
        %v2969 = vld [vmem:[#allocation8 + $0x600] sm:$0xff]
        %v2970 = vld [vmem:[#allocation8 + $0x608] sm:$0xff]
        %v2971 = vld [vmem:[#allocation8 + $0x610] sm:$0xff]
        %v2972 = vld [vmem:[#allocation8 + $0x618] sm:$0xff]
        %v2973 = vld [vmem:[#allocation8 + $0x620] sm:$0xff]
        %v2974 = vld [vmem:[#allocation8 + $0x628] sm:$0xff]
        %v2975 = vld [vmem:[#allocation8 + $0x630] sm:$0xff]
        %v2976 = vld [vmem:[#allocation8 + $0x638] sm:$0xff]
        %v2977 = vld [vmem:[#allocation8 + $0x640] sm:$0xff]
        %v2978 = vld [vmem:[#allocation8 + $0x648] sm:$0xff]
        %v2979 = vld [vmem:[#allocation8 + $0x650] sm:$0xff]
        %v2980 = vld [vmem:[#allocation8 + $0x658] sm:$0xff]
        %v2981 = vld [vmem:[#allocation8 + $0x660] sm:$0xff]
        %v2982 = vld [vmem:[#allocation8 + $0x668] sm:$0xff]
        %v2983 = vld [vmem:[#allocation8 + $0x670] sm:$0xff]
        %v2984 = vld [vmem:[#allocation8 + $0x678] sm:$0xff]
        %v2985 = vld [vmem:[#allocation8 + $0x680] sm:$0xff]
        %v2986 = vld [vmem:[#allocation8 + $0x688] sm:$0xff]
        %v2987 = vld [vmem:[#allocation8 + $0x690] sm:$0xff]
        %v2988 = vld [vmem:[#allocation8 + $0x698] sm:$0xff]
        %v2989 = vld [vmem:[#allocation8 + $0x6a0] sm:$0xff]
        %v2990 = vld [vmem:[#allocation8 + $0x6a8] sm:$0xff]
        %v2991 = vld [vmem:[#allocation8 + $0x6b0] sm:$0xff]
        %v2992 = vld [vmem:[#allocation8 + $0x6b8] sm:$0xff]
        %v2993 = vld [vmem:[#allocation8 + $0x6c0] sm:$0xff]
        %v2994 = vld [vmem:[#allocation8 + $0x6c8] sm:$0xff]
        %v2995 = vld [vmem:[#allocation8 + $0x6d0] sm:$0xff]
        %v2996 = vld [vmem:[#allocation8 + $0x6d8] sm:$0xff]
        %v2997 = vld [vmem:[#allocation8 + $0x6e0] sm:$0xff]
        %v2998 = vld [vmem:[#allocation8 + $0x6e8] sm:$0xff]
        %v2999 = vld [vmem:[#allocation8 + $0x6f0] sm:$0xff]
        %v3000 = vld [vmem:[#allocation8 + $0x6f8] sm:$0xff]
        %v3001 = vld [vmem:[#allocation8 + $0x700] sm:$0xff]
        %v3002 = vld [vmem:[#allocation8 + $0x708] sm:$0xff]
        %v3003 = vld [vmem:[#allocation8 + $0x710] sm:$0xff]
        %v3004 = vld [vmem:[#allocation8 + $0x718] sm:$0xff]
        %v3005 = vld [vmem:[#allocation8 + $0x720] sm:$0xff]
        %v3006 = vld [vmem:[#allocation8 + $0x728] sm:$0xff]
        %v3007 = vld [vmem:[#allocation8 + $0x730] sm:$0xff]
        %v3008 = vld [vmem:[#allocation8 + $0x738] sm:$0xff]
        %v3009 = vld [vmem:[#allocation8 + $0x740] sm:$0xff]
        %v3010 = vld [vmem:[#allocation8 + $0x748] sm:$0xff]
        %v3011 = vld [vmem:[#allocation8 + $0x750] sm:$0xff]
        %v3012 = vld [vmem:[#allocation8 + $0x758] sm:$0xff]
        %v3013 = vld [vmem:[#allocation8 + $0x760] sm:$0xff]
        %v3014 = vld [vmem:[#allocation8 + $0x768] sm:$0xff]
        %v3015 = vld [vmem:[#allocation8 + $0x770] sm:$0xff]
        %v3016 = vld [vmem:[#allocation8 + $0x778] sm:$0xff]
        %v3017 = vld [vmem:[#allocation8 + $0x780] sm:$0xff]
        %v3018 = vld [vmem:[#allocation8 + $0x788] sm:$0xff]
        %v3019 = vld [vmem:[#allocation8 + $0x790] sm:$0xff]
        %v3020 = vld [vmem:[#allocation8 + $0x798] sm:$0xff]
        %v3021 = vld [vmem:[#allocation8 + $0x7a0] sm:$0xff]
        %v3022 = vld [vmem:[#allocation8 + $0x7a8] sm:$0xff]
        %v3023 = vld [vmem:[#allocation8 + $0x7b0] sm:$0xff]
        %v3024 = vld [vmem:[#allocation8 + $0x7b8] sm:$0xff]
        %v3025 = vld [vmem:[#allocation8 + $0x7c0] sm:$0xff]
        %v3026 = vld [vmem:[#allocation8 + $0x7c8] sm:$0xff]
        %v3027 = vld [vmem:[#allocation8 + $0x7d0] sm:$0xff]
        %v3028 = vld [vmem:[#allocation8 + $0x7d8] sm:$0xff]
        %v3029 = vld [vmem:[#allocation8 + $0x7e0] sm:$0xff]
        %v3030 = vld [vmem:[#allocation8 + $0x7e8] sm:$0xff]
        %v3031 = vld [vmem:[#allocation8 + $0x7f0] sm:$0xff]
        %v3032 = vld [vmem:[#allocation8 + $0x7f8] sm:$0xff]
        %v3033 = vld [vmem:[#allocation8 + $0x800] sm:$0xff]
        %v3034 = vld [vmem:[#allocation8 + $0x808] sm:$0xff]
        %v3035 = vld [vmem:[#allocation8 + $0x810] sm:$0xff]
        %v3036 = vld [vmem:[#allocation8 + $0x818] sm:$0xff]
        %v3037 = vld [vmem:[#allocation8 + $0x820] sm:$0xff]
        %v3038 = vld [vmem:[#allocation8 + $0x828] sm:$0xff]
        %v3039 = vld [vmem:[#allocation8 + $0x830] sm:$0xff]
        %v3040 = vld [vmem:[#allocation8 + $0x838] sm:$0xff]
        %v3041 = vld [vmem:[#allocation8 + $0x840] sm:$0xff]
        %v3042 = vld [vmem:[#allocation8 + $0x848] sm:$0xff]
        %v3043 = vld [vmem:[#allocation8 + $0x850] sm:$0xff]
        %v3044 = vld [vmem:[#allocation8 + $0x858] sm:$0xff]
        %v3045 = vld [vmem:[#allocation8 + $0x860] sm:$0xff]
        %v3046 = vld [vmem:[#allocation8 + $0x868] sm:$0xff]
        %v3047 = vld [vmem:[#allocation8 + $0x870] sm:$0xff]
        %v3048 = vld [vmem:[#allocation8 + $0x878] sm:$0xff]
        %v3049 = vld [vmem:[#allocation8 + $0x880] sm:$0xff]
        %v3050 = vld [vmem:[#allocation8 + $0x888] sm:$0xff]
        %v3051 = vld [vmem:[#allocation8 + $0x890] sm:$0xff]
        %v3052 = vld [vmem:[#allocation8 + $0x898] sm:$0xff]
        %v3053 = vld [vmem:[#allocation8 + $0x8a0] sm:$0xff]
        %v3054 = vld [vmem:[#allocation8 + $0x8a8] sm:$0xff]
        %v3055 = vld [vmem:[#allocation8 + $0x8b0] sm:$0xff]
        %v3056 = vld [vmem:[#allocation8 + $0x8b8] sm:$0xff]
        %v3057 = vld [vmem:[#allocation8 + $0x8c0] sm:$0xff]
        %v3058 = vld [vmem:[#allocation8 + $0x8c8] sm:$0xff]
        %v3059 = vld [vmem:[#allocation8 + $0x8d0] sm:$0xff]
        %v3060 = vld [vmem:[#allocation8 + $0x8d8] sm:$0xff]
        %v3061 = vld [vmem:[#allocation8 + $0x8e0] sm:$0xff]
        %v3062 = vld [vmem:[#allocation8 + $0x8e8] sm:$0xff]
        %v3063 = vld [vmem:[#allocation8 + $0x8f0] sm:$0xff]
        %v3064 = vld [vmem:[#allocation8 + $0x8f8] sm:$0xff]
        %v3065 = vld [vmem:[#allocation8 + $0x900] sm:$0xff]
        %v3066 = vld [vmem:[#allocation8 + $0x908] sm:$0xff]
        %v3067 = vld [vmem:[#allocation8 + $0x910] sm:$0xff]
        %v3068 = vld [vmem:[#allocation8 + $0x918] sm:$0xff]
        %v3069 = vld [vmem:[#allocation8 + $0x920] sm:$0xff]
        %v3070 = vld [vmem:[#allocation8 + $0x928] sm:$0xff]
        %v3071 = vld [vmem:[#allocation8 + $0x930] sm:$0xff]
        %v3072 = vld [vmem:[#allocation8 + $0x938] sm:$0xff]
        %v3073 = vld [vmem:[#allocation8 + $0x940] sm:$0xff]
        %v3074 = vld [vmem:[#allocation8 + $0x948] sm:$0xff]
        %v3075 = vld [vmem:[#allocation8 + $0x950] sm:$0xff]
        %v3076 = vld [vmem:[#allocation8 + $0x958] sm:$0xff]
        %v3077 = vld [vmem:[#allocation8 + $0x960] sm:$0xff]
        %v3078 = vld [vmem:[#allocation8 + $0x968] sm:$0xff]
        %v3079 = vld [vmem:[#allocation8 + $0x970] sm:$0xff]
        %v3080 = vld [vmem:[#allocation8 + $0x978] sm:$0xff]
        %v3081 = vld [vmem:[#allocation8 + $0x980] sm:$0xff]
        %v3082 = vld [vmem:[#allocation8 + $0x988] sm:$0xff]
        %v3083 = vld [vmem:[#allocation8 + $0x990] sm:$0xff]
        %v3084 = vld [vmem:[#allocation8 + $0x998] sm:$0xff]
        %v3085 = vld [vmem:[#allocation8 + $0x9a0] sm:$0xff]
        %v3086 = vld [vmem:[#allocation8 + $0x9a8] sm:$0xff]
        %v3087 = vld [vmem:[#allocation8 + $0x9b0] sm:$0xff]
        %v3088 = vld [vmem:[#allocation8 + $0x9b8] sm:$0xff]
        %v3089 = vld [vmem:[#allocation8 + $0x9c0] sm:$0xff]
        %v3090 = vld [vmem:[#allocation8 + $0x9c8] sm:$0xff]
        %v3091 = vld [vmem:[#allocation8 + $0x9d0] sm:$0xff]
        %v3092 = vld [vmem:[#allocation8 + $0x9d8] sm:$0xff]
        %v3093 = vld [vmem:[#allocation8 + $0x9e0] sm:$0xff]
        %v3094 = vld [vmem:[#allocation8 + $0x9e8] sm:$0xff]
        %v3095 = vld [vmem:[#allocation8 + $0x9f0] sm:$0xff]
        %v3096 = vld [vmem:[#allocation8 + $0x9f8] sm:$0xff]
        %v3097 = vld [vmem:[#allocation8 + $0xa00] sm:$0xff]
        %v3098 = vld [vmem:[#allocation8 + $0xa08] sm:$0xff]
        %v3099 = vld [vmem:[#allocation8 + $0xa10] sm:$0xff]
        %v3100 = vld [vmem:[#allocation8 + $0xa18] sm:$0xff]
        %v3101 = vld [vmem:[#allocation8 + $0xa20] sm:$0xff]
        %v3102 = vld [vmem:[#allocation8 + $0xa28] sm:$0xff]
        %v3103 = vld [vmem:[#allocation8 + $0xa30] sm:$0xff]
        %v3104 = vld [vmem:[#allocation8 + $0xa38] sm:$0xff]
        %v3105 = vld [vmem:[#allocation8 + $0xa40] sm:$0xff]
        %v3106 = vld [vmem:[#allocation8 + $0xa48] sm:$0xff]
        %v3107 = vld [vmem:[#allocation8 + $0xa50] sm:$0xff]
        %v3108 = vld [vmem:[#allocation8 + $0xa58] sm:$0xff]
        %v3109 = vld [vmem:[#allocation8 + $0xa60] sm:$0xff]
        %v3110 = vld [vmem:[#allocation8 + $0xa68] sm:$0xff]
        %v3111 = vld [vmem:[#allocation8 + $0xa70] sm:$0xff]
        %v3112 = vld [vmem:[#allocation8 + $0xa78] sm:$0xff]
        %v3113 = vld [vmem:[#allocation8 + $0xa80] sm:$0xff]
        %v3114 = vld [vmem:[#allocation8 + $0xa88] sm:$0xff]
        %v3115 = vld [vmem:[#allocation8 + $0xa90] sm:$0xff]
        %v3116 = vld [vmem:[#allocation8 + $0xa98] sm:$0xff]
        %v3117 = vld [vmem:[#allocation8 + $0xaa0] sm:$0xff]
        %v3118 = vld [vmem:[#allocation8 + $0xaa8] sm:$0xff]
        %v3119 = vld [vmem:[#allocation8 + $0xab0] sm:$0xff]
        %v3120 = vld [vmem:[#allocation8 + $0xab8] sm:$0xff]
        %v3121 = vld [vmem:[#allocation8 + $0xac0] sm:$0xff]
        %v3122 = vld [vmem:[#allocation8 + $0xac8] sm:$0xff]
        %v3123 = vld [vmem:[#allocation8 + $0xad0] sm:$0xff]
        %v3124 = vld [vmem:[#allocation8 + $0xad8] sm:$0xff]
        %v3125 = vld [vmem:[#allocation8 + $0xae0] sm:$0xff]
        %v3126 = vld [vmem:[#allocation8 + $0xae8] sm:$0xff]
        %v3127 = vld [vmem:[#allocation8 + $0xaf0] sm:$0xff]
        %v3128 = vld [vmem:[#allocation8 + $0xaf8] sm:$0xff]
        %v3129 = vld [vmem:[#allocation8 + $0xb00] sm:$0xff]
        %v3130 = vld [vmem:[#allocation8 + $0xb08] sm:$0xff]
        %v3131 = vld [vmem:[#allocation8 + $0xb10] sm:$0xff]
        %v3132 = vld [vmem:[#allocation8 + $0xb18] sm:$0xff]
        %v3133 = vld [vmem:[#allocation8 + $0xb20] sm:$0xff]
        %v3134 = vld [vmem:[#allocation8 + $0xb28] sm:$0xff]
        %v3135 = vld [vmem:[#allocation8 + $0xb30] sm:$0xff]
        %v3136 = vld [vmem:[#allocation8 + $0xb38] sm:$0xff]
        %v3137 = vld [vmem:[#allocation8 + $0xb40] sm:$0xff]
        %v3138 = vld [vmem:[#allocation8 + $0xb48] sm:$0xff]
        %v3139 = vld [vmem:[#allocation8 + $0xb50] sm:$0xff]
        %v3140 = vld [vmem:[#allocation8 + $0xb58] sm:$0xff]
        %v3141 = vld [vmem:[#allocation8 + $0xb60] sm:$0xff]
        %v3142 = vld [vmem:[#allocation8 + $0xb68] sm:$0xff]
        %v3143 = vld [vmem:[#allocation8 + $0xb70] sm:$0xff]
        %v3144 = vld [vmem:[#allocation8 + $0xb78] sm:$0xff]
        %v3145 = vld [vmem:[#allocation8 + $0xb80] sm:$0xff]
        %v3146 = vld [vmem:[#allocation8 + $0xb88] sm:$0xff]
        %v3147 = vld [vmem:[#allocation8 + $0xb90] sm:$0xff]
        %v3148 = vld [vmem:[#allocation8 + $0xb98] sm:$0xff]
        %v3149 = vld [vmem:[#allocation8 + $0xba0] sm:$0xff]
        %v3150 = vld [vmem:[#allocation8 + $0xba8] sm:$0xff]
        %v3151 = vld [vmem:[#allocation8 + $0xbb0] sm:$0xff]
        %v3152 = vld [vmem:[#allocation8 + $0xbb8] sm:$0xff]
        %v3153 = vld [vmem:[#allocation8 + $0xbc0] sm:$0xff]
        %v3154 = vld [vmem:[#allocation8 + $0xbc8] sm:$0xff]
        %v3155 = vld [vmem:[#allocation8 + $0xbd0] sm:$0xff]
        %v3156 = vld [vmem:[#allocation8 + $0xbd8] sm:$0xff]
        %v3157 = vld [vmem:[#allocation8 + $0xbe0] sm:$0xff]
        %v3158 = vld [vmem:[#allocation8 + $0xbe8] sm:$0xff]
        %v3159 = vld [vmem:[#allocation8 + $0xbf0] sm:$0xff]
        %v3160 = vld [vmem:[#allocation8 + $0xbf8] sm:$0xff]
        %v3161 = vld [vmem:[#allocation8 + $0xc00] sm:$0xff]
        %v3162 = vld [vmem:[#allocation8 + $0xc08] sm:$0xff]
        %v3163 = vld [vmem:[#allocation8 + $0xc10] sm:$0xff]
        %v3164 = vld [vmem:[#allocation8 + $0xc18] sm:$0xff]
        %v3165 = vld [vmem:[#allocation8 + $0xc20] sm:$0xff]
        %v3166 = vld [vmem:[#allocation8 + $0xc28] sm:$0xff]
        %v3167 = vld [vmem:[#allocation8 + $0xc30] sm:$0xff]
        %v3168 = vld [vmem:[#allocation8 + $0xc38] sm:$0xff]
        %v3169 = vld [vmem:[#allocation8 + $0xc40] sm:$0xff]
        %v3170 = vld [vmem:[#allocation8 + $0xc48] sm:$0xff]
        %v3171 = vld [vmem:[#allocation8 + $0xc50] sm:$0xff]
        %v3172 = vld [vmem:[#allocation8 + $0xc58] sm:$0xff]
        %v3173 = vld [vmem:[#allocation8 + $0xc60] sm:$0xff]
        %v3174 = vld [vmem:[#allocation8 + $0xc68] sm:$0xff]
        %v3175 = vld [vmem:[#allocation8 + $0xc70] sm:$0xff]
        %v3176 = vld [vmem:[#allocation8 + $0xc78] sm:$0xff]
        %v3177 = vld [vmem:[#allocation8 + $0xc80] sm:$0xff]
        %v3178 = vld [vmem:[#allocation8 + $0xc88] sm:$0xff]
        %v3179 = vld [vmem:[#allocation8 + $0xc90] sm:$0xff]
        %v3180 = vld [vmem:[#allocation8 + $0xc98] sm:$0xff]
        %v3181 = vld [vmem:[#allocation8 + $0xca0] sm:$0xff]
        %v3182 = vld [vmem:[#allocation8 + $0xca8] sm:$0xff]
        %v3183 = vld [vmem:[#allocation8 + $0xcb0] sm:$0xff]
        %v3184 = vld [vmem:[#allocation8 + $0xcb8] sm:$0xff]
        %v3185 = vld [vmem:[#allocation8 + $0xcc0] sm:$0xff]
        %v3186 = vld [vmem:[#allocation8 + $0xcc8] sm:$0xff]
        %v3187 = vld [vmem:[#allocation8 + $0xcd0] sm:$0xff]
        %v3188 = vld [vmem:[#allocation8 + $0xcd8] sm:$0xff]
        %v3189 = vld [vmem:[#allocation8 + $0xce0] sm:$0xff]
        %v3190 = vld [vmem:[#allocation8 + $0xce8] sm:$0xff]
        %v3191 = vld [vmem:[#allocation8 + $0xcf0] sm:$0xff]
        %v3192 = vld [vmem:[#allocation8 + $0xcf8] sm:$0xff]
        %v3193 = vld [vmem:[#allocation8 + $0xd00] sm:$0xff]
        %v3194 = vld [vmem:[#allocation8 + $0xd08] sm:$0xff]
        %v3195 = vld [vmem:[#allocation8 + $0xd10] sm:$0xff]
        %v3196 = vld [vmem:[#allocation8 + $0xd18] sm:$0xff]
        %v3197 = vld [vmem:[#allocation8 + $0xd20] sm:$0xff]
        %v3198 = vld [vmem:[#allocation8 + $0xd28] sm:$0xff]
        %v3199 = vld [vmem:[#allocation8 + $0xd30] sm:$0xff]
        %v3200 = vld [vmem:[#allocation8 + $0xd38] sm:$0xff]
        %v3201 = vld [vmem:[#allocation8 + $0xd40] sm:$0xff]
        %v3202 = vld [vmem:[#allocation8 + $0xd48] sm:$0xff]
        %v3203 = vld [vmem:[#allocation8 + $0xd50] sm:$0xff]
        %v3204 = vld [vmem:[#allocation8 + $0xd58] sm:$0xff]
        %v3205 = vld [vmem:[#allocation8 + $0xd60] sm:$0xff]
        %v3206 = vld [vmem:[#allocation8 + $0xd68] sm:$0xff]
        %v3207 = vld [vmem:[#allocation8 + $0xd70] sm:$0xff]
        %v3208 = vld [vmem:[#allocation8 + $0xd78] sm:$0xff]
        %v3209 = vld [vmem:[#allocation8 + $0xd80] sm:$0xff]
        %v3210 = vld [vmem:[#allocation8 + $0xd88] sm:$0xff]
        %v3211 = vld [vmem:[#allocation8 + $0xd90] sm:$0xff]
        %v3212 = vld [vmem:[#allocation8 + $0xd98] sm:$0xff]
        %v3213 = vld [vmem:[#allocation8 + $0xda0] sm:$0xff]
        %v3214 = vld [vmem:[#allocation8 + $0xda8] sm:$0xff]
        %v3215 = vld [vmem:[#allocation8 + $0xdb0] sm:$0xff]
        %v3216 = vld [vmem:[#allocation8 + $0xdb8] sm:$0xff]
        %v3217 = vld [vmem:[#allocation8 + $0xdc0] sm:$0xff]
        %v3218 = vld [vmem:[#allocation8 + $0xdc8] sm:$0xff]
        %v3219 = vld [vmem:[#allocation8 + $0xdd0] sm:$0xff]
        %v3220 = vld [vmem:[#allocation8 + $0xdd8] sm:$0xff]
        %v3221 = vld [vmem:[#allocation8 + $0xde0] sm:$0xff]
        %v3222 = vld [vmem:[#allocation8 + $0xde8] sm:$0xff]
        %v3223 = vld [vmem:[#allocation8 + $0xdf0] sm:$0xff]
        %v3224 = vld [vmem:[#allocation8 + $0xdf8] sm:$0xff]
        %v3225 = vld [vmem:[#allocation8 + $0xe00] sm:$0xff]
        %v3226 = vld [vmem:[#allocation8 + $0xe08] sm:$0xff]
        %v3227 = vld [vmem:[#allocation8 + $0xe10] sm:$0xff]
        %v3228 = vld [vmem:[#allocation8 + $0xe18] sm:$0xff]
        %v3229 = vld [vmem:[#allocation8 + $0xe20] sm:$0xff]
        %v3230 = vld [vmem:[#allocation8 + $0xe28] sm:$0xff]
        %v3231 = vld [vmem:[#allocation8 + $0xe30] sm:$0xff]
        %v3232 = vld [vmem:[#allocation8 + $0xe38] sm:$0xff]
        %v3233 = vld [vmem:[#allocation8 + $0xe40] sm:$0xff]
        %v3234 = vld [vmem:[#allocation8 + $0xe48] sm:$0xff]
        %v3235 = vld [vmem:[#allocation8 + $0xe50] sm:$0xff]
        %v3236 = vld [vmem:[#allocation8 + $0xe58] sm:$0xff]
        %v3237 = vld [vmem:[#allocation8 + $0xe60] sm:$0xff]
        %v3238 = vld [vmem:[#allocation8 + $0xe68] sm:$0xff]
        %v3239 = vld [vmem:[#allocation8 + $0xe70] sm:$0xff]
        %v3240 = vld [vmem:[#allocation8 + $0xe78] sm:$0xff]
        %v3241 = vld [vmem:[#allocation8 + $0xe80] sm:$0xff]
        %v3242 = vld [vmem:[#allocation8 + $0xe88] sm:$0xff]
        %v3243 = vld [vmem:[#allocation8 + $0xe90] sm:$0xff]
        %v3244 = vld [vmem:[#allocation8 + $0xe98] sm:$0xff]
        %v3245 = vld [vmem:[#allocation8 + $0xea0] sm:$0xff]
        %v3246 = vld [vmem:[#allocation8 + $0xea8] sm:$0xff]
        %v3247 = vld [vmem:[#allocation8 + $0xeb0] sm:$0xff]
        %v3248 = vld [vmem:[#allocation8 + $0xeb8] sm:$0xff]
        %v3249 = vld [vmem:[#allocation8 + $0xec0] sm:$0xff]
        %v3250 = vld [vmem:[#allocation8 + $0xec8] sm:$0xff]
        %v3251 = vld [vmem:[#allocation8 + $0xed0] sm:$0xff]
        %v3252 = vld [vmem:[#allocation8 + $0xed8] sm:$0xff]
        %v3253 = vld [vmem:[#allocation8 + $0xee0] sm:$0xff]
        %v3254 = vld [vmem:[#allocation8 + $0xee8] sm:$0xff]
        %v3255 = vld [vmem:[#allocation8 + $0xef0] sm:$0xff]
        %v3256 = vld [vmem:[#allocation8 + $0xef8] sm:$0xff]
        %v3257 = vld [vmem:[#allocation8 + $0xf00] sm:$0xff]
        %v3258 = vld [vmem:[#allocation8 + $0xf08] sm:$0xff]
        %v3259 = vld [vmem:[#allocation8 + $0xf10] sm:$0xff]
        %v3260 = vld [vmem:[#allocation8 + $0xf18] sm:$0xff]
        %v3261 = vld [vmem:[#allocation8 + $0xf20] sm:$0xff]
        %v3262 = vld [vmem:[#allocation8 + $0xf28] sm:$0xff]
        %v3263 = vld [vmem:[#allocation8 + $0xf30] sm:$0xff]
        %v3264 = vld [vmem:[#allocation8 + $0xf38] sm:$0xff]
        %v3265 = vld [vmem:[#allocation8 + $0xf40] sm:$0xff]
        %v3266 = vld [vmem:[#allocation8 + $0xf48] sm:$0xff]
        %v3267 = vld [vmem:[#allocation8 + $0xf50] sm:$0xff]
        %v3268 = vld [vmem:[#allocation8 + $0xf58] sm:$0xff]
        %v3269 = vld [vmem:[#allocation8 + $0xf60] sm:$0xff]
        %v3270 = vld [vmem:[#allocation8 + $0xf68] sm:$0xff]
        %v3271 = vld [vmem:[#allocation8 + $0xf70] sm:$0xff]
        %v3272 = vld [vmem:[#allocation8 + $0xf78] sm:$0xff]
        %v3273 = vld [vmem:[#allocation8 + $0xf80] sm:$0xff]
        %v3274 = vld [vmem:[#allocation8 + $0xf88] sm:$0xff]
        %v3275 = vld [vmem:[#allocation8 + $0xf90] sm:$0xff]
        %v3276 = vld [vmem:[#allocation8 + $0xf98] sm:$0xff]
        %v3277 = vld [vmem:[#allocation8 + $0xfa0] sm:$0xff]
        %v3278 = vld [vmem:[#allocation8 + $0xfa8] sm:$0xff]
        %v3279 = vld [vmem:[#allocation8 + $0xfb0] sm:$0xff]
        %v3280 = vld [vmem:[#allocation8 + $0xfb8] sm:$0xff]
        %v3281 = vld [vmem:[#allocation8 + $0xfc0] sm:$0xff]
        %v3282 = vld [vmem:[#allocation8 + $0xfc8] sm:$0xff]
        %v3283 = vld [vmem:[#allocation8 + $0xfd0] sm:$0xff]
        %v3284 = vld [vmem:[#allocation8 + $0xfd8] sm:$0xff]
        %v3285 = vld [vmem:[#allocation8 + $0xfe0] sm:$0xff]
        %v3286 = vld [vmem:[#allocation8 + $0xfe8] sm:$0xff]
        %v3287 = vld [vmem:[#allocation8 + $0xff0] sm:$0xff]
        %v3288 = vld [vmem:[#allocation8 + $0xff8] sm:$0xff]
        %v3289 = vld [vmem:[#allocation8 + $0x1000] sm:$0xff]
        %v3290 = vld [vmem:[#allocation8 + $0x1008] sm:$0xff]
        %v3291 = vld [vmem:[#allocation8 + $0x1010] sm:$0xff]
        %v3292 = vld [vmem:[#allocation8 + $0x1018] sm:$0xff]
        %v3293 = vld [vmem:[#allocation8 + $0x1020] sm:$0xff]
        %v3294 = vld [vmem:[#allocation8 + $0x1028] sm:$0xff]
        %v3295 = vld [vmem:[#allocation8 + $0x1030] sm:$0xff]
        %v3296 = vld [vmem:[#allocation8 + $0x1038] sm:$0xff]
        %v3297 = vld [vmem:[#allocation8 + $0x1040] sm:$0xff]
        %v3298 = vld [vmem:[#allocation8 + $0x1048] sm:$0xff]
        %v3299 = vld [vmem:[#allocation8 + $0x1050] sm:$0xff]
        %v3300 = vld [vmem:[#allocation8 + $0x1058] sm:$0xff]
        %v3301 = vld [vmem:[#allocation8 + $0x1060] sm:$0xff]
        %v3302 = vld [vmem:[#allocation8 + $0x1068] sm:$0xff]
        %v3303 = vld [vmem:[#allocation8 + $0x1070] sm:$0xff]
        %v3304 = vld [vmem:[#allocation8 + $0x1078] sm:$0xff]
        %v3305 = vld [vmem:[#allocation8 + $0x1080] sm:$0xff]
        %v3306 = vld [vmem:[#allocation8 + $0x1088] sm:$0xff]
        %v3307 = vld [vmem:[#allocation8 + $0x1090] sm:$0xff]
        %v3308 = vld [vmem:[#allocation8 + $0x1098] sm:$0xff]
        %v3309 = vld [vmem:[#allocation8 + $0x10a0] sm:$0xff]
        %v3310 = vld [vmem:[#allocation8 + $0x10a8] sm:$0xff]
        %v3311 = vld [vmem:[#allocation8 + $0x10b0] sm:$0xff]
        %v3312 = vld [vmem:[#allocation8 + $0x10b8] sm:$0xff]
        %v3313 = vld [vmem:[#allocation8 + $0x10c0] sm:$0xff]
        %v3314 = vld [vmem:[#allocation8 + $0x10c8] sm:$0xff]
        %v3315 = vld [vmem:[#allocation8 + $0x10d0] sm:$0xff]
        %v3316 = vld [vmem:[#allocation8 + $0x10d8] sm:$0xff]
        %v3317 = vld [vmem:[#allocation8 + $0x10e0] sm:$0xff]
        %v3318 = vld [vmem:[#allocation8 + $0x10e8] sm:$0xff]
        %v3319 = vld [vmem:[#allocation8 + $0x10f0] sm:$0xff]
        %v3320 = vld [vmem:[#allocation8 + $0x10f8] sm:$0xff]
        %v3321 = vld [vmem:[#allocation8 + $0x1100] sm:$0xff]
        %v3322 = vld [vmem:[#allocation8 + $0x1108] sm:$0xff]
        %v3323 = vld [vmem:[#allocation8 + $0x1110] sm:$0xff]
        %v3324 = vld [vmem:[#allocation8 + $0x1118] sm:$0xff]
        %v3325 = vld [vmem:[#allocation8 + $0x1120] sm:$0xff]
        %v3326 = vld [vmem:[#allocation8 + $0x1128] sm:$0xff]
        %v3327 = vld [vmem:[#allocation8 + $0x1130] sm:$0xff]
        %v3328 = vld [vmem:[#allocation8 + $0x1138] sm:$0xff]
        %v3329 = vld [vmem:[#allocation8 + $0x1140] sm:$0xff]
        %v3330 = vld [vmem:[#allocation8 + $0x1148] sm:$0xff]
        %v3331 = vld [vmem:[#allocation8 + $0x1150] sm:$0xff]
        %v3332 = vld [vmem:[#allocation8 + $0x1158] sm:$0xff]
        %v3333 = vld [vmem:[#allocation8 + $0x1160] sm:$0xff]
        %v3334 = vld [vmem:[#allocation8 + $0x1168] sm:$0xff]
        %v3335 = vld [vmem:[#allocation8 + $0x1170] sm:$0xff]
        %v3336 = vld [vmem:[#allocation8 + $0x1178] sm:$0xff]
        %v3337 = vld [vmem:[#allocation8 + $0x1180] sm:$0xff]
        %v3338 = vld [vmem:[#allocation8 + $0x1188] sm:$0xff]
        %v3339 = vld [vmem:[#allocation8 + $0x1190] sm:$0xff]
        %v3340 = vld [vmem:[#allocation8 + $0x1198] sm:$0xff]
        %v3341 = vld [vmem:[#allocation8 + $0x11a0] sm:$0xff]
        %v3342 = vld [vmem:[#allocation8 + $0x11a8] sm:$0xff]
        %v3343 = vld [vmem:[#allocation8 + $0x11b0] sm:$0xff]
        %v3344 = vld [vmem:[#allocation8 + $0x11b8] sm:$0xff]
        %v3345 = vld [vmem:[#allocation8 + $0x11c0] sm:$0xff]
        %v3346 = vld [vmem:[#allocation8 + $0x11c8] sm:$0xff]
        %v3347 = vld [vmem:[#allocation8 + $0x11d0] sm:$0xff]
        %v3348 = vld [vmem:[#allocation8 + $0x11d8] sm:$0xff]
        %v3349 = vld [vmem:[#allocation8 + $0x11e0] sm:$0xff]
        %v3350 = vld [vmem:[#allocation8 + $0x11e8] sm:$0xff]
        %v3351 = vld [vmem:[#allocation8 + $0x11f0] sm:$0xff]
        %v3352 = vld [vmem:[#allocation8 + $0x11f8] sm:$0xff]
        %v3353 = vld [vmem:[#allocation8 + $0x1200] sm:$0xff]
        %v3354 = vld [vmem:[#allocation8 + $0x1208] sm:$0xff]
        %v3355 = vld [vmem:[#allocation8 + $0x1210] sm:$0xff]
        %v3356 = vld [vmem:[#allocation8 + $0x1218] sm:$0xff]
        %v3357 = vld [vmem:[#allocation8 + $0x1220] sm:$0xff]
        %v3358 = vld [vmem:[#allocation8 + $0x1228] sm:$0xff]
        %v3359 = vld [vmem:[#allocation8 + $0x1230] sm:$0xff]
        %v3360 = vld [vmem:[#allocation8 + $0x1238] sm:$0xff]
        %v3361 = vld [vmem:[#allocation8 + $0x1240] sm:$0xff]
        %v3362 = vld [vmem:[#allocation8 + $0x1248] sm:$0xff]
        %v3363 = vld [vmem:[#allocation8 + $0x1250] sm:$0xff]
        %v3364 = vld [vmem:[#allocation8 + $0x1258] sm:$0xff]
        %v3365 = vld [vmem:[#allocation8 + $0x1260] sm:$0xff]
        %v3366 = vld [vmem:[#allocation8 + $0x1268] sm:$0xff]
        %v3367 = vld [vmem:[#allocation8 + $0x1270] sm:$0xff]
        %v3368 = vld [vmem:[#allocation8 + $0x1278] sm:$0xff]
        %v3369 = vld [vmem:[#allocation8 + $0x1280] sm:$0xff]
        %v3370 = vld [vmem:[#allocation8 + $0x1288] sm:$0xff]
        %v3371 = vld [vmem:[#allocation8 + $0x1290] sm:$0xff]
        %v3372 = vld [vmem:[#allocation8 + $0x1298] sm:$0xff]
        %v3373 = vld [vmem:[#allocation8 + $0x12a0] sm:$0xff]
        %v3374 = vld [vmem:[#allocation8 + $0x12a8] sm:$0xff]
        %v3375 = vld [vmem:[#allocation8 + $0x12b0] sm:$0xff]
        %v3376 = vld [vmem:[#allocation8 + $0x12b8] sm:$0xff]
        %v3377 = vld [vmem:[#allocation8 + $0x12c0] sm:$0xff]
        %v3378 = vld [vmem:[#allocation8 + $0x12c8] sm:$0xff]
        %v3379 = vld [vmem:[#allocation8 + $0x12d0] sm:$0xff]
        %v3380 = vld [vmem:[#allocation8 + $0x12d8] sm:$0xff]
        %v3381 = vld [vmem:[#allocation8 + $0x12e0] sm:$0xff]
        %v3382 = vld [vmem:[#allocation8 + $0x12e8] sm:$0xff]
        %v3383 = vld [vmem:[#allocation8 + $0x12f0] sm:$0xff]
        %v3384 = vld [vmem:[#allocation8 + $0x12f8] sm:$0xff]
        %v3385 = vld [vmem:[#allocation8 + $0x1300] sm:$0xff]
        %v3386 = vld [vmem:[#allocation8 + $0x1308] sm:$0xff]
        %v3387 = vld [vmem:[#allocation8 + $0x1310] sm:$0xff]
        %v3388 = vld [vmem:[#allocation8 + $0x1318] sm:$0xff]
        %v3389 = vld [vmem:[#allocation8 + $0x1320] sm:$0xff]
        %v3390 = vld [vmem:[#allocation8 + $0x1328] sm:$0xff]
        %v3391 = vld [vmem:[#allocation8 + $0x1330] sm:$0xff]
        %v3392 = vld [vmem:[#allocation8 + $0x1338] sm:$0xff]
        %v3393 = vld [vmem:[#allocation8 + $0x1340] sm:$0xff]
        %v3394 = vld [vmem:[#allocation8 + $0x1348] sm:$0xff]
        %v3395 = vld [vmem:[#allocation8 + $0x1350] sm:$0xff]
        %v3396 = vld [vmem:[#allocation8 + $0x1358] sm:$0xff]
        %v3397 = vld [vmem:[#allocation8 + $0x1360] sm:$0xff]
        %v3398 = vld [vmem:[#allocation8 + $0x1368] sm:$0xff]
        %v3399 = vld [vmem:[#allocation8 + $0x1370] sm:$0xff]
        %v3400 = vld [vmem:[#allocation8 + $0x1378] sm:$0xff]
        %v3401 = vld [vmem:[#allocation8 + $0x1380] sm:$0xff]
        %v3402 = vld [vmem:[#allocation8 + $0x1388] sm:$0xff]
        %v3403 = vld [vmem:[#allocation8 + $0x1390] sm:$0xff]
        %v3404 = vld [vmem:[#allocation8 + $0x1398] sm:$0xff]
        %v3405 = vld [vmem:[#allocation8 + $0x13a0] sm:$0xff]
        %v3406 = vld [vmem:[#allocation8 + $0x13a8] sm:$0xff]
        %v3407 = vld [vmem:[#allocation8 + $0x13b0] sm:$0xff]
        %v3408 = vld [vmem:[#allocation8 + $0x13b8] sm:$0xff]
        %v3409 = vld [vmem:[#allocation8 + $0x13c0] sm:$0xff]
        %v3410 = vld [vmem:[#allocation8 + $0x13c8] sm:$0xff]
        %v3411 = vld [vmem:[#allocation8 + $0x13d0] sm:$0xff]
        %v3412 = vld [vmem:[#allocation8 + $0x13d8] sm:$0xff]
        %v3413 = vld [vmem:[#allocation8 + $0x13e0] sm:$0xff]
        %v3414 = vld [vmem:[#allocation8 + $0x13e8] sm:$0xff]
        %v3415 = vld [vmem:[#allocation8 + $0x13f0] sm:$0xff]
        %v3416 = vld [vmem:[#allocation8 + $0x13f8] sm:$0xff]
        %v3417 = vld [vmem:[#allocation8 + $0x1400] sm:$0xff]
        %v3418 = vld [vmem:[#allocation8 + $0x1408] sm:$0xff]
        %v3419 = vld [vmem:[#allocation8 + $0x1410] sm:$0xff]
        %v3420 = vld [vmem:[#allocation8 + $0x1418] sm:$0xff]
        %v3421 = vld [vmem:[#allocation8 + $0x1420] sm:$0xff]
        %v3422 = vld [vmem:[#allocation8 + $0x1428] sm:$0xff]
        %v3423 = vld [vmem:[#allocation8 + $0x1430] sm:$0xff]
        %v3424 = vld [vmem:[#allocation8 + $0x1438] sm:$0xff]
        %v3425 = vld [vmem:[#allocation8 + $0x1440] sm:$0xff]
        %v3426 = vld [vmem:[#allocation8 + $0x1448] sm:$0xff]
        %v3427 = vld [vmem:[#allocation8 + $0x1450] sm:$0xff]
        %v3428 = vld [vmem:[#allocation8 + $0x1458] sm:$0xff]
        %v3429 = vld [vmem:[#allocation8 + $0x1460] sm:$0xff]
        %v3430 = vld [vmem:[#allocation8 + $0x1468] sm:$0xff]
        %v3431 = vld [vmem:[#allocation8 + $0x1470] sm:$0xff]
        %v3432 = vld [vmem:[#allocation8 + $0x1478] sm:$0xff]
        %v3433 = vld [vmem:[#allocation8 + $0x1480] sm:$0xff]
        %v3434 = vld [vmem:[#allocation8 + $0x1488] sm:$0xff]
        %v3435 = vld [vmem:[#allocation8 + $0x1490] sm:$0xff]
        %v3436 = vld [vmem:[#allocation8 + $0x1498] sm:$0xff]
        %v3437 = vld [vmem:[#allocation8 + $0x14a0] sm:$0xff]
        %v3438 = vld [vmem:[#allocation8 + $0x14a8] sm:$0xff]
        %v3439 = vld [vmem:[#allocation8 + $0x14b0] sm:$0xff]
        %v3440 = vld [vmem:[#allocation8 + $0x14b8] sm:$0xff]
        %v3441 = vld [vmem:[#allocation8 + $0x14c0] sm:$0xff]
        %v3442 = vld [vmem:[#allocation8 + $0x14c8] sm:$0xff]
        %v3443 = vld [vmem:[#allocation8 + $0x14d0] sm:$0xff]
        %v3444 = vld [vmem:[#allocation8 + $0x14d8] sm:$0xff]
        %v3445 = vld [vmem:[#allocation8 + $0x14e0] sm:$0xff]
        %v3446 = vld [vmem:[#allocation8 + $0x14e8] sm:$0xff]
        %v3447 = vld [vmem:[#allocation8 + $0x14f0] sm:$0xff]
        %v3448 = vld [vmem:[#allocation8 + $0x14f8] sm:$0xff]
        %v3449 = vld [vmem:[#allocation8 + $0x1500] sm:$0xff]
        %v3450 = vld [vmem:[#allocation8 + $0x1508] sm:$0xff]
        %v3451 = vld [vmem:[#allocation8 + $0x1510] sm:$0xff]
        %v3452 = vld [vmem:[#allocation8 + $0x1518] sm:$0xff]
        %v3453 = vld [vmem:[#allocation8 + $0x1520] sm:$0xff]
        %v3454 = vld [vmem:[#allocation8 + $0x1528] sm:$0xff]
        %v3455 = vld [vmem:[#allocation8 + $0x1530] sm:$0xff]
        %v3456 = vld [vmem:[#allocation8 + $0x1538] sm:$0xff]
        %v3457 = vld [vmem:[#allocation8 + $0x1540] sm:$0xff]
        %v3458 = vld [vmem:[#allocation8 + $0x1548] sm:$0xff]
        %v3459 = vld [vmem:[#allocation8 + $0x1550] sm:$0xff]
        %v3460 = vld [vmem:[#allocation8 + $0x1558] sm:$0xff]
        %v3461 = vld [vmem:[#allocation8 + $0x1560] sm:$0xff]
        %v3462 = vld [vmem:[#allocation8 + $0x1568] sm:$0xff]
        %v3463 = vld [vmem:[#allocation8 + $0x1570] sm:$0xff]
        %v3464 = vld [vmem:[#allocation8 + $0x1578] sm:$0xff]
        %v3465 = vld [vmem:[#allocation8 + $0x1580] sm:$0xff]
        %v3466 = vld [vmem:[#allocation8 + $0x1588] sm:$0xff]
        %v3467 = vld [vmem:[#allocation8 + $0x1590] sm:$0xff]
        %v3468 = vld [vmem:[#allocation8 + $0x1598] sm:$0xff]
        %v3469 = vld [vmem:[#allocation8 + $0x15a0] sm:$0xff]
        %v3470 = vld [vmem:[#allocation8 + $0x15a8] sm:$0xff]
        %v3471 = vld [vmem:[#allocation8 + $0x15b0] sm:$0xff]
        %v3472 = vld [vmem:[#allocation8 + $0x15b8] sm:$0xff]
        %v3473 = vld [vmem:[#allocation8 + $0x15c0] sm:$0xff]
        %v3474 = vld [vmem:[#allocation8 + $0x15c8] sm:$0xff]
        %v3475 = vld [vmem:[#allocation8 + $0x15d0] sm:$0xff]
        %v3476 = vld [vmem:[#allocation8 + $0x15d8] sm:$0xff]
        %v3477 = vld [vmem:[#allocation8 + $0x15e0] sm:$0xff]
        %v3478 = vld [vmem:[#allocation8 + $0x15e8] sm:$0xff]
        %v3479 = vld [vmem:[#allocation8 + $0x15f0] sm:$0xff]
        %v3480 = vld [vmem:[#allocation8 + $0x15f8] sm:$0xff]
        %v3481 = vld [vmem:[#allocation8 + $0x1600] sm:$0xff]
        %v3482 = vld [vmem:[#allocation8 + $0x1608] sm:$0xff]
        %v3483 = vld [vmem:[#allocation8 + $0x1610] sm:$0xff]
        %v3484 = vld [vmem:[#allocation8 + $0x1618] sm:$0xff]
        %v3485 = vld [vmem:[#allocation8 + $0x1620] sm:$0xff]
        %v3486 = vld [vmem:[#allocation8 + $0x1628] sm:$0xff]
        %v3487 = vld [vmem:[#allocation8 + $0x1630] sm:$0xff]
        %v3488 = vld [vmem:[#allocation8 + $0x1638] sm:$0xff]
        %v3489 = vld [vmem:[#allocation8 + $0x1640] sm:$0xff]
        %v3490 = vld [vmem:[#allocation8 + $0x1648] sm:$0xff]
        %v3491 = vld [vmem:[#allocation8 + $0x1650] sm:$0xff]
        %v3492 = vld [vmem:[#allocation8 + $0x1658] sm:$0xff]
        %v3493 = vld [vmem:[#allocation8 + $0x1660] sm:$0xff]
        %v3494 = vld [vmem:[#allocation8 + $0x1668] sm:$0xff]
        %v3495 = vld [vmem:[#allocation8 + $0x1670] sm:$0xff]
        %v3496 = vld [vmem:[#allocation8 + $0x1678] sm:$0xff]
        %v3497 = vld [vmem:[#allocation8 + $0x1680] sm:$0xff]
        %v3498 = vld [vmem:[#allocation8 + $0x1688] sm:$0xff]
        %v3499 = vld [vmem:[#allocation8 + $0x1690] sm:$0xff]
        %v3500 = vld [vmem:[#allocation8 + $0x1698] sm:$0xff]
        %v3501 = vld [vmem:[#allocation8 + $0x16a0] sm:$0xff]
        %v3502 = vld [vmem:[#allocation8 + $0x16a8] sm:$0xff]
        %v3503 = vld [vmem:[#allocation8 + $0x16b0] sm:$0xff]
        %v3504 = vld [vmem:[#allocation8 + $0x16b8] sm:$0xff]
        %v3505 = vld [vmem:[#allocation8 + $0x16c0] sm:$0xff]
        %v3506 = vld [vmem:[#allocation8 + $0x16c8] sm:$0xff]
        %v3507 = vld [vmem:[#allocation8 + $0x16d0] sm:$0xff]
        %v3508 = vld [vmem:[#allocation8 + $0x16d8] sm:$0xff]
        %v3509 = vld [vmem:[#allocation8 + $0x16e0] sm:$0xff]
        %v3510 = vld [vmem:[#allocation8 + $0x16e8] sm:$0xff]
        %v3511 = vld [vmem:[#allocation8 + $0x16f0] sm:$0xff]
        %v3512 = vld [vmem:[#allocation8 + $0x16f8] sm:$0xff]
        %v3513 = vld [vmem:[#allocation8 + $0x1700] sm:$0xff]
        %v3514 = vld [vmem:[#allocation8 + $0x1708] sm:$0xff]
        %v3515 = vld [vmem:[#allocation8 + $0x1710] sm:$0xff]
        %v3516 = vld [vmem:[#allocation8 + $0x1718] sm:$0xff]
        %v3517 = vld [vmem:[#allocation8 + $0x1720] sm:$0xff]
        %v3518 = vld [vmem:[#allocation8 + $0x1728] sm:$0xff]
        %v3519 = vld [vmem:[#allocation8 + $0x1730] sm:$0xff]
        %v3520 = vld [vmem:[#allocation8 + $0x1738] sm:$0xff]
        %v3521 = vld [vmem:[#allocation8 + $0x1740] sm:$0xff]
        %v3522 = vld [vmem:[#allocation8 + $0x1748] sm:$0xff]
        %v3523 = vld [vmem:[#allocation8 + $0x1750] sm:$0xff]
        %v3524 = vld [vmem:[#allocation8 + $0x1758] sm:$0xff]
        %v3525 = vld [vmem:[#allocation8 + $0x1760] sm:$0xff]
        %v3526 = vld [vmem:[#allocation8 + $0x1768] sm:$0xff]
        %v3527 = vld [vmem:[#allocation8 + $0x1770] sm:$0xff]
        %v3528 = vld [vmem:[#allocation8 + $0x1778] sm:$0xff]
        %v3529 = vld [vmem:[#allocation8 + $0x1780] sm:$0xff]
        %v3530 = vld [vmem:[#allocation8 + $0x1788] sm:$0xff]
        %v3531 = vld [vmem:[#allocation8 + $0x1790] sm:$0xff]
        %v3532 = vld [vmem:[#allocation8 + $0x1798] sm:$0xff]
        %v3533 = vld [vmem:[#allocation8 + $0x17a0] sm:$0xff]
        %v3534 = vld [vmem:[#allocation8 + $0x17a8] sm:$0xff]
        %v3535 = vld [vmem:[#allocation8 + $0x17b0] sm:$0xff]
        %v3536 = vld [vmem:[#allocation8 + $0x17b8] sm:$0xff]
        %v3537 = vld [vmem:[#allocation8 + $0x17c0] sm:$0xff]
        %v3538 = vld [vmem:[#allocation8 + $0x17c8] sm:$0xff]
        %v3539 = vld [vmem:[#allocation8 + $0x17d0] sm:$0xff]
        %v3540 = vld [vmem:[#allocation8 + $0x17d8] sm:$0xff]
        %v3541 = vld [vmem:[#allocation8 + $0x17e0] sm:$0xff]
        %v3542 = vld [vmem:[#allocation8 + $0x17e8] sm:$0xff]
        %v3543 = vld [vmem:[#allocation8 + $0x17f0] sm:$0xff]
        %v3544 = vld [vmem:[#allocation8 + $0x17f8] sm:$0xff]
        %v3545 = vld [vmem:[#allocation8 + $0x1800] sm:$0xff]
        %v3546 = vld [vmem:[#allocation8 + $0x1808] sm:$0xff]
        %v3547 = vld [vmem:[#allocation8 + $0x1810] sm:$0xff]
        %v3548 = vld [vmem:[#allocation8 + $0x1818] sm:$0xff]
        %v3549 = vld [vmem:[#allocation8 + $0x1820] sm:$0xff]
        %v3550 = vld [vmem:[#allocation8 + $0x1828] sm:$0xff]
        %v3551 = vld [vmem:[#allocation8 + $0x1830] sm:$0xff]
        %v3552 = vld [vmem:[#allocation8 + $0x1838] sm:$0xff]
        %v3553 = vld [vmem:[#allocation8 + $0x1840] sm:$0xff]
        %v3554 = vld [vmem:[#allocation8 + $0x1848] sm:$0xff]
        %v3555 = vld [vmem:[#allocation8 + $0x1850] sm:$0xff]
        %v3556 = vld [vmem:[#allocation8 + $0x1858] sm:$0xff]
        %v3557 = vld [vmem:[#allocation8 + $0x1860] sm:$0xff]
        %v3558 = vld [vmem:[#allocation8 + $0x1868] sm:$0xff]
        %v3559 = vld [vmem:[#allocation8 + $0x1870] sm:$0xff]
        %v3560 = vld [vmem:[#allocation8 + $0x1878] sm:$0xff]
        %v3561 = vld [vmem:[#allocation8 + $0x1880] sm:$0xff]
        %v3562 = vld [vmem:[#allocation8 + $0x1888] sm:$0xff]
        %v3563 = vld [vmem:[#allocation8 + $0x1890] sm:$0xff]
        %v3564 = vld [vmem:[#allocation8 + $0x1898] sm:$0xff]
        %v3565 = vld [vmem:[#allocation8 + $0x18a0] sm:$0xff]
        %v3566 = vld [vmem:[#allocation8 + $0x18a8] sm:$0xff]
        %v3567 = vld [vmem:[#allocation8 + $0x18b0] sm:$0xff]
        %v3568 = vld [vmem:[#allocation8 + $0x18b8] sm:$0xff]
        %v3569 = vld [vmem:[#allocation8 + $0x18c0] sm:$0xff]
        %v3570 = vld [vmem:[#allocation8 + $0x18c8] sm:$0xff]
        %v3571 = vld [vmem:[#allocation8 + $0x18d0] sm:$0xff]
        %v3572 = vld [vmem:[#allocation8 + $0x18d8] sm:$0xff]
        %v3573 = vld [vmem:[#allocation8 + $0x18e0] sm:$0xff]
        %v3574 = vld [vmem:[#allocation8 + $0x18e8] sm:$0xff]
        %v3575 = vld [vmem:[#allocation8 + $0x18f0] sm:$0xff]
        %v3576 = vld [vmem:[#allocation8 + $0x18f8] sm:$0xff]
        %v3577 = vld [vmem:[#allocation8 + $0x1900] sm:$0xff]
        %v3578 = vld [vmem:[#allocation8 + $0x1908] sm:$0xff]
        %v3579 = vld [vmem:[#allocation8 + $0x1910] sm:$0xff]
        %v3580 = vld [vmem:[#allocation8 + $0x1918] sm:$0xff]
        %v3581 = vld [vmem:[#allocation8 + $0x1920] sm:$0xff]
        %v3582 = vld [vmem:[#allocation8 + $0x1928] sm:$0xff]
        %v3583 = vld [vmem:[#allocation8 + $0x1930] sm:$0xff]
        %v3584 = vld [vmem:[#allocation8 + $0x1938] sm:$0xff]
        %v3585 = vld [vmem:[#allocation8 + $0x1940] sm:$0xff]
        %v3586 = vld [vmem:[#allocation8 + $0x1948] sm:$0xff]
        %v3587 = vld [vmem:[#allocation8 + $0x1950] sm:$0xff]
        %v3588 = vld [vmem:[#allocation8 + $0x1958] sm:$0xff]
        %v3589 = vld [vmem:[#allocation8 + $0x1960] sm:$0xff]
        %v3590 = vld [vmem:[#allocation8 + $0x1968] sm:$0xff]
        %v3591 = vld [vmem:[#allocation8 + $0x1970] sm:$0xff]
        %v3592 = vld [vmem:[#allocation8 + $0x1978] sm:$0xff]
        %v3593 = vld [vmem:[#allocation8 + $0x1980] sm:$0xff]
        %v3594 = vld [vmem:[#allocation8 + $0x1988] sm:$0xff]
        %v3595 = vld [vmem:[#allocation8 + $0x1990] sm:$0xff]
        %v3596 = vld [vmem:[#allocation8 + $0x1998] sm:$0xff]
        %v3597 = vld [vmem:[#allocation8 + $0x19a0] sm:$0xff]
        %v3598 = vld [vmem:[#allocation8 + $0x19a8] sm:$0xff]
        %v3599 = vld [vmem:[#allocation8 + $0x19b0] sm:$0xff]
        %v3600 = vld [vmem:[#allocation8 + $0x19b8] sm:$0xff]
        %v3601 = vld [vmem:[#allocation8 + $0x19c0] sm:$0xff]
        %v3602 = vld [vmem:[#allocation8 + $0x19c8] sm:$0xff]
        %v3603 = vld [vmem:[#allocation8 + $0x19d0] sm:$0xff]
        %v3604 = vld [vmem:[#allocation8 + $0x19d8] sm:$0xff]
        %v3605 = vld [vmem:[#allocation8 + $0x19e0] sm:$0xff]
        %v3606 = vld [vmem:[#allocation8 + $0x19e8] sm:$0xff]
        %v3607 = vld [vmem:[#allocation8 + $0x19f0] sm:$0xff]
        %v3608 = vld [vmem:[#allocation8 + $0x19f8] sm:$0xff]
        %v3609 = vld [vmem:[#allocation8 + $0x1a00] sm:$0xff]
        %v3610 = vld [vmem:[#allocation8 + $0x1a08] sm:$0xff]
        %v3611 = vld [vmem:[#allocation8 + $0x1a10] sm:$0xff]
        %v3612 = vld [vmem:[#allocation8 + $0x1a18] sm:$0xff]
        %v3613 = vld [vmem:[#allocation8 + $0x1a20] sm:$0xff]
        %v3614 = vld [vmem:[#allocation8 + $0x1a28] sm:$0xff]
        %v3615 = vld [vmem:[#allocation8 + $0x1a30] sm:$0xff]
        %v3616 = vld [vmem:[#allocation8 + $0x1a38] sm:$0xff]
        %v3617 = vld [vmem:[#allocation8 + $0x1a40] sm:$0xff]
        %v3618 = vld [vmem:[#allocation8 + $0x1a48] sm:$0xff]
        %v3619 = vld [vmem:[#allocation8 + $0x1a50] sm:$0xff]
        %v3620 = vld [vmem:[#allocation8 + $0x1a58] sm:$0xff]
        %v3621 = vld [vmem:[#allocation8 + $0x1a60] sm:$0xff]
        %v3622 = vld [vmem:[#allocation8 + $0x1a68] sm:$0xff]
        %v3623 = vld [vmem:[#allocation8 + $0x1a70] sm:$0xff]
        %v3624 = vld [vmem:[#allocation8 + $0x1a78] sm:$0xff]
        %v3625 = vld [vmem:[#allocation8 + $0x1a80] sm:$0xff]
        %v3626 = vld [vmem:[#allocation8 + $0x1a88] sm:$0xff]
        %v3627 = vld [vmem:[#allocation8 + $0x1a90] sm:$0xff]
        %v3628 = vld [vmem:[#allocation8 + $0x1a98] sm:$0xff]
        %v3629 = vld [vmem:[#allocation8 + $0x1aa0] sm:$0xff]
        %v3630 = vld [vmem:[#allocation8 + $0x1aa8] sm:$0xff]
        %v3631 = vld [vmem:[#allocation8 + $0x1ab0] sm:$0xff]
        %v3632 = vld [vmem:[#allocation8 + $0x1ab8] sm:$0xff]
        %v3633 = vld [vmem:[#allocation8 + $0x1ac0] sm:$0xff]
        %v3634 = vld [vmem:[#allocation8 + $0x1ac8] sm:$0xff]
        %v3635 = vld [vmem:[#allocation8 + $0x1ad0] sm:$0xff]
        %v3636 = vld [vmem:[#allocation8 + $0x1ad8] sm:$0xff]
        %v3637 = vld [vmem:[#allocation8 + $0x1ae0] sm:$0xff]
        %v3638 = vld [vmem:[#allocation8 + $0x1ae8] sm:$0xff]
        %v3639 = vld [vmem:[#allocation8 + $0x1af0] sm:$0xff]
        %v3640 = vld [vmem:[#allocation8 + $0x1af8] sm:$0xff]
        %v3641 = vld [vmem:[#allocation8 + $0x1b00] sm:$0xff]
        %v3642 = vld [vmem:[#allocation8 + $0x1b08] sm:$0xff]
        %v3643 = vld [vmem:[#allocation8 + $0x1b10] sm:$0xff]
        %v3644 = vld [vmem:[#allocation8 + $0x1b18] sm:$0xff]
        %v3645 = vld [vmem:[#allocation8 + $0x1b20] sm:$0xff]
        %v3646 = vld [vmem:[#allocation8 + $0x1b28] sm:$0xff]
        %v3647 = vld [vmem:[#allocation8 + $0x1b30] sm:$0xff]
        %v3648 = vld [vmem:[#allocation8 + $0x1b38] sm:$0xff]
        %v3649 = vld [vmem:[#allocation8 + $0x1b40] sm:$0xff]
        %v3650 = vld [vmem:[#allocation8 + $0x1b48] sm:$0xff]
        %v3651 = vld [vmem:[#allocation8 + $0x1b50] sm:$0xff]
        %v3652 = vld [vmem:[#allocation8 + $0x1b58] sm:$0xff]
        %v3653 = vld [vmem:[#allocation8 + $0x1b60] sm:$0xff]
        %v3654 = vld [vmem:[#allocation8 + $0x1b68] sm:$0xff]
        %v3655 = vld [vmem:[#allocation8 + $0x1b70] sm:$0xff]
        %v3656 = vld [vmem:[#allocation8 + $0x1b78] sm:$0xff]
        %v3657 = vld [vmem:[#allocation8 + $0x1b80] sm:$0xff]
        %v3658 = vld [vmem:[#allocation8 + $0x1b88] sm:$0xff]
        %v3659 = vld [vmem:[#allocation8 + $0x1b90] sm:$0xff]
        %v3660 = vld [vmem:[#allocation8 + $0x1b98] sm:$0xff]
        %v3661 = vld [vmem:[#allocation8 + $0x1ba0] sm:$0xff]
        %v3662 = vld [vmem:[#allocation8 + $0x1ba8] sm:$0xff]
        %v3663 = vld [vmem:[#allocation8 + $0x1bb0] sm:$0xff]
        %v3664 = vld [vmem:[#allocation8 + $0x1bb8] sm:$0xff]
        %v3665 = vld [vmem:[#allocation8 + $0x1bc0] sm:$0xff]
        %v3666 = vld [vmem:[#allocation8 + $0x1bc8] sm:$0xff]
        %v3667 = vld [vmem:[#allocation8 + $0x1bd0] sm:$0xff]
        %v3668 = vld [vmem:[#allocation8 + $0x1bd8] sm:$0xff]
        %v3669 = vld [vmem:[#allocation8 + $0x1be0] sm:$0xff]
        %v3670 = vld [vmem:[#allocation8 + $0x1be8] sm:$0xff]
        %v3671 = vld [vmem:[#allocation8 + $0x1bf0] sm:$0xff]
        %v3672 = vld [vmem:[#allocation8 + $0x1bf8] sm:$0xff]
        %v3673 = vld [vmem:[#allocation8 + $0x1c00] sm:$0xff]
        %v3674 = vld [vmem:[#allocation8 + $0x1c08] sm:$0xff]
        %v3675 = vld [vmem:[#allocation8 + $0x1c10] sm:$0xff]
        %v3676 = vld [vmem:[#allocation8 + $0x1c18] sm:$0xff]
        %v3677 = vld [vmem:[#allocation8 + $0x1c20] sm:$0xff]
        %v3678 = vld [vmem:[#allocation8 + $0x1c28] sm:$0xff]
        %v3679 = vld [vmem:[#allocation8 + $0x1c30] sm:$0xff]
        %v3680 = vld [vmem:[#allocation8 + $0x1c38] sm:$0xff]
        %v3681 = vld [vmem:[#allocation8 + $0x1c40] sm:$0xff]
        %v3682 = vld [vmem:[#allocation8 + $0x1c48] sm:$0xff]
        %v3683 = vld [vmem:[#allocation8 + $0x1c50] sm:$0xff]
        %v3684 = vld [vmem:[#allocation8 + $0x1c58] sm:$0xff]
        %v3685 = vld [vmem:[#allocation8 + $0x1c60] sm:$0xff]
        %v3686 = vld [vmem:[#allocation8 + $0x1c68] sm:$0xff]
        %v3687 = vld [vmem:[#allocation8 + $0x1c70] sm:$0xff]
        %v3688 = vld [vmem:[#allocation8 + $0x1c78] sm:$0xff]
        %v3689 = vld [vmem:[#allocation8 + $0x1c80] sm:$0xff]
        %v3690 = vld [vmem:[#allocation8 + $0x1c88] sm:$0xff]
        %v3691 = vld [vmem:[#allocation8 + $0x1c90] sm:$0xff]
        %v3692 = vld [vmem:[#allocation8 + $0x1c98] sm:$0xff]
        %v3693 = vld [vmem:[#allocation8 + $0x1ca0] sm:$0xff]
        %v3694 = vld [vmem:[#allocation8 + $0x1ca8] sm:$0xff]
        %v3695 = vld [vmem:[#allocation8 + $0x1cb0] sm:$0xff]
        %v3696 = vld [vmem:[#allocation8 + $0x1cb8] sm:$0xff]
        %v3697 = vld [vmem:[#allocation8 + $0x1cc0] sm:$0xff]
        %v3698 = vld [vmem:[#allocation8 + $0x1cc8] sm:$0xff]
        %v3699 = vld [vmem:[#allocation8 + $0x1cd0] sm:$0xff]
        %v3700 = vld [vmem:[#allocation8 + $0x1cd8] sm:$0xff]
        %v3701 = vld [vmem:[#allocation8 + $0x1ce0] sm:$0xff]
        %v3702 = vld [vmem:[#allocation8 + $0x1ce8] sm:$0xff]
        %v3703 = vld [vmem:[#allocation8 + $0x1cf0] sm:$0xff]
        %v3704 = vld [vmem:[#allocation8 + $0x1cf8] sm:$0xff]
        %v3705 = vld [vmem:[#allocation8 + $0x1d00] sm:$0xff]
        %v3706 = vld [vmem:[#allocation8 + $0x1d08] sm:$0xff]
        %v3707 = vld [vmem:[#allocation8 + $0x1d10] sm:$0xff]
        %v3708 = vld [vmem:[#allocation8 + $0x1d18] sm:$0xff]
        %v3709 = vld [vmem:[#allocation8 + $0x1d20] sm:$0xff]
        %v3710 = vld [vmem:[#allocation8 + $0x1d28] sm:$0xff]
        %v3711 = vld [vmem:[#allocation8 + $0x1d30] sm:$0xff]
        %v3712 = vld [vmem:[#allocation8 + $0x1d38] sm:$0xff]
        %v3713 = vld [vmem:[#allocation8 + $0x1d40] sm:$0xff]
        %v3714 = vld [vmem:[#allocation8 + $0x1d48] sm:$0xff]
        %v3715 = vld [vmem:[#allocation8 + $0x1d50] sm:$0xff]
        %v3716 = vld [vmem:[#allocation8 + $0x1d58] sm:$0xff]
        %v3717 = vld [vmem:[#allocation8 + $0x1d60] sm:$0xff]
        %v3718 = vld [vmem:[#allocation8 + $0x1d68] sm:$0xff]
        %v3719 = vld [vmem:[#allocation8 + $0x1d70] sm:$0xff]
        %v3720 = vld [vmem:[#allocation8 + $0x1d78] sm:$0xff]
        %v3721 = vld [vmem:[#allocation8 + $0x1d80] sm:$0xff]
        %v3722 = vld [vmem:[#allocation8 + $0x1d88] sm:$0xff]
        %v3723 = vld [vmem:[#allocation8 + $0x1d90] sm:$0xff]
        %v3724 = vld [vmem:[#allocation8 + $0x1d98] sm:$0xff]
        %v3725 = vld [vmem:[#allocation8 + $0x1da0] sm:$0xff]
        %v3726 = vld [vmem:[#allocation8 + $0x1da8] sm:$0xff]
        %v3727 = vld [vmem:[#allocation8 + $0x1db0] sm:$0xff]
        %v3728 = vld [vmem:[#allocation8 + $0x1db8] sm:$0xff]
        %v3729 = vld [vmem:[#allocation8 + $0x1dc0] sm:$0xff]
        %v3730 = vld [vmem:[#allocation8 + $0x1dc8] sm:$0xff]
        %v3731 = vld [vmem:[#allocation8 + $0x1dd0] sm:$0xff]
        %v3732 = vld [vmem:[#allocation8 + $0x1dd8] sm:$0xff]
        %v3733 = vld [vmem:[#allocation8 + $0x1de0] sm:$0xff]
        %v3734 = vld [vmem:[#allocation8 + $0x1de8] sm:$0xff]
        %v3735 = vld [vmem:[#allocation8 + $0x1df0] sm:$0xff]
        %v3736 = vld [vmem:[#allocation8 + $0x1df8] sm:$0xff]
        %v3737 = vld [vmem:[#allocation8 + $0x1e00] sm:$0xff]
        %v3738 = vld [vmem:[#allocation8 + $0x1e08] sm:$0xff]
        %v3739 = vld [vmem:[#allocation8 + $0x1e10] sm:$0xff]
        %v3740 = vld [vmem:[#allocation8 + $0x1e18] sm:$0xff]
        %v3741 = vld [vmem:[#allocation8 + $0x1e20] sm:$0xff]
        %v3742 = vld [vmem:[#allocation8 + $0x1e28] sm:$0xff]
        %v3743 = vld [vmem:[#allocation8 + $0x1e30] sm:$0xff]
        %v3744 = vld [vmem:[#allocation8 + $0x1e38] sm:$0xff]
        %v3745 = vld [vmem:[#allocation8 + $0x1e40] sm:$0xff]
        %v3746 = vld [vmem:[#allocation8 + $0x1e48] sm:$0xff]
        %v3747 = vld [vmem:[#allocation8 + $0x1e50] sm:$0xff]
        %v3748 = vld [vmem:[#allocation8 + $0x1e58] sm:$0xff]
        %v3749 = vld [vmem:[#allocation8 + $0x1e60] sm:$0xff]
        %v3750 = vld [vmem:[#allocation8 + $0x1e68] sm:$0xff]
        %v3751 = vld [vmem:[#allocation8 + $0x1e70] sm:$0xff]
        %v3752 = vld [vmem:[#allocation8 + $0x1e78] sm:$0xff]
        %v3753 = vld [vmem:[#allocation8 + $0x1e80] sm:$0xff]
        %v3754 = vld [vmem:[#allocation8 + $0x1e88] sm:$0xff]
        %v3755 = vld [vmem:[#allocation8 + $0x1e90] sm:$0xff]
        %v3756 = vld [vmem:[#allocation8 + $0x1e98] sm:$0xff]
        %v3757 = vld [vmem:[#allocation8 + $0x1ea0] sm:$0xff]
        %v3758 = vld [vmem:[#allocation8 + $0x1ea8] sm:$0xff]
        %v3759 = vld [vmem:[#allocation8 + $0x1eb0] sm:$0xff]
        %v3760 = vld [vmem:[#allocation8 + $0x1eb8] sm:$0xff]
        %v3761 = vld [vmem:[#allocation8 + $0x1ec0] sm:$0xff]
        %v3762 = vld [vmem:[#allocation8 + $0x1ec8] sm:$0xff]
        %v3763 = vld [vmem:[#allocation8 + $0x1ed0] sm:$0xff]
        %v3764 = vld [vmem:[#allocation8 + $0x1ed8] sm:$0xff]
        %v3765 = vld [vmem:[#allocation8 + $0x1ee0] sm:$0xff]
        %v3766 = vld [vmem:[#allocation8 + $0x1ee8] sm:$0xff]
        %v3767 = vld [vmem:[#allocation8 + $0x1ef0] sm:$0xff]
        %v3768 = vld [vmem:[#allocation8 + $0x1ef8] sm:$0xff]
        %v3769 = vld [vmem:[#allocation8 + $0x1f00] sm:$0xff]
        %v3770 = vld [vmem:[#allocation8 + $0x1f08] sm:$0xff]
        %v3771 = vld [vmem:[#allocation8 + $0x1f10] sm:$0xff]
        %v3772 = vld [vmem:[#allocation8 + $0x1f18] sm:$0xff]
        %v3773 = vld [vmem:[#allocation8 + $0x1f20] sm:$0xff]
        %v3774 = vld [vmem:[#allocation8 + $0x1f28] sm:$0xff]
        %v3775 = vld [vmem:[#allocation8 + $0x1f30] sm:$0xff]
        %v3776 = vld [vmem:[#allocation8 + $0x1f38] sm:$0xff]
        %v3777 = vld [vmem:[#allocation8 + $0x1f40] sm:$0xff]
        %v3778 = vld [vmem:[#allocation8 + $0x1f48] sm:$0xff]
        %v3779 = vld [vmem:[#allocation8 + $0x1f50] sm:$0xff]
        %v3780 = vld [vmem:[#allocation8 + $0x1f58] sm:$0xff]
        %v3781 = vld [vmem:[#allocation8 + $0x1f60] sm:$0xff]
        %v3782 = vld [vmem:[#allocation8 + $0x1f68] sm:$0xff]
        %v3783 = vld [vmem:[#allocation8 + $0x1f70] sm:$0xff]
        %v3784 = vld [vmem:[#allocation8 + $0x1f78] sm:$0xff]
        %v3785 = vld [vmem:[#allocation8 + $0x1f80] sm:$0xff]
        %v3786 = vld [vmem:[#allocation8 + $0x1f88] sm:$0xff]
        %v3787 = vld [vmem:[#allocation8 + $0x1f90] sm:$0xff]
        %v3788 = vld [vmem:[#allocation8 + $0x1f98] sm:$0xff]
        %v3789 = vld [vmem:[#allocation8 + $0x1fa0] sm:$0xff]
        %v3790 = vld [vmem:[#allocation8 + $0x1fa8] sm:$0xff]
        %v3791 = vld [vmem:[#allocation8 + $0x1fb0] sm:$0xff]
        %v3792 = vld [vmem:[#allocation8 + $0x1fb8] sm:$0xff]
        %v3793 = vld [vmem:[#allocation8 + $0x1fc0] sm:$0xff]
        %v3794 = vld [vmem:[#allocation8 + $0x1fc8] sm:$0xff]
        %v3795 = vld [vmem:[#allocation8 + $0x1fd0] sm:$0xff]
        %v3796 = vld [vmem:[#allocation8 + $0x1fd8] sm:$0xff]
        %v3797 = vld [vmem:[#allocation8 + $0x1fe0] sm:$0xff]
        %v3798 = vld [vmem:[#allocation8 + $0x1fe8] sm:$0xff]
        %v3799 = vld [vmem:[#allocation8 + $0x1ff0] sm:$0xff]
        %v3800 = vld [vmem:[#allocation8 + $0x1ff8] sm:$0xff]
        %v3801 = vld [vmem:[#allocation10] sm:$0xf]
        %v3803 = vperm.slane %v3801, 0
        %v3804 = vperm.slane %v3801, 1
        %v3805 = vperm.slane %v3801, 2
        %v3806 = vperm.slane %v3801, 3
        %3811 = vmatpush.msra.mxu0 %v2837
        %3812 = vmatpush.msra.mxu0 %v2833
        %3813 = vmatpush.msra.mxu0 %v2829
        %3814 = vmatpush.msra.mxu0 %v2825
        %3815 = vmatpush.msra.mxu0 %v2821
        %3816 = vmatpush.msra.mxu0 %v2817
        %3817 = vmatpush.msra.mxu0 %v2813
        %3818 = vmatpush.msra.mxu0 %v2809
        %3819 = vmatpush.msra.mxu0 %v2805
        %3820 = vmatpush.msra.mxu0 %v2801
        %3821 = vmatpush.msra.mxu0 %v2797
        %3822 = vmatpush.msra.mxu0 %v2793
        %3823 = vmatpush.msra.mxu0 %v2789
        %3824 = vmatpush.msra.mxu0 %v2785
        %3825 = vmatpush.msra.mxu0 %v2781
        %3826 = vmatpush.msra.mxu0 %v2777
        %3827 = vmatmul.f32.gmra.mxu0 %v2761
        %v3828 = vpop.f32.mrf.mxu0
        %v3829 = vadd.f32 %v3803, %v3828
        %3830 = vdwg.mxu0
        %3831 = vmatpush.msra.mxu0 %v2901
        %3832 = vmatpush.msra.mxu0 %v2897
        %3833 = vmatpush.msra.mxu0 %v2893
        %3834 = vmatpush.msra.mxu0 %v2889
        %3835 = vmatpush.msra.mxu0 %v2885
        %3836 = vmatpush.msra.mxu0 %v2881
        %3837 = vmatpush.msra.mxu0 %v2877
        %3838 = vmatpush.msra.mxu0 %v2873
        %3839 = vmatpush.msra.mxu0 %v2869
        %3840 = vmatpush.msra.mxu0 %v2865
        %3841 = vmatpush.msra.mxu0 %v2861
        %3842 = vmatpush.msra.mxu0 %v2857
        %3843 = vmatpush.msra.mxu0 %v2853
        %3844 = vmatpush.msra.mxu0 %v2849
        %3845 = vmatpush.msra.mxu0 %v2845
        %3846 = vmatpush.msra.mxu0 %v2841
        %3847 = vmatmul.f32.gmra.mxu0 %v2762
        %v3848 = vpop.f32.mrf.mxu0
        %v3849 = vadd.f32 %v3829, %v3848
        %3850 = vdwg.mxu0
        %3851 = vmatpush.msra.mxu0 %v2965
        %3852 = vmatpush.msra.mxu0 %v2961
        %3853 = vmatpush.msra.mxu0 %v2957
        %3854 = vmatpush.msra.mxu0 %v2953
        %3855 = vmatpush.msra.mxu0 %v2949
        %3856 = vmatpush.msra.mxu0 %v2945
        %3857 = vmatpush.msra.mxu0 %v2941
        %3858 = vmatpush.msra.mxu0 %v2937
        %3859 = vmatpush.msra.mxu0 %v2933
        %3860 = vmatpush.msra.mxu0 %v2929
        %3861 = vmatpush.msra.mxu0 %v2925
        %3862 = vmatpush.msra.mxu0 %v2921
        %3863 = vmatpush.msra.mxu0 %v2917
        %3864 = vmatpush.msra.mxu0 %v2913
        %3865 = vmatpush.msra.mxu0 %v2909
        %3866 = vmatpush.msra.mxu0 %v2905
        %3867 = vmatmul.f32.gmra.mxu0 %v2763
        %v3868 = vpop.f32.mrf.mxu0
        %v3869 = vadd.f32 %v3849, %v3868
        %3870 = vdwg.mxu0
        %3871 = vmatpush.msra.mxu0 %v3029
        %3872 = vmatpush.msra.mxu0 %v3025
        %3873 = vmatpush.msra.mxu0 %v3021
        %3874 = vmatpush.msra.mxu0 %v3017
        %3875 = vmatpush.msra.mxu0 %v3013
        %3876 = vmatpush.msra.mxu0 %v3009
        %3877 = vmatpush.msra.mxu0 %v3005
        %3878 = vmatpush.msra.mxu0 %v3001
        %3879 = vmatpush.msra.mxu0 %v2997
        %3880 = vmatpush.msra.mxu0 %v2993
        %3881 = vmatpush.msra.mxu0 %v2989
        %3882 = vmatpush.msra.mxu0 %v2985
        %3883 = vmatpush.msra.mxu0 %v2981
        %3884 = vmatpush.msra.mxu0 %v2977
        %3885 = vmatpush.msra.mxu0 %v2973
        %3886 = vmatpush.msra.mxu0 %v2969
        %3887 = vmatmul.f32.gmra.mxu0 %v2764
        %v3888 = vpop.f32.mrf.mxu0
        %v3889 = vadd.f32 %v3869, %v3888
        %3890 = vdwg.mxu0
        %3891 = vmatpush.msra.mxu0 %v3093
        %3892 = vmatpush.msra.mxu0 %v3089
        %3893 = vmatpush.msra.mxu0 %v3085
        %3894 = vmatpush.msra.mxu0 %v3081
        %3895 = vmatpush.msra.mxu0 %v3077
        %3896 = vmatpush.msra.mxu0 %v3073
        %3897 = vmatpush.msra.mxu0 %v3069
        %3898 = vmatpush.msra.mxu0 %v3065
        %3899 = vmatpush.msra.mxu0 %v3061
        %3900 = vmatpush.msra.mxu0 %v3057
        %3901 = vmatpush.msra.mxu0 %v3053
        %3902 = vmatpush.msra.mxu0 %v3049
        %3903 = vmatpush.msra.mxu0 %v3045
        %3904 = vmatpush.msra.mxu0 %v3041
        %3905 = vmatpush.msra.mxu0 %v3037
        %3906 = vmatpush.msra.mxu0 %v3033
        %3907 = vmatmul.f32.gmra.mxu0 %v2765
        %v3908 = vpop.f32.mrf.mxu0
        %v3909 = vadd.f32 %v3889, %v3908
        %3910 = vdwg.mxu0
        %3911 = vmatpush.msra.mxu0 %v3157
        %3912 = vmatpush.msra.mxu0 %v3153
        %3913 = vmatpush.msra.mxu0 %v3149
        %3914 = vmatpush.msra.mxu0 %v3145
        %3915 = vmatpush.msra.mxu0 %v3141
        %3916 = vmatpush.msra.mxu0 %v3137
        %3917 = vmatpush.msra.mxu0 %v3133
        %3918 = vmatpush.msra.mxu0 %v3129
        %3919 = vmatpush.msra.mxu0 %v3125
        %3920 = vmatpush.msra.mxu0 %v3121
        %3921 = vmatpush.msra.mxu0 %v3117
        %3922 = vmatpush.msra.mxu0 %v3113
        %3923 = vmatpush.msra.mxu0 %v3109
        %3924 = vmatpush.msra.mxu0 %v3105
        %3925 = vmatpush.msra.mxu0 %v3101
        %3926 = vmatpush.msra.mxu0 %v3097
        %3927 = vmatmul.f32.gmra.mxu0 %v2766
        %v3928 = vpop.f32.mrf.mxu0
        %v3929 = vadd.f32 %v3909, %v3928
        %3930 = vdwg.mxu0
        %3931 = vmatpush.msra.mxu0 %v3221
        %3932 = vmatpush.msra.mxu0 %v3217
        %3933 = vmatpush.msra.mxu0 %v3213
        %3934 = vmatpush.msra.mxu0 %v3209
        %3935 = vmatpush.msra.mxu0 %v3205
        %3936 = vmatpush.msra.mxu0 %v3201
        %3937 = vmatpush.msra.mxu0 %v3197
        %3938 = vmatpush.msra.mxu0 %v3193
        %3939 = vmatpush.msra.mxu0 %v3189
        %3940 = vmatpush.msra.mxu0 %v3185
        %3941 = vmatpush.msra.mxu0 %v3181
        %3942 = vmatpush.msra.mxu0 %v3177
        %3943 = vmatpush.msra.mxu0 %v3173
        %3944 = vmatpush.msra.mxu0 %v3169
        %3945 = vmatpush.msra.mxu0 %v3165
        %3946 = vmatpush.msra.mxu0 %v3161
        %3947 = vmatmul.f32.gmra.mxu0 %v2767
        %v3948 = vpop.f32.mrf.mxu0
        %v3949 = vadd.f32 %v3929, %v3948
        %3950 = vdwg.mxu0
        %3951 = vmatpush.msra.mxu0 %v3285
        %3952 = vmatpush.msra.mxu0 %v3281
        %3953 = vmatpush.msra.mxu0 %v3277
        %3954 = vmatpush.msra.mxu0 %v3273
        %3955 = vmatpush.msra.mxu0 %v3269
        %3956 = vmatpush.msra.mxu0 %v3265
        %3957 = vmatpush.msra.mxu0 %v3261
        %3958 = vmatpush.msra.mxu0 %v3257
        %3959 = vmatpush.msra.mxu0 %v3253
        %3960 = vmatpush.msra.mxu0 %v3249
        %3961 = vmatpush.msra.mxu0 %v3245
        %3962 = vmatpush.msra.mxu0 %v3241
        %3963 = vmatpush.msra.mxu0 %v3237
        %3964 = vmatpush.msra.mxu0 %v3233
        %3965 = vmatpush.msra.mxu0 %v3229
        %3966 = vmatpush.msra.mxu0 %v3225
        %3967 = vmatmul.f32.gmra.mxu0 %v2768
        %v3968 = vpop.f32.mrf.mxu0
        %v3969 = vadd.f32 %v3949, %v3968
        %3970 = vdwg.mxu0
        %3971 = vmatpush.msra.mxu0 %v3349
        %3972 = vmatpush.msra.mxu0 %v3345
        %3973 = vmatpush.msra.mxu0 %v3341
        %3974 = vmatpush.msra.mxu0 %v3337
        %3975 = vmatpush.msra.mxu0 %v3333
        %3976 = vmatpush.msra.mxu0 %v3329
        %3977 = vmatpush.msra.mxu0 %v3325
        %3978 = vmatpush.msra.mxu0 %v3321
        %3979 = vmatpush.msra.mxu0 %v3317
        %3980 = vmatpush.msra.mxu0 %v3313
        %3981 = vmatpush.msra.mxu0 %v3309
        %3982 = vmatpush.msra.mxu0 %v3305
        %3983 = vmatpush.msra.mxu0 %v3301
        %3984 = vmatpush.msra.mxu0 %v3297
        %3985 = vmatpush.msra.mxu0 %v3293
        %3986 = vmatpush.msra.mxu0 %v3289
        %3987 = vmatmul.f32.gmra.mxu0 %v2769
        %v3988 = vpop.f32.mrf.mxu0
        %v3989 = vadd.f32 %v3969, %v3988
        %3990 = vdwg.mxu0
        %3991 = vmatpush.msra.mxu0 %v3413
        %3992 = vmatpush.msra.mxu0 %v3409
        %3993 = vmatpush.msra.mxu0 %v3405
        %3994 = vmatpush.msra.mxu0 %v3401
        %3995 = vmatpush.msra.mxu0 %v3397
        %3996 = vmatpush.msra.mxu0 %v3393
        %3997 = vmatpush.msra.mxu0 %v3389
        %3998 = vmatpush.msra.mxu0 %v3385
        %3999 = vmatpush.msra.mxu0 %v3381
        %4000 = vmatpush.msra.mxu0 %v3377
        %4001 = vmatpush.msra.mxu0 %v3373
        %4002 = vmatpush.msra.mxu0 %v3369
        %4003 = vmatpush.msra.mxu0 %v3365
        %4004 = vmatpush.msra.mxu0 %v3361
        %4005 = vmatpush.msra.mxu0 %v3357
        %4006 = vmatpush.msra.mxu0 %v3353
        %4007 = vmatmul.f32.gmra.mxu0 %v2770
        %v4008 = vpop.f32.mrf.mxu0
        %v4009 = vadd.f32 %v3989, %v4008
        %4010 = vdwg.mxu0
        %4011 = vmatpush.msra.mxu0 %v3477
        %4012 = vmatpush.msra.mxu0 %v3473
        %4013 = vmatpush.msra.mxu0 %v3469
        %4014 = vmatpush.msra.mxu0 %v3465
        %4015 = vmatpush.msra.mxu0 %v3461
        %4016 = vmatpush.msra.mxu0 %v3457
        %4017 = vmatpush.msra.mxu0 %v3453
        %4018 = vmatpush.msra.mxu0 %v3449
        %4019 = vmatpush.msra.mxu0 %v3445
        %4020 = vmatpush.msra.mxu0 %v3441
        %4021 = vmatpush.msra.mxu0 %v3437
        %4022 = vmatpush.msra.mxu0 %v3433
        %4023 = vmatpush.msra.mxu0 %v3429
        %4024 = vmatpush.msra.mxu0 %v3425
        %4025 = vmatpush.msra.mxu0 %v3421
        %4026 = vmatpush.msra.mxu0 %v3417
        %4027 = vmatmul.f32.gmra.mxu0 %v2771
        %v4028 = vpop.f32.mrf.mxu0
        %v4029 = vadd.f32 %v4009, %v4028
        %4030 = vdwg.mxu0
        %4031 = vmatpush.msra.mxu0 %v3541
        %4032 = vmatpush.msra.mxu0 %v3537
        %4033 = vmatpush.msra.mxu0 %v3533
        %4034 = vmatpush.msra.mxu0 %v3529
        %4035 = vmatpush.msra.mxu0 %v3525
        %4036 = vmatpush.msra.mxu0 %v3521
        %4037 = vmatpush.msra.mxu0 %v3517
        %4038 = vmatpush.msra.mxu0 %v3513
        %4039 = vmatpush.msra.mxu0 %v3509
        %4040 = vmatpush.msra.mxu0 %v3505
        %4041 = vmatpush.msra.mxu0 %v3501
        %4042 = vmatpush.msra.mxu0 %v3497
        %4043 = vmatpush.msra.mxu0 %v3493
        %4044 = vmatpush.msra.mxu0 %v3489
        %4045 = vmatpush.msra.mxu0 %v3485
        %4046 = vmatpush.msra.mxu0 %v3481
        %4047 = vmatmul.f32.gmra.mxu0 %v2772
        %v4048 = vpop.f32.mrf.mxu0
        %v4049 = vadd.f32 %v4029, %v4048
        %4050 = vdwg.mxu0
        %4051 = vmatpush.msra.mxu0 %v3605
        %4052 = vmatpush.msra.mxu0 %v3601
        %4053 = vmatpush.msra.mxu0 %v3597
        %4054 = vmatpush.msra.mxu0 %v3593
        %4055 = vmatpush.msra.mxu0 %v3589
        %4056 = vmatpush.msra.mxu0 %v3585
        %4057 = vmatpush.msra.mxu0 %v3581
        %4058 = vmatpush.msra.mxu0 %v3577
        %4059 = vmatpush.msra.mxu0 %v3573
        %4060 = vmatpush.msra.mxu0 %v3569
        %4061 = vmatpush.msra.mxu0 %v3565
        %4062 = vmatpush.msra.mxu0 %v3561
        %4063 = vmatpush.msra.mxu0 %v3557
        %4064 = vmatpush.msra.mxu0 %v3553
        %4065 = vmatpush.msra.mxu0 %v3549
        %4066 = vmatpush.msra.mxu0 %v3545
        %4067 = vmatmul.f32.gmra.mxu0 %v2773
        %v4068 = vpop.f32.mrf.mxu0
        %v4069 = vadd.f32 %v4049, %v4068
        %4070 = vdwg.mxu0
        %4071 = vmatpush.msra.mxu0 %v3669
        %4072 = vmatpush.msra.mxu0 %v3665
        %4073 = vmatpush.msra.mxu0 %v3661
        %4074 = vmatpush.msra.mxu0 %v3657
        %4075 = vmatpush.msra.mxu0 %v3653
        %4076 = vmatpush.msra.mxu0 %v3649
        %4077 = vmatpush.msra.mxu0 %v3645
        %4078 = vmatpush.msra.mxu0 %v3641
        %4079 = vmatpush.msra.mxu0 %v3637
        %4080 = vmatpush.msra.mxu0 %v3633
        %4081 = vmatpush.msra.mxu0 %v3629
        %4082 = vmatpush.msra.mxu0 %v3625
        %4083 = vmatpush.msra.mxu0 %v3621
        %4084 = vmatpush.msra.mxu0 %v3617
        %4085 = vmatpush.msra.mxu0 %v3613
        %4086 = vmatpush.msra.mxu0 %v3609
        %4087 = vmatmul.f32.gmra.mxu0 %v2774
        %v4088 = vpop.f32.mrf.mxu0
        %v4089 = vadd.f32 %v4069, %v4088
        %4090 = vdwg.mxu0
        %4091 = vmatpush.msra.mxu0 %v3733
        %4092 = vmatpush.msra.mxu0 %v3729
        %4093 = vmatpush.msra.mxu0 %v3725
        %4094 = vmatpush.msra.mxu0 %v3721
        %4095 = vmatpush.msra.mxu0 %v3717
        %4096 = vmatpush.msra.mxu0 %v3713
        %4097 = vmatpush.msra.mxu0 %v3709
        %4098 = vmatpush.msra.mxu0 %v3705
        %4099 = vmatpush.msra.mxu0 %v3701
        %4100 = vmatpush.msra.mxu0 %v3697
        %4101 = vmatpush.msra.mxu0 %v3693
        %4102 = vmatpush.msra.mxu0 %v3689
        %4103 = vmatpush.msra.mxu0 %v3685
        %4104 = vmatpush.msra.mxu0 %v3681
        %4105 = vmatpush.msra.mxu0 %v3677
        %4106 = vmatpush.msra.mxu0 %v3673
        %4107 = vmatmul.f32.gmra.mxu0 %v2775
        %v4108 = vpop.f32.mrf.mxu0
        %v4109 = vadd.f32 %v4089, %v4108
        %4110 = vdwg.mxu0
        %4111 = vmatpush.msra.mxu0 %v3797
        %4112 = vmatpush.msra.mxu0 %v3793
        %4113 = vmatpush.msra.mxu0 %v3789
        %4114 = vmatpush.msra.mxu0 %v3785
        %4115 = vmatpush.msra.mxu0 %v3781
        %4116 = vmatpush.msra.mxu0 %v3777
        %4117 = vmatpush.msra.mxu0 %v3773
        %4118 = vmatpush.msra.mxu0 %v3769
        %4119 = vmatpush.msra.mxu0 %v3765
        %4120 = vmatpush.msra.mxu0 %v3761
        %4121 = vmatpush.msra.mxu0 %v3757
        %4122 = vmatpush.msra.mxu0 %v3753
        %4123 = vmatpush.msra.mxu0 %v3749
        %4124 = vmatpush.msra.mxu0 %v3745
        %4125 = vmatpush.msra.mxu0 %v3741
        %4126 = vmatpush.msra.mxu0 %v3737
        %4127 = vmatmul.f32.gmra.mxu0 %v2776
        %v4128 = vpop.f32.mrf.mxu0
        %v4129 = vadd.f32 %v4109, %v4128
        %4130 = vdwg.mxu0
        %4131 = vmatpush.msra.mxu0 %v2838
        %4132 = vmatpush.msra.mxu0 %v2834
        %4133 = vmatpush.msra.mxu0 %v2830
        %4134 = vmatpush.msra.mxu0 %v2826
        %4135 = vmatpush.msra.mxu0 %v2822
        %4136 = vmatpush.msra.mxu0 %v2818
        %4137 = vmatpush.msra.mxu0 %v2814
        %4138 = vmatpush.msra.mxu0 %v2810
        %4139 = vmatpush.msra.mxu0 %v2806
        %4140 = vmatpush.msra.mxu0 %v2802
        %4141 = vmatpush.msra.mxu0 %v2798
        %4142 = vmatpush.msra.mxu0 %v2794
        %4143 = vmatpush.msra.mxu0 %v2790
        %4144 = vmatpush.msra.mxu0 %v2786
        %4145 = vmatpush.msra.mxu0 %v2782
        %4146 = vmatpush.msra.mxu0 %v2778
        %4147 = vmatmul.f32.gmra.mxu0 %v2761
        %v4148 = vpop.f32.mrf.mxu0
        %v4149 = vadd.f32 %v3804, %v4148
        %4150 = vdwg.mxu0
        %4151 = vmatpush.msra.mxu0 %v2902
        %4152 = vmatpush.msra.mxu0 %v2898
        %4153 = vmatpush.msra.mxu0 %v2894
        %4154 = vmatpush.msra.mxu0 %v2890
        %4155 = vmatpush.msra.mxu0 %v2886
        %4156 = vmatpush.msra.mxu0 %v2882
        %4157 = vmatpush.msra.mxu0 %v2878
        %4158 = vmatpush.msra.mxu0 %v2874
        %4159 = vmatpush.msra.mxu0 %v2870
        %4160 = vmatpush.msra.mxu0 %v2866
        %4161 = vmatpush.msra.mxu0 %v2862
        %4162 = vmatpush.msra.mxu0 %v2858
        %4163 = vmatpush.msra.mxu0 %v2854
        %4164 = vmatpush.msra.mxu0 %v2850
        %4165 = vmatpush.msra.mxu0 %v2846
        %4166 = vmatpush.msra.mxu0 %v2842
        %4167 = vmatmul.f32.gmra.mxu0 %v2762
        %v4168 = vpop.f32.mrf.mxu0
        %v4169 = vadd.f32 %v4149, %v4168
        %4170 = vdwg.mxu0
        %4171 = vmatpush.msra.mxu0 %v2966
        %4172 = vmatpush.msra.mxu0 %v2962
        %4173 = vmatpush.msra.mxu0 %v2958
        %4174 = vmatpush.msra.mxu0 %v2954
        %4175 = vmatpush.msra.mxu0 %v2950
        %4176 = vmatpush.msra.mxu0 %v2946
        %4177 = vmatpush.msra.mxu0 %v2942
        %4178 = vmatpush.msra.mxu0 %v2938
        %4179 = vmatpush.msra.mxu0 %v2934
        %4180 = vmatpush.msra.mxu0 %v2930
        %4181 = vmatpush.msra.mxu0 %v2926
        %4182 = vmatpush.msra.mxu0 %v2922
        %4183 = vmatpush.msra.mxu0 %v2918
        %4184 = vmatpush.msra.mxu0 %v2914
        %4185 = vmatpush.msra.mxu0 %v2910
        %4186 = vmatpush.msra.mxu0 %v2906
        %4187 = vmatmul.f32.gmra.mxu0 %v2763
        %v4188 = vpop.f32.mrf.mxu0
        %v4189 = vadd.f32 %v4169, %v4188
        %4190 = vdwg.mxu0
        %4191 = vmatpush.msra.mxu0 %v3030
        %4192 = vmatpush.msra.mxu0 %v3026
        %4193 = vmatpush.msra.mxu0 %v3022
        %4194 = vmatpush.msra.mxu0 %v3018
        %4195 = vmatpush.msra.mxu0 %v3014
        %4196 = vmatpush.msra.mxu0 %v3010
        %4197 = vmatpush.msra.mxu0 %v3006
        %4198 = vmatpush.msra.mxu0 %v3002
        %4199 = vmatpush.msra.mxu0 %v2998
        %4200 = vmatpush.msra.mxu0 %v2994
        %4201 = vmatpush.msra.mxu0 %v2990
        %4202 = vmatpush.msra.mxu0 %v2986
        %4203 = vmatpush.msra.mxu0 %v2982
        %4204 = vmatpush.msra.mxu0 %v2978
        %4205 = vmatpush.msra.mxu0 %v2974
        %4206 = vmatpush.msra.mxu0 %v2970
        %4207 = vmatmul.f32.gmra.mxu0 %v2764
        %v4208 = vpop.f32.mrf.mxu0
        %v4209 = vadd.f32 %v4189, %v4208
        %4210 = vdwg.mxu0
        %4211 = vmatpush.msra.mxu0 %v3094
        %4212 = vmatpush.msra.mxu0 %v3090
        %4213 = vmatpush.msra.mxu0 %v3086
        %4214 = vmatpush.msra.mxu0 %v3082
        %4215 = vmatpush.msra.mxu0 %v3078
        %4216 = vmatpush.msra.mxu0 %v3074
        %4217 = vmatpush.msra.mxu0 %v3070
        %4218 = vmatpush.msra.mxu0 %v3066
        %4219 = vmatpush.msra.mxu0 %v3062
        %4220 = vmatpush.msra.mxu0 %v3058
        %4221 = vmatpush.msra.mxu0 %v3054
        %4222 = vmatpush.msra.mxu0 %v3050
        %4223 = vmatpush.msra.mxu0 %v3046
        %4224 = vmatpush.msra.mxu0 %v3042
        %4225 = vmatpush.msra.mxu0 %v3038
        %4226 = vmatpush.msra.mxu0 %v3034
        %4227 = vmatmul.f32.gmra.mxu0 %v2765
        %v4228 = vpop.f32.mrf.mxu0
        %v4229 = vadd.f32 %v4209, %v4228
        %4230 = vdwg.mxu0
        %4231 = vmatpush.msra.mxu0 %v3158
        %4232 = vmatpush.msra.mxu0 %v3154
        %4233 = vmatpush.msra.mxu0 %v3150
        %4234 = vmatpush.msra.mxu0 %v3146
        %4235 = vmatpush.msra.mxu0 %v3142
        %4236 = vmatpush.msra.mxu0 %v3138
        %4237 = vmatpush.msra.mxu0 %v3134
        %4238 = vmatpush.msra.mxu0 %v3130
        %4239 = vmatpush.msra.mxu0 %v3126
        %4240 = vmatpush.msra.mxu0 %v3122
        %4241 = vmatpush.msra.mxu0 %v3118
        %4242 = vmatpush.msra.mxu0 %v3114
        %4243 = vmatpush.msra.mxu0 %v3110
        %4244 = vmatpush.msra.mxu0 %v3106
        %4245 = vmatpush.msra.mxu0 %v3102
        %4246 = vmatpush.msra.mxu0 %v3098
        %4247 = vmatmul.f32.gmra.mxu0 %v2766
        %v4248 = vpop.f32.mrf.mxu0
        %v4249 = vadd.f32 %v4229, %v4248
        %4250 = vdwg.mxu0
        %4251 = vmatpush.msra.mxu0 %v3222
        %4252 = vmatpush.msra.mxu0 %v3218
        %4253 = vmatpush.msra.mxu0 %v3214
        %4254 = vmatpush.msra.mxu0 %v3210
        %4255 = vmatpush.msra.mxu0 %v3206
        %4256 = vmatpush.msra.mxu0 %v3202
        %4257 = vmatpush.msra.mxu0 %v3198
        %4258 = vmatpush.msra.mxu0 %v3194
        %4259 = vmatpush.msra.mxu0 %v3190
        %4260 = vmatpush.msra.mxu0 %v3186
        %4261 = vmatpush.msra.mxu0 %v3182
        %4262 = vmatpush.msra.mxu0 %v3178
        %4263 = vmatpush.msra.mxu0 %v3174
        %4264 = vmatpush.msra.mxu0 %v3170
        %4265 = vmatpush.msra.mxu0 %v3166
        %4266 = vmatpush.msra.mxu0 %v3162
        %4267 = vmatmul.f32.gmra.mxu0 %v2767
        %v4268 = vpop.f32.mrf.mxu0
        %v4269 = vadd.f32 %v4249, %v4268
        %4270 = vdwg.mxu0
        %4271 = vmatpush.msra.mxu0 %v3286
        %4272 = vmatpush.msra.mxu0 %v3282
        %4273 = vmatpush.msra.mxu0 %v3278
        %4274 = vmatpush.msra.mxu0 %v3274
        %4275 = vmatpush.msra.mxu0 %v3270
        %4276 = vmatpush.msra.mxu0 %v3266
        %4277 = vmatpush.msra.mxu0 %v3262
        %4278 = vmatpush.msra.mxu0 %v3258
        %4279 = vmatpush.msra.mxu0 %v3254
        %4280 = vmatpush.msra.mxu0 %v3250
        %4281 = vmatpush.msra.mxu0 %v3246
        %4282 = vmatpush.msra.mxu0 %v3242
        %4283 = vmatpush.msra.mxu0 %v3238
        %4284 = vmatpush.msra.mxu0 %v3234
        %4285 = vmatpush.msra.mxu0 %v3230
        %4286 = vmatpush.msra.mxu0 %v3226
        %4287 = vmatmul.f32.gmra.mxu0 %v2768
        %v4288 = vpop.f32.mrf.mxu0
        %v4289 = vadd.f32 %v4269, %v4288
        %4290 = vdwg.mxu0
        %4291 = vmatpush.msra.mxu0 %v3350
        %4292 = vmatpush.msra.mxu0 %v3346
        %4293 = vmatpush.msra.mxu0 %v3342
        %4294 = vmatpush.msra.mxu0 %v3338
        %4295 = vmatpush.msra.mxu0 %v3334
        %4296 = vmatpush.msra.mxu0 %v3330
        %4297 = vmatpush.msra.mxu0 %v3326
        %4298 = vmatpush.msra.mxu0 %v3322
        %4299 = vmatpush.msra.mxu0 %v3318
        %4300 = vmatpush.msra.mxu0 %v3314
        %4301 = vmatpush.msra.mxu0 %v3310
        %4302 = vmatpush.msra.mxu0 %v3306
        %4303 = vmatpush.msra.mxu0 %v3302
        %4304 = vmatpush.msra.mxu0 %v3298
        %4305 = vmatpush.msra.mxu0 %v3294
        %4306 = vmatpush.msra.mxu0 %v3290
        %4307 = vmatmul.f32.gmra.mxu0 %v2769
        %v4308 = vpop.f32.mrf.mxu0
        %v4309 = vadd.f32 %v4289, %v4308
        %4310 = vdwg.mxu0
        %4311 = vmatpush.msra.mxu0 %v3414
        %4312 = vmatpush.msra.mxu0 %v3410
        %4313 = vmatpush.msra.mxu0 %v3406
        %4314 = vmatpush.msra.mxu0 %v3402
        %4315 = vmatpush.msra.mxu0 %v3398
        %4316 = vmatpush.msra.mxu0 %v3394
        %4317 = vmatpush.msra.mxu0 %v3390
        %4318 = vmatpush.msra.mxu0 %v3386
        %4319 = vmatpush.msra.mxu0 %v3382
        %4320 = vmatpush.msra.mxu0 %v3378
        %4321 = vmatpush.msra.mxu0 %v3374
        %4322 = vmatpush.msra.mxu0 %v3370
        %4323 = vmatpush.msra.mxu0 %v3366
        %4324 = vmatpush.msra.mxu0 %v3362
        %4325 = vmatpush.msra.mxu0 %v3358
        %4326 = vmatpush.msra.mxu0 %v3354
        %4327 = vmatmul.f32.gmra.mxu0 %v2770
        %v4328 = vpop.f32.mrf.mxu0
        %v4329 = vadd.f32 %v4309, %v4328
        %4330 = vdwg.mxu0
        %4331 = vmatpush.msra.mxu0 %v3478
        %4332 = vmatpush.msra.mxu0 %v3474
        %4333 = vmatpush.msra.mxu0 %v3470
        %4334 = vmatpush.msra.mxu0 %v3466
        %4335 = vmatpush.msra.mxu0 %v3462
        %4336 = vmatpush.msra.mxu0 %v3458
        %4337 = vmatpush.msra.mxu0 %v3454
        %4338 = vmatpush.msra.mxu0 %v3450
        %4339 = vmatpush.msra.mxu0 %v3446
        %4340 = vmatpush.msra.mxu0 %v3442
        %4341 = vmatpush.msra.mxu0 %v3438
        %4342 = vmatpush.msra.mxu0 %v3434
        %4343 = vmatpush.msra.mxu0 %v3430
        %4344 = vmatpush.msra.mxu0 %v3426
        %4345 = vmatpush.msra.mxu0 %v3422
        %4346 = vmatpush.msra.mxu0 %v3418
        %4347 = vmatmul.f32.gmra.mxu0 %v2771
        %v4348 = vpop.f32.mrf.mxu0
        %v4349 = vadd.f32 %v4329, %v4348
        %4350 = vdwg.mxu0
        %4351 = vmatpush.msra.mxu0 %v3542
        %4352 = vmatpush.msra.mxu0 %v3538
        %4353 = vmatpush.msra.mxu0 %v3534
        %4354 = vmatpush.msra.mxu0 %v3530
        %4355 = vmatpush.msra.mxu0 %v3526
        %4356 = vmatpush.msra.mxu0 %v3522
        %4357 = vmatpush.msra.mxu0 %v3518
        %4358 = vmatpush.msra.mxu0 %v3514
        %4359 = vmatpush.msra.mxu0 %v3510
        %4360 = vmatpush.msra.mxu0 %v3506
        %4361 = vmatpush.msra.mxu0 %v3502
        %4362 = vmatpush.msra.mxu0 %v3498
        %4363 = vmatpush.msra.mxu0 %v3494
        %4364 = vmatpush.msra.mxu0 %v3490
        %4365 = vmatpush.msra.mxu0 %v3486
        %4366 = vmatpush.msra.mxu0 %v3482
        %4367 = vmatmul.f32.gmra.mxu0 %v2772
        %v4368 = vpop.f32.mrf.mxu0
        %v4369 = vadd.f32 %v4349, %v4368
        %4370 = vdwg.mxu0
        %4371 = vmatpush.msra.mxu0 %v3606
        %4372 = vmatpush.msra.mxu0 %v3602
        %4373 = vmatpush.msra.mxu0 %v3598
        %4374 = vmatpush.msra.mxu0 %v3594
        %4375 = vmatpush.msra.mxu0 %v3590
        %4376 = vmatpush.msra.mxu0 %v3586
        %4377 = vmatpush.msra.mxu0 %v3582
        %4378 = vmatpush.msra.mxu0 %v3578
        %4379 = vmatpush.msra.mxu0 %v3574
        %4380 = vmatpush.msra.mxu0 %v3570
        %4381 = vmatpush.msra.mxu0 %v3566
        %4382 = vmatpush.msra.mxu0 %v3562
        %4383 = vmatpush.msra.mxu0 %v3558
        %4384 = vmatpush.msra.mxu0 %v3554
        %4385 = vmatpush.msra.mxu0 %v3550
        %4386 = vmatpush.msra.mxu0 %v3546
        %4387 = vmatmul.f32.gmra.mxu0 %v2773
        %v4388 = vpop.f32.mrf.mxu0
        %v4389 = vadd.f32 %v4369, %v4388
        %4390 = vdwg.mxu0
        %4391 = vmatpush.msra.mxu0 %v3670
        %4392 = vmatpush.msra.mxu0 %v3666
        %4393 = vmatpush.msra.mxu0 %v3662
        %4394 = vmatpush.msra.mxu0 %v3658
        %4395 = vmatpush.msra.mxu0 %v3654
        %4396 = vmatpush.msra.mxu0 %v3650
        %4397 = vmatpush.msra.mxu0 %v3646
        %4398 = vmatpush.msra.mxu0 %v3642
        %4399 = vmatpush.msra.mxu0 %v3638
        %4400 = vmatpush.msra.mxu0 %v3634
        %4401 = vmatpush.msra.mxu0 %v3630
        %4402 = vmatpush.msra.mxu0 %v3626
        %4403 = vmatpush.msra.mxu0 %v3622
        %4404 = vmatpush.msra.mxu0 %v3618
        %4405 = vmatpush.msra.mxu0 %v3614
        %4406 = vmatpush.msra.mxu0 %v3610
        %4407 = vmatmul.f32.gmra.mxu0 %v2774
        %v4408 = vpop.f32.mrf.mxu0
        %v4409 = vadd.f32 %v4389, %v4408
        %4410 = vdwg.mxu0
        %4411 = vmatpush.msra.mxu0 %v3734
        %4412 = vmatpush.msra.mxu0 %v3730
        %4413 = vmatpush.msra.mxu0 %v3726
        %4414 = vmatpush.msra.mxu0 %v3722
        %4415 = vmatpush.msra.mxu0 %v3718
        %4416 = vmatpush.msra.mxu0 %v3714
        %4417 = vmatpush.msra.mxu0 %v3710
        %4418 = vmatpush.msra.mxu0 %v3706
        %4419 = vmatpush.msra.mxu0 %v3702
        %4420 = vmatpush.msra.mxu0 %v3698
        %4421 = vmatpush.msra.mxu0 %v3694
        %4422 = vmatpush.msra.mxu0 %v3690
        %4423 = vmatpush.msra.mxu0 %v3686
        %4424 = vmatpush.msra.mxu0 %v3682
        %4425 = vmatpush.msra.mxu0 %v3678
        %4426 = vmatpush.msra.mxu0 %v3674
        %4427 = vmatmul.f32.gmra.mxu0 %v2775
        %v4428 = vpop.f32.mrf.mxu0
        %v4429 = vadd.f32 %v4409, %v4428
        %4430 = vdwg.mxu0
        %4431 = vmatpush.msra.mxu0 %v3798
        %4432 = vmatpush.msra.mxu0 %v3794
        %4433 = vmatpush.msra.mxu0 %v3790
        %4434 = vmatpush.msra.mxu0 %v3786
        %4435 = vmatpush.msra.mxu0 %v3782
        %4436 = vmatpush.msra.mxu0 %v3778
        %4437 = vmatpush.msra.mxu0 %v3774
        %4438 = vmatpush.msra.mxu0 %v3770
        %4439 = vmatpush.msra.mxu0 %v3766
        %4440 = vmatpush.msra.mxu0 %v3762
        %4441 = vmatpush.msra.mxu0 %v3758
        %4442 = vmatpush.msra.mxu0 %v3754
        %4443 = vmatpush.msra.mxu0 %v3750
        %4444 = vmatpush.msra.mxu0 %v3746
        %4445 = vmatpush.msra.mxu0 %v3742
        %4446 = vmatpush.msra.mxu0 %v3738
        %4447 = vmatmul.f32.gmra.mxu0 %v2776
        %v4448 = vpop.f32.mrf.mxu0
        %v4449 = vadd.f32 %v4429, %v4448
        %4450 = vdwg.mxu0
        %4451 = vmatpush.msra.mxu0 %v2839
        %4452 = vmatpush.msra.mxu0 %v2835
        %4453 = vmatpush.msra.mxu0 %v2831
        %4454 = vmatpush.msra.mxu0 %v2827
        %4455 = vmatpush.msra.mxu0 %v2823
        %4456 = vmatpush.msra.mxu0 %v2819
        %4457 = vmatpush.msra.mxu0 %v2815
        %4458 = vmatpush.msra.mxu0 %v2811
        %4459 = vmatpush.msra.mxu0 %v2807
        %4460 = vmatpush.msra.mxu0 %v2803
        %4461 = vmatpush.msra.mxu0 %v2799
        %4462 = vmatpush.msra.mxu0 %v2795
        %4463 = vmatpush.msra.mxu0 %v2791
        %4464 = vmatpush.msra.mxu0 %v2787
        %4465 = vmatpush.msra.mxu0 %v2783
        %4466 = vmatpush.msra.mxu0 %v2779
        %4467 = vmatmul.f32.gmra.mxu0 %v2761
        %v4468 = vpop.f32.mrf.mxu0
        %v4469 = vadd.f32 %v3805, %v4468
        %4470 = vdwg.mxu0
        %4471 = vmatpush.msra.mxu0 %v2903
        %4472 = vmatpush.msra.mxu0 %v2899
        %4473 = vmatpush.msra.mxu0 %v2895
        %4474 = vmatpush.msra.mxu0 %v2891
        %4475 = vmatpush.msra.mxu0 %v2887
        %4476 = vmatpush.msra.mxu0 %v2883
        %4477 = vmatpush.msra.mxu0 %v2879
        %4478 = vmatpush.msra.mxu0 %v2875
        %4479 = vmatpush.msra.mxu0 %v2871
        %4480 = vmatpush.msra.mxu0 %v2867
        %4481 = vmatpush.msra.mxu0 %v2863
        %4482 = vmatpush.msra.mxu0 %v2859
        %4483 = vmatpush.msra.mxu0 %v2855
        %4484 = vmatpush.msra.mxu0 %v2851
        %4485 = vmatpush.msra.mxu0 %v2847
        %4486 = vmatpush.msra.mxu0 %v2843
        %4487 = vmatmul.f32.gmra.mxu0 %v2762
        %v4488 = vpop.f32.mrf.mxu0
        %v4489 = vadd.f32 %v4469, %v4488
        %4490 = vdwg.mxu0
        %4491 = vmatpush.msra.mxu0 %v2967
        %4492 = vmatpush.msra.mxu0 %v2963
        %4493 = vmatpush.msra.mxu0 %v2959
        %4494 = vmatpush.msra.mxu0 %v2955
        %4495 = vmatpush.msra.mxu0 %v2951
        %4496 = vmatpush.msra.mxu0 %v2947
        %4497 = vmatpush.msra.mxu0 %v2943
        %4498 = vmatpush.msra.mxu0 %v2939
        %4499 = vmatpush.msra.mxu0 %v2935
        %4500 = vmatpush.msra.mxu0 %v2931
        %4501 = vmatpush.msra.mxu0 %v2927
        %4502 = vmatpush.msra.mxu0 %v2923
        %4503 = vmatpush.msra.mxu0 %v2919
        %4504 = vmatpush.msra.mxu0 %v2915
        %4505 = vmatpush.msra.mxu0 %v2911
        %4506 = vmatpush.msra.mxu0 %v2907
        %4507 = vmatmul.f32.gmra.mxu0 %v2763
        %v4508 = vpop.f32.mrf.mxu0
        %v4509 = vadd.f32 %v4489, %v4508
        %4510 = vdwg.mxu0
        %4511 = vmatpush.msra.mxu0 %v3031
        %4512 = vmatpush.msra.mxu0 %v3027
        %4513 = vmatpush.msra.mxu0 %v3023
        %4514 = vmatpush.msra.mxu0 %v3019
        %4515 = vmatpush.msra.mxu0 %v3015
        %4516 = vmatpush.msra.mxu0 %v3011
        %4517 = vmatpush.msra.mxu0 %v3007
        %4518 = vmatpush.msra.mxu0 %v3003
        %4519 = vmatpush.msra.mxu0 %v2999
        %4520 = vmatpush.msra.mxu0 %v2995
        %4521 = vmatpush.msra.mxu0 %v2991
        %4522 = vmatpush.msra.mxu0 %v2987
        %4523 = vmatpush.msra.mxu0 %v2983
        %4524 = vmatpush.msra.mxu0 %v2979
        %4525 = vmatpush.msra.mxu0 %v2975
        %4526 = vmatpush.msra.mxu0 %v2971
        %4527 = vmatmul.f32.gmra.mxu0 %v2764
        %v4528 = vpop.f32.mrf.mxu0
        %v4529 = vadd.f32 %v4509, %v4528
        %4530 = vdwg.mxu0
        %4531 = vmatpush.msra.mxu0 %v3095
        %4532 = vmatpush.msra.mxu0 %v3091
        %4533 = vmatpush.msra.mxu0 %v3087
        %4534 = vmatpush.msra.mxu0 %v3083
        %4535 = vmatpush.msra.mxu0 %v3079
        %4536 = vmatpush.msra.mxu0 %v3075
        %4537 = vmatpush.msra.mxu0 %v3071
        %4538 = vmatpush.msra.mxu0 %v3067
        %4539 = vmatpush.msra.mxu0 %v3063
        %4540 = vmatpush.msra.mxu0 %v3059
        %4541 = vmatpush.msra.mxu0 %v3055
        %4542 = vmatpush.msra.mxu0 %v3051
        %4543 = vmatpush.msra.mxu0 %v3047
        %4544 = vmatpush.msra.mxu0 %v3043
        %4545 = vmatpush.msra.mxu0 %v3039
        %4546 = vmatpush.msra.mxu0 %v3035
        %4547 = vmatmul.f32.gmra.mxu0 %v2765
        %v4548 = vpop.f32.mrf.mxu0
        %v4549 = vadd.f32 %v4529, %v4548
        %4550 = vdwg.mxu0
        %4551 = vmatpush.msra.mxu0 %v3159
        %4552 = vmatpush.msra.mxu0 %v3155
        %4553 = vmatpush.msra.mxu0 %v3151
        %4554 = vmatpush.msra.mxu0 %v3147
        %4555 = vmatpush.msra.mxu0 %v3143
        %4556 = vmatpush.msra.mxu0 %v3139
        %4557 = vmatpush.msra.mxu0 %v3135
        %4558 = vmatpush.msra.mxu0 %v3131
        %4559 = vmatpush.msra.mxu0 %v3127
        %4560 = vmatpush.msra.mxu0 %v3123
        %4561 = vmatpush.msra.mxu0 %v3119
        %4562 = vmatpush.msra.mxu0 %v3115
        %4563 = vmatpush.msra.mxu0 %v3111
        %4564 = vmatpush.msra.mxu0 %v3107
        %4565 = vmatpush.msra.mxu0 %v3103
        %4566 = vmatpush.msra.mxu0 %v3099
        %4567 = vmatmul.f32.gmra.mxu0 %v2766
        %v4568 = vpop.f32.mrf.mxu0
        %v4569 = vadd.f32 %v4549, %v4568
        %4570 = vdwg.mxu0
        %4571 = vmatpush.msra.mxu0 %v3223
        %4572 = vmatpush.msra.mxu0 %v3219
        %4573 = vmatpush.msra.mxu0 %v3215
        %4574 = vmatpush.msra.mxu0 %v3211
        %4575 = vmatpush.msra.mxu0 %v3207
        %4576 = vmatpush.msra.mxu0 %v3203
        %4577 = vmatpush.msra.mxu0 %v3199
        %4578 = vmatpush.msra.mxu0 %v3195
        %4579 = vmatpush.msra.mxu0 %v3191
        %4580 = vmatpush.msra.mxu0 %v3187
        %4581 = vmatpush.msra.mxu0 %v3183
        %4582 = vmatpush.msra.mxu0 %v3179
        %4583 = vmatpush.msra.mxu0 %v3175
        %4584 = vmatpush.msra.mxu0 %v3171
        %4585 = vmatpush.msra.mxu0 %v3167
        %4586 = vmatpush.msra.mxu0 %v3163
        %4587 = vmatmul.f32.gmra.mxu0 %v2767
        %v4588 = vpop.f32.mrf.mxu0
        %v4589 = vadd.f32 %v4569, %v4588
        %4590 = vdwg.mxu0
        %4591 = vmatpush.msra.mxu0 %v3287
        %4592 = vmatpush.msra.mxu0 %v3283
        %4593 = vmatpush.msra.mxu0 %v3279
        %4594 = vmatpush.msra.mxu0 %v3275
        %4595 = vmatpush.msra.mxu0 %v3271
        %4596 = vmatpush.msra.mxu0 %v3267
        %4597 = vmatpush.msra.mxu0 %v3263
        %4598 = vmatpush.msra.mxu0 %v3259
        %4599 = vmatpush.msra.mxu0 %v3255
        %4600 = vmatpush.msra.mxu0 %v3251
        %4601 = vmatpush.msra.mxu0 %v3247
        %4602 = vmatpush.msra.mxu0 %v3243
        %4603 = vmatpush.msra.mxu0 %v3239
        %4604 = vmatpush.msra.mxu0 %v3235
        %4605 = vmatpush.msra.mxu0 %v3231
        %4606 = vmatpush.msra.mxu0 %v3227
        %4607 = vmatmul.f32.gmra.mxu0 %v2768
        %v4608 = vpop.f32.mrf.mxu0
        %v4609 = vadd.f32 %v4589, %v4608
        %4610 = vdwg.mxu0
        %4611 = vmatpush.msra.mxu0 %v3351
        %4612 = vmatpush.msra.mxu0 %v3347
        %4613 = vmatpush.msra.mxu0 %v3343
        %4614 = vmatpush.msra.mxu0 %v3339
        %4615 = vmatpush.msra.mxu0 %v3335
        %4616 = vmatpush.msra.mxu0 %v3331
        %4617 = vmatpush.msra.mxu0 %v3327
        %4618 = vmatpush.msra.mxu0 %v3323
        %4619 = vmatpush.msra.mxu0 %v3319
        %4620 = vmatpush.msra.mxu0 %v3315
        %4621 = vmatpush.msra.mxu0 %v3311
        %4622 = vmatpush.msra.mxu0 %v3307
        %4623 = vmatpush.msra.mxu0 %v3303
        %4624 = vmatpush.msra.mxu0 %v3299
        %4625 = vmatpush.msra.mxu0 %v3295
        %4626 = vmatpush.msra.mxu0 %v3291
        %4627 = vmatmul.f32.gmra.mxu0 %v2769
        %v4628 = vpop.f32.mrf.mxu0
        %v4629 = vadd.f32 %v4609, %v4628
        %4630 = vdwg.mxu0
        %4631 = vmatpush.msra.mxu0 %v3415
        %4632 = vmatpush.msra.mxu0 %v3411
        %4633 = vmatpush.msra.mxu0 %v3407
        %4634 = vmatpush.msra.mxu0 %v3403
        %4635 = vmatpush.msra.mxu0 %v3399
        %4636 = vmatpush.msra.mxu0 %v3395
        %4637 = vmatpush.msra.mxu0 %v3391
        %4638 = vmatpush.msra.mxu0 %v3387
        %4639 = vmatpush.msra.mxu0 %v3383
        %4640 = vmatpush.msra.mxu0 %v3379
        %4641 = vmatpush.msra.mxu0 %v3375
        %4642 = vmatpush.msra.mxu0 %v3371
        %4643 = vmatpush.msra.mxu0 %v3367
        %4644 = vmatpush.msra.mxu0 %v3363
        %4645 = vmatpush.msra.mxu0 %v3359
        %4646 = vmatpush.msra.mxu0 %v3355
        %4647 = vmatmul.f32.gmra.mxu0 %v2770
        %v4648 = vpop.f32.mrf.mxu0
        %v4649 = vadd.f32 %v4629, %v4648
        %4650 = vdwg.mxu0
        %4651 = vmatpush.msra.mxu0 %v3479
        %4652 = vmatpush.msra.mxu0 %v3475
        %4653 = vmatpush.msra.mxu0 %v3471
        %4654 = vmatpush.msra.mxu0 %v3467
        %4655 = vmatpush.msra.mxu0 %v3463
        %4656 = vmatpush.msra.mxu0 %v3459
        %4657 = vmatpush.msra.mxu0 %v3455
        %4658 = vmatpush.msra.mxu0 %v3451
        %4659 = vmatpush.msra.mxu0 %v3447
        %4660 = vmatpush.msra.mxu0 %v3443
        %4661 = vmatpush.msra.mxu0 %v3439
        %4662 = vmatpush.msra.mxu0 %v3435
        %4663 = vmatpush.msra.mxu0 %v3431
        %4664 = vmatpush.msra.mxu0 %v3427
        %4665 = vmatpush.msra.mxu0 %v3423
        %4666 = vmatpush.msra.mxu0 %v3419
        %4667 = vmatmul.f32.gmra.mxu0 %v2771
        %v4668 = vpop.f32.mrf.mxu0
        %v4669 = vadd.f32 %v4649, %v4668
        %4670 = vdwg.mxu0
        %4671 = vmatpush.msra.mxu0 %v3543
        %4672 = vmatpush.msra.mxu0 %v3539
        %4673 = vmatpush.msra.mxu0 %v3535
        %4674 = vmatpush.msra.mxu0 %v3531
        %4675 = vmatpush.msra.mxu0 %v3527
        %4676 = vmatpush.msra.mxu0 %v3523
        %4677 = vmatpush.msra.mxu0 %v3519
        %4678 = vmatpush.msra.mxu0 %v3515
        %4679 = vmatpush.msra.mxu0 %v3511
        %4680 = vmatpush.msra.mxu0 %v3507
        %4681 = vmatpush.msra.mxu0 %v3503
        %4682 = vmatpush.msra.mxu0 %v3499
        %4683 = vmatpush.msra.mxu0 %v3495
        %4684 = vmatpush.msra.mxu0 %v3491
        %4685 = vmatpush.msra.mxu0 %v3487
        %4686 = vmatpush.msra.mxu0 %v3483
        %4687 = vmatmul.f32.gmra.mxu0 %v2772
        %v4688 = vpop.f32.mrf.mxu0
        %v4689 = vadd.f32 %v4669, %v4688
        %4690 = vdwg.mxu0
        %4691 = vmatpush.msra.mxu0 %v3607
        %4692 = vmatpush.msra.mxu0 %v3603
        %4693 = vmatpush.msra.mxu0 %v3599
        %4694 = vmatpush.msra.mxu0 %v3595
        %4695 = vmatpush.msra.mxu0 %v3591
        %4696 = vmatpush.msra.mxu0 %v3587
        %4697 = vmatpush.msra.mxu0 %v3583
        %4698 = vmatpush.msra.mxu0 %v3579
        %4699 = vmatpush.msra.mxu0 %v3575
        %4700 = vmatpush.msra.mxu0 %v3571
        %4701 = vmatpush.msra.mxu0 %v3567
        %4702 = vmatpush.msra.mxu0 %v3563
        %4703 = vmatpush.msra.mxu0 %v3559
        %4704 = vmatpush.msra.mxu0 %v3555
        %4705 = vmatpush.msra.mxu0 %v3551
        %4706 = vmatpush.msra.mxu0 %v3547
        %4707 = vmatmul.f32.gmra.mxu0 %v2773
        %v4708 = vpop.f32.mrf.mxu0
        %v4709 = vadd.f32 %v4689, %v4708
        %4710 = vdwg.mxu0
        %4711 = vmatpush.msra.mxu0 %v3671
        %4712 = vmatpush.msra.mxu0 %v3667
        %4713 = vmatpush.msra.mxu0 %v3663
        %4714 = vmatpush.msra.mxu0 %v3659
        %4715 = vmatpush.msra.mxu0 %v3655
        %4716 = vmatpush.msra.mxu0 %v3651
        %4717 = vmatpush.msra.mxu0 %v3647
        %4718 = vmatpush.msra.mxu0 %v3643
        %4719 = vmatpush.msra.mxu0 %v3639
        %4720 = vmatpush.msra.mxu0 %v3635
        %4721 = vmatpush.msra.mxu0 %v3631
        %4722 = vmatpush.msra.mxu0 %v3627
        %4723 = vmatpush.msra.mxu0 %v3623
        %4724 = vmatpush.msra.mxu0 %v3619
        %4725 = vmatpush.msra.mxu0 %v3615
        %4726 = vmatpush.msra.mxu0 %v3611
        %4727 = vmatmul.f32.gmra.mxu0 %v2774
        %v4728 = vpop.f32.mrf.mxu0
        %v4729 = vadd.f32 %v4709, %v4728
        %4730 = vdwg.mxu0
        %4731 = vmatpush.msra.mxu0 %v3735
        %4732 = vmatpush.msra.mxu0 %v3731
        %4733 = vmatpush.msra.mxu0 %v3727
        %4734 = vmatpush.msra.mxu0 %v3723
        %4735 = vmatpush.msra.mxu0 %v3719
        %4736 = vmatpush.msra.mxu0 %v3715
        %4737 = vmatpush.msra.mxu0 %v3711
        %4738 = vmatpush.msra.mxu0 %v3707
        %4739 = vmatpush.msra.mxu0 %v3703
        %4740 = vmatpush.msra.mxu0 %v3699
        %4741 = vmatpush.msra.mxu0 %v3695
        %4742 = vmatpush.msra.mxu0 %v3691
        %4743 = vmatpush.msra.mxu0 %v3687
        %4744 = vmatpush.msra.mxu0 %v3683
        %4745 = vmatpush.msra.mxu0 %v3679
        %4746 = vmatpush.msra.mxu0 %v3675
        %4747 = vmatmul.f32.gmra.mxu0 %v2775
        %v4748 = vpop.f32.mrf.mxu0
        %v4749 = vadd.f32 %v4729, %v4748
        %4750 = vdwg.mxu0
        %4751 = vmatpush.msra.mxu0 %v3799
        %4752 = vmatpush.msra.mxu0 %v3795
        %4753 = vmatpush.msra.mxu0 %v3791
        %4754 = vmatpush.msra.mxu0 %v3787
        %4755 = vmatpush.msra.mxu0 %v3783
        %4756 = vmatpush.msra.mxu0 %v3779
        %4757 = vmatpush.msra.mxu0 %v3775
        %4758 = vmatpush.msra.mxu0 %v3771
        %4759 = vmatpush.msra.mxu0 %v3767
        %4760 = vmatpush.msra.mxu0 %v3763
        %4761 = vmatpush.msra.mxu0 %v3759
        %4762 = vmatpush.msra.mxu0 %v3755
        %4763 = vmatpush.msra.mxu0 %v3751
        %4764 = vmatpush.msra.mxu0 %v3747
        %4765 = vmatpush.msra.mxu0 %v3743
        %4766 = vmatpush.msra.mxu0 %v3739
        %4767 = vmatmul.f32.gmra.mxu0 %v2776
        %v4768 = vpop.f32.mrf.mxu0
        %v4769 = vadd.f32 %v4749, %v4768
        %4770 = vdwg.mxu0
        %4771 = vmatpush.msra.mxu0 %v2840
        %4772 = vmatpush.msra.mxu0 %v2836
        %4773 = vmatpush.msra.mxu0 %v2832
        %4774 = vmatpush.msra.mxu0 %v2828
        %4775 = vmatpush.msra.mxu0 %v2824
        %4776 = vmatpush.msra.mxu0 %v2820
        %4777 = vmatpush.msra.mxu0 %v2816
        %4778 = vmatpush.msra.mxu0 %v2812
        %4779 = vmatpush.msra.mxu0 %v2808
        %4780 = vmatpush.msra.mxu0 %v2804
        %4781 = vmatpush.msra.mxu0 %v2800
        %4782 = vmatpush.msra.mxu0 %v2796
        %4783 = vmatpush.msra.mxu0 %v2792
        %4784 = vmatpush.msra.mxu0 %v2788
        %4785 = vmatpush.msra.mxu0 %v2784
        %4786 = vmatpush.msra.mxu0 %v2780
        %4787 = vmatmul.f32.gmra.mxu0 %v2761
        %v4788 = vpop.f32.mrf.mxu0
        %v4789 = vadd.f32 %v3806, %v4788
        %4790 = vdwg.mxu0
        %4791 = vmatpush.msra.mxu0 %v2904
        %4792 = vmatpush.msra.mxu0 %v2900
        %4793 = vmatpush.msra.mxu0 %v2896
        %4794 = vmatpush.msra.mxu0 %v2892
        %4795 = vmatpush.msra.mxu0 %v2888
        %4796 = vmatpush.msra.mxu0 %v2884
        %4797 = vmatpush.msra.mxu0 %v2880
        %4798 = vmatpush.msra.mxu0 %v2876
        %4799 = vmatpush.msra.mxu0 %v2872
        %4800 = vmatpush.msra.mxu0 %v2868
        %4801 = vmatpush.msra.mxu0 %v2864
        %4802 = vmatpush.msra.mxu0 %v2860
        %4803 = vmatpush.msra.mxu0 %v2856
        %4804 = vmatpush.msra.mxu0 %v2852
        %4805 = vmatpush.msra.mxu0 %v2848
        %4806 = vmatpush.msra.mxu0 %v2844
        %4807 = vmatmul.f32.gmra.mxu0 %v2762
        %v4808 = vpop.f32.mrf.mxu0
        %v4809 = vadd.f32 %v4789, %v4808
        %4810 = vdwg.mxu0
        %4811 = vmatpush.msra.mxu0 %v2968
        %4812 = vmatpush.msra.mxu0 %v2964
        %4813 = vmatpush.msra.mxu0 %v2960
        %4814 = vmatpush.msra.mxu0 %v2956
        %4815 = vmatpush.msra.mxu0 %v2952
        %4816 = vmatpush.msra.mxu0 %v2948
        %4817 = vmatpush.msra.mxu0 %v2944
        %4818 = vmatpush.msra.mxu0 %v2940
        %4819 = vmatpush.msra.mxu0 %v2936
        %4820 = vmatpush.msra.mxu0 %v2932
        %4821 = vmatpush.msra.mxu0 %v2928
        %4822 = vmatpush.msra.mxu0 %v2924
        %4823 = vmatpush.msra.mxu0 %v2920
        %4824 = vmatpush.msra.mxu0 %v2916
        %4825 = vmatpush.msra.mxu0 %v2912
        %4826 = vmatpush.msra.mxu0 %v2908
        %4827 = vmatmul.f32.gmra.mxu0 %v2763
        %v4828 = vpop.f32.mrf.mxu0
        %v4829 = vadd.f32 %v4809, %v4828
        %4830 = vdwg.mxu0
        %4831 = vmatpush.msra.mxu0 %v3032
        %4832 = vmatpush.msra.mxu0 %v3028
        %4833 = vmatpush.msra.mxu0 %v3024
        %4834 = vmatpush.msra.mxu0 %v3020
        %4835 = vmatpush.msra.mxu0 %v3016
        %4836 = vmatpush.msra.mxu0 %v3012
        %4837 = vmatpush.msra.mxu0 %v3008
        %4838 = vmatpush.msra.mxu0 %v3004
        %4839 = vmatpush.msra.mxu0 %v3000
        %4840 = vmatpush.msra.mxu0 %v2996
        %4841 = vmatpush.msra.mxu0 %v2992
        %4842 = vmatpush.msra.mxu0 %v2988
        %4843 = vmatpush.msra.mxu0 %v2984
        %4844 = vmatpush.msra.mxu0 %v2980
        %4845 = vmatpush.msra.mxu0 %v2976
        %4846 = vmatpush.msra.mxu0 %v2972
        %4847 = vmatmul.f32.gmra.mxu0 %v2764
        %v4848 = vpop.f32.mrf.mxu0
        %v4849 = vadd.f32 %v4829, %v4848
        %4850 = vdwg.mxu0
        %4851 = vmatpush.msra.mxu0 %v3096
        %4852 = vmatpush.msra.mxu0 %v3092
        %4853 = vmatpush.msra.mxu0 %v3088
        %4854 = vmatpush.msra.mxu0 %v3084
        %4855 = vmatpush.msra.mxu0 %v3080
        %4856 = vmatpush.msra.mxu0 %v3076
        %4857 = vmatpush.msra.mxu0 %v3072
        %4858 = vmatpush.msra.mxu0 %v3068
        %4859 = vmatpush.msra.mxu0 %v3064
        %4860 = vmatpush.msra.mxu0 %v3060
        %4861 = vmatpush.msra.mxu0 %v3056
        %4862 = vmatpush.msra.mxu0 %v3052
        %4863 = vmatpush.msra.mxu0 %v3048
        %4864 = vmatpush.msra.mxu0 %v3044
        %4865 = vmatpush.msra.mxu0 %v3040
        %4866 = vmatpush.msra.mxu0 %v3036
        %4867 = vmatmul.f32.gmra.mxu0 %v2765
        %v4868 = vpop.f32.mrf.mxu0
        %v4869 = vadd.f32 %v4849, %v4868
        %4870 = vdwg.mxu0
        %4871 = vmatpush.msra.mxu0 %v3160
        %4872 = vmatpush.msra.mxu0 %v3156
        %4873 = vmatpush.msra.mxu0 %v3152
        %4874 = vmatpush.msra.mxu0 %v3148
        %4875 = vmatpush.msra.mxu0 %v3144
        %4876 = vmatpush.msra.mxu0 %v3140
        %4877 = vmatpush.msra.mxu0 %v3136
        %4878 = vmatpush.msra.mxu0 %v3132
        %4879 = vmatpush.msra.mxu0 %v3128
        %4880 = vmatpush.msra.mxu0 %v3124
        %4881 = vmatpush.msra.mxu0 %v3120
        %4882 = vmatpush.msra.mxu0 %v3116
        %4883 = vmatpush.msra.mxu0 %v3112
        %4884 = vmatpush.msra.mxu0 %v3108
        %4885 = vmatpush.msra.mxu0 %v3104
        %4886 = vmatpush.msra.mxu0 %v3100
        %4887 = vmatmul.f32.gmra.mxu0 %v2766
        %v4888 = vpop.f32.mrf.mxu0
        %v4889 = vadd.f32 %v4869, %v4888
        %4890 = vdwg.mxu0
        %4891 = vmatpush.msra.mxu0 %v3224
        %4892 = vmatpush.msra.mxu0 %v3220
        %4893 = vmatpush.msra.mxu0 %v3216
        %4894 = vmatpush.msra.mxu0 %v3212
        %4895 = vmatpush.msra.mxu0 %v3208
        %4896 = vmatpush.msra.mxu0 %v3204
        %4897 = vmatpush.msra.mxu0 %v3200
        %4898 = vmatpush.msra.mxu0 %v3196
        %4899 = vmatpush.msra.mxu0 %v3192
        %4900 = vmatpush.msra.mxu0 %v3188
        %4901 = vmatpush.msra.mxu0 %v3184
        %4902 = vmatpush.msra.mxu0 %v3180
        %4903 = vmatpush.msra.mxu0 %v3176
        %4904 = vmatpush.msra.mxu0 %v3172
        %4905 = vmatpush.msra.mxu0 %v3168
        %4906 = vmatpush.msra.mxu0 %v3164
        %4907 = vmatmul.f32.gmra.mxu0 %v2767
        %v4908 = vpop.f32.mrf.mxu0
        %v4909 = vadd.f32 %v4889, %v4908
        %4910 = vdwg.mxu0
        %4911 = vmatpush.msra.mxu0 %v3288
        %4912 = vmatpush.msra.mxu0 %v3284
        %4913 = vmatpush.msra.mxu0 %v3280
        %4914 = vmatpush.msra.mxu0 %v3276
        %4915 = vmatpush.msra.mxu0 %v3272
        %4916 = vmatpush.msra.mxu0 %v3268
        %4917 = vmatpush.msra.mxu0 %v3264
        %4918 = vmatpush.msra.mxu0 %v3260
        %4919 = vmatpush.msra.mxu0 %v3256
        %4920 = vmatpush.msra.mxu0 %v3252
        %4921 = vmatpush.msra.mxu0 %v3248
        %4922 = vmatpush.msra.mxu0 %v3244
        %4923 = vmatpush.msra.mxu0 %v3240
        %4924 = vmatpush.msra.mxu0 %v3236
        %4925 = vmatpush.msra.mxu0 %v3232
        %4926 = vmatpush.msra.mxu0 %v3228
        %4927 = vmatmul.f32.gmra.mxu0 %v2768
        %v4928 = vpop.f32.mrf.mxu0
        %v4929 = vadd.f32 %v4909, %v4928
        %4930 = vdwg.mxu0
        %4931 = vmatpush.msra.mxu0 %v3352
        %4932 = vmatpush.msra.mxu0 %v3348
        %4933 = vmatpush.msra.mxu0 %v3344
        %4934 = vmatpush.msra.mxu0 %v3340
        %4935 = vmatpush.msra.mxu0 %v3336
        %4936 = vmatpush.msra.mxu0 %v3332
        %4937 = vmatpush.msra.mxu0 %v3328
        %4938 = vmatpush.msra.mxu0 %v3324
        %4939 = vmatpush.msra.mxu0 %v3320
        %4940 = vmatpush.msra.mxu0 %v3316
        %4941 = vmatpush.msra.mxu0 %v3312
        %4942 = vmatpush.msra.mxu0 %v3308
        %4943 = vmatpush.msra.mxu0 %v3304
        %4944 = vmatpush.msra.mxu0 %v3300
        %4945 = vmatpush.msra.mxu0 %v3296
        %4946 = vmatpush.msra.mxu0 %v3292
        %4947 = vmatmul.f32.gmra.mxu0 %v2769
        %v4948 = vpop.f32.mrf.mxu0
        %v4949 = vadd.f32 %v4929, %v4948
        %4950 = vdwg.mxu0
        %4951 = vmatpush.msra.mxu0 %v3416
        %4952 = vmatpush.msra.mxu0 %v3412
        %4953 = vmatpush.msra.mxu0 %v3408
        %4954 = vmatpush.msra.mxu0 %v3404
        %4955 = vmatpush.msra.mxu0 %v3400
        %4956 = vmatpush.msra.mxu0 %v3396
        %4957 = vmatpush.msra.mxu0 %v3392
        %4958 = vmatpush.msra.mxu0 %v3388
        %4959 = vmatpush.msra.mxu0 %v3384
        %4960 = vmatpush.msra.mxu0 %v3380
        %4961 = vmatpush.msra.mxu0 %v3376
        %4962 = vmatpush.msra.mxu0 %v3372
        %4963 = vmatpush.msra.mxu0 %v3368
        %4964 = vmatpush.msra.mxu0 %v3364
        %4965 = vmatpush.msra.mxu0 %v3360
        %4966 = vmatpush.msra.mxu0 %v3356
        %4967 = vmatmul.f32.gmra.mxu0 %v2770
        %v4968 = vpop.f32.mrf.mxu0
        %v4969 = vadd.f32 %v4949, %v4968
        %4970 = vdwg.mxu0
        %4971 = vmatpush.msra.mxu0 %v3480
        %4972 = vmatpush.msra.mxu0 %v3476
        %4973 = vmatpush.msra.mxu0 %v3472
        %4974 = vmatpush.msra.mxu0 %v3468
        %4975 = vmatpush.msra.mxu0 %v3464
        %4976 = vmatpush.msra.mxu0 %v3460
        %4977 = vmatpush.msra.mxu0 %v3456
        %4978 = vmatpush.msra.mxu0 %v3452
        %4979 = vmatpush.msra.mxu0 %v3448
        %4980 = vmatpush.msra.mxu0 %v3444
        %4981 = vmatpush.msra.mxu0 %v3440
        %4982 = vmatpush.msra.mxu0 %v3436
        %4983 = vmatpush.msra.mxu0 %v3432
        %4984 = vmatpush.msra.mxu0 %v3428
        %4985 = vmatpush.msra.mxu0 %v3424
        %4986 = vmatpush.msra.mxu0 %v3420
        %4987 = vmatmul.f32.gmra.mxu0 %v2771
        %v4988 = vpop.f32.mrf.mxu0
        %v4989 = vadd.f32 %v4969, %v4988
        %4990 = vdwg.mxu0
        %4991 = vmatpush.msra.mxu0 %v3544
        %4992 = vmatpush.msra.mxu0 %v3540
        %4993 = vmatpush.msra.mxu0 %v3536
        %4994 = vmatpush.msra.mxu0 %v3532
        %4995 = vmatpush.msra.mxu0 %v3528
        %4996 = vmatpush.msra.mxu0 %v3524
        %4997 = vmatpush.msra.mxu0 %v3520
        %4998 = vmatpush.msra.mxu0 %v3516
        %4999 = vmatpush.msra.mxu0 %v3512
        %5000 = vmatpush.msra.mxu0 %v3508
        %5001 = vmatpush.msra.mxu0 %v3504
        %5002 = vmatpush.msra.mxu0 %v3500
        %5003 = vmatpush.msra.mxu0 %v3496
        %5004 = vmatpush.msra.mxu0 %v3492
        %5005 = vmatpush.msra.mxu0 %v3488
        %5006 = vmatpush.msra.mxu0 %v3484
        %5007 = vmatmul.f32.gmra.mxu0 %v2772
        %v5008 = vpop.f32.mrf.mxu0
        %v5009 = vadd.f32 %v4989, %v5008
        %5010 = vdwg.mxu0
        %5011 = vmatpush.msra.mxu0 %v3608
        %5012 = vmatpush.msra.mxu0 %v3604
        %5013 = vmatpush.msra.mxu0 %v3600
        %5014 = vmatpush.msra.mxu0 %v3596
        %5015 = vmatpush.msra.mxu0 %v3592
        %5016 = vmatpush.msra.mxu0 %v3588
        %5017 = vmatpush.msra.mxu0 %v3584
        %5018 = vmatpush.msra.mxu0 %v3580
        %5019 = vmatpush.msra.mxu0 %v3576
        %5020 = vmatpush.msra.mxu0 %v3572
        %5021 = vmatpush.msra.mxu0 %v3568
        %5022 = vmatpush.msra.mxu0 %v3564
        %5023 = vmatpush.msra.mxu0 %v3560
        %5024 = vmatpush.msra.mxu0 %v3556
        %5025 = vmatpush.msra.mxu0 %v3552
        %5026 = vmatpush.msra.mxu0 %v3548
        %5027 = vmatmul.f32.gmra.mxu0 %v2773
        %v5028 = vpop.f32.mrf.mxu0
        %v5029 = vadd.f32 %v5009, %v5028
        %5030 = vdwg.mxu0
        %5031 = vmatpush.msra.mxu0 %v3672
        %5032 = vmatpush.msra.mxu0 %v3668
        %5033 = vmatpush.msra.mxu0 %v3664
        %5034 = vmatpush.msra.mxu0 %v3660
        %5035 = vmatpush.msra.mxu0 %v3656
        %5036 = vmatpush.msra.mxu0 %v3652
        %5037 = vmatpush.msra.mxu0 %v3648
        %5038 = vmatpush.msra.mxu0 %v3644
        %5039 = vmatpush.msra.mxu0 %v3640
        %5040 = vmatpush.msra.mxu0 %v3636
        %5041 = vmatpush.msra.mxu0 %v3632
        %5042 = vmatpush.msra.mxu0 %v3628
        %5043 = vmatpush.msra.mxu0 %v3624
        %5044 = vmatpush.msra.mxu0 %v3620
        %5045 = vmatpush.msra.mxu0 %v3616
        %5046 = vmatpush.msra.mxu0 %v3612
        %5047 = vmatmul.f32.gmra.mxu0 %v2774
        %v5048 = vpop.f32.mrf.mxu0
        %v5049 = vadd.f32 %v5029, %v5048
        %5050 = vdwg.mxu0
        %5051 = vmatpush.msra.mxu0 %v3736
        %5052 = vmatpush.msra.mxu0 %v3732
        %5053 = vmatpush.msra.mxu0 %v3728
        %5054 = vmatpush.msra.mxu0 %v3724
        %5055 = vmatpush.msra.mxu0 %v3720
        %5056 = vmatpush.msra.mxu0 %v3716
        %5057 = vmatpush.msra.mxu0 %v3712
        %5058 = vmatpush.msra.mxu0 %v3708
        %5059 = vmatpush.msra.mxu0 %v3704
        %5060 = vmatpush.msra.mxu0 %v3700
        %5061 = vmatpush.msra.mxu0 %v3696
        %5062 = vmatpush.msra.mxu0 %v3692
        %5063 = vmatpush.msra.mxu0 %v3688
        %5064 = vmatpush.msra.mxu0 %v3684
        %5065 = vmatpush.msra.mxu0 %v3680
        %5066 = vmatpush.msra.mxu0 %v3676
        %5067 = vmatmul.f32.gmra.mxu0 %v2775
        %v5068 = vpop.f32.mrf.mxu0
        %v5069 = vadd.f32 %v5049, %v5068
        %5070 = vdwg.mxu0
        %5071 = vmatpush.msra.mxu0 %v3800
        %5072 = vmatpush.msra.mxu0 %v3796
        %5073 = vmatpush.msra.mxu0 %v3792
        %5074 = vmatpush.msra.mxu0 %v3788
        %5075 = vmatpush.msra.mxu0 %v3784
        %5076 = vmatpush.msra.mxu0 %v3780
        %5077 = vmatpush.msra.mxu0 %v3776
        %5078 = vmatpush.msra.mxu0 %v3772
        %5079 = vmatpush.msra.mxu0 %v3768
        %5080 = vmatpush.msra.mxu0 %v3764
        %5081 = vmatpush.msra.mxu0 %v3760
        %5082 = vmatpush.msra.mxu0 %v3756
        %5083 = vmatpush.msra.mxu0 %v3752
        %5084 = vmatpush.msra.mxu0 %v3748
        %5085 = vmatpush.msra.mxu0 %v3744
        %5086 = vmatpush.msra.mxu0 %v3740
        %5087 = vmatmul.f32.gmra.mxu0 %v2776
        %v5088 = vpop.f32.mrf.mxu0
        %v5089 = vadd.f32 %v5069, %v5088
        %5090 = vdwg.mxu0
        %vm5091 = vcmp.gt.f32.partialorder %v4129, 0.0
        %vm5092 = vcmp.gt.f32.partialorder %v4449, 0.0
        %vm5093 = vcmp.gt.f32.partialorder %v4769, 0.0
        %vm5094 = vcmp.gt.f32.partialorder %v5089, 0.0
        %v5095 = vmul.f32 %v4129, 1.442695
        %v5096 = vpow.pop %v5095
        %v5097 = vmul.f32 %v4449, 1.442695
        %v5098 = vpow.pop %v5097
        %v5099 = vmul.f32 %v4769, 1.442695
        %v5100 = vpow.pop %v5099
        %v5101 = vmul.f32 %v5089, 1.442695
        %v5102 = vpow.pop %v5101
        %v5103 = vsub.f32 %v5096, 1.0
        %v5104 = vsub.f32 %v5098, 1.0
        %v5105 = vsub.f32 %v5100, 1.0
        %v5106 = vsub.f32 %v5102, 1.0
        %v5107 = vsel %vm5091, %v4129, %v5103
        %v5108 = vsel %vm5092, %v4449, %v5104
        %v5109 = vsel %vm5093, %v4769, %v5105
        %v5110 = vsel %vm5094, %v5089, %v5106
        %v5111 = vld [vmem:[#allocation11] sm:$0xff]
        %v5112 = vld [vmem:[#allocation11 + $0x8] sm:$0xff]
        %v5113 = vld [vmem:[#allocation11 + $0x10] sm:$0xff]
        %v5114 = vld [vmem:[#allocation11 + $0x18] sm:$0xff]
        %v5115 = vld [vmem:[#allocation11 + $0x20] sm:$0xff]
        %v5116 = vld [vmem:[#allocation11 + $0x28] sm:$0xff]
        %v5117 = vld [vmem:[#allocation11 + $0x30] sm:$0xff]
        %v5118 = vld [vmem:[#allocation11 + $0x38] sm:$0xff]
        %v5119 = vld [vmem:[#allocation11 + $0x40] sm:$0xff]
        %v5120 = vld [vmem:[#allocation11 + $0x48] sm:$0xff]
        %v5121 = vld [vmem:[#allocation11 + $0x50] sm:$0xff]
        %v5122 = vld [vmem:[#allocation11 + $0x58] sm:$0xff]
        %v5123 = vld [vmem:[#allocation11 + $0x60] sm:$0xff]
        %v5124 = vld [vmem:[#allocation11 + $0x68] sm:$0xff]
        %v5125 = vld [vmem:[#allocation11 + $0x70] sm:$0xff]
        %v5126 = vld [vmem:[#allocation11 + $0x78] sm:$0xff]
        %v5127 = vld [vmem:[#allocation11 + $0x80] sm:$0xff]
        %v5128 = vld [vmem:[#allocation11 + $0x88] sm:$0xff]
        %v5129 = vld [vmem:[#allocation11 + $0x90] sm:$0xff]
        %v5130 = vld [vmem:[#allocation11 + $0x98] sm:$0xff]
        %v5131 = vld [vmem:[#allocation11 + $0xa0] sm:$0xff]
        %v5132 = vld [vmem:[#allocation11 + $0xa8] sm:$0xff]
        %v5133 = vld [vmem:[#allocation11 + $0xb0] sm:$0xff]
        %v5134 = vld [vmem:[#allocation11 + $0xb8] sm:$0xff]
        %v5135 = vld [vmem:[#allocation11 + $0xc0] sm:$0xff]
        %v5136 = vld [vmem:[#allocation11 + $0xc8] sm:$0xff]
        %v5137 = vld [vmem:[#allocation11 + $0xd0] sm:$0xff]
        %v5138 = vld [vmem:[#allocation11 + $0xd8] sm:$0xff]
        %v5139 = vld [vmem:[#allocation11 + $0xe0] sm:$0xff]
        %v5140 = vld [vmem:[#allocation11 + $0xe8] sm:$0xff]
        %v5141 = vld [vmem:[#allocation11 + $0xf0] sm:$0xff]
        %v5142 = vld [vmem:[#allocation11 + $0xf8] sm:$0xff]
        %v5143 = vld [vmem:[#allocation11 + $0x100] sm:$0xff]
        %v5144 = vld [vmem:[#allocation11 + $0x108] sm:$0xff]
        %v5145 = vld [vmem:[#allocation11 + $0x110] sm:$0xff]
        %v5146 = vld [vmem:[#allocation11 + $0x118] sm:$0xff]
        %v5147 = vld [vmem:[#allocation11 + $0x120] sm:$0xff]
        %v5148 = vld [vmem:[#allocation11 + $0x128] sm:$0xff]
        %v5149 = vld [vmem:[#allocation11 + $0x130] sm:$0xff]
        %v5150 = vld [vmem:[#allocation11 + $0x138] sm:$0xff]
        %v5151 = vld [vmem:[#allocation11 + $0x140] sm:$0xff]
        %v5152 = vld [vmem:[#allocation11 + $0x148] sm:$0xff]
        %v5153 = vld [vmem:[#allocation11 + $0x150] sm:$0xff]
        %v5154 = vld [vmem:[#allocation11 + $0x158] sm:$0xff]
        %v5155 = vld [vmem:[#allocation11 + $0x160] sm:$0xff]
        %v5156 = vld [vmem:[#allocation11 + $0x168] sm:$0xff]
        %v5157 = vld [vmem:[#allocation11 + $0x170] sm:$0xff]
        %v5158 = vld [vmem:[#allocation11 + $0x178] sm:$0xff]
        %v5159 = vld [vmem:[#allocation11 + $0x180] sm:$0xff]
        %v5160 = vld [vmem:[#allocation11 + $0x188] sm:$0xff]
        %v5161 = vld [vmem:[#allocation11 + $0x190] sm:$0xff]
        %v5162 = vld [vmem:[#allocation11 + $0x198] sm:$0xff]
        %v5163 = vld [vmem:[#allocation11 + $0x1a0] sm:$0xff]
        %v5164 = vld [vmem:[#allocation11 + $0x1a8] sm:$0xff]
        %v5165 = vld [vmem:[#allocation11 + $0x1b0] sm:$0xff]
        %v5166 = vld [vmem:[#allocation11 + $0x1b8] sm:$0xff]
        %v5167 = vld [vmem:[#allocation11 + $0x1c0] sm:$0xff]
        %v5168 = vld [vmem:[#allocation11 + $0x1c8] sm:$0xff]
        %v5169 = vld [vmem:[#allocation11 + $0x1d0] sm:$0xff]
        %v5170 = vld [vmem:[#allocation11 + $0x1d8] sm:$0xff]
        %v5171 = vld [vmem:[#allocation11 + $0x1e0] sm:$0xff]
        %v5172 = vld [vmem:[#allocation11 + $0x1e8] sm:$0xff]
        %v5173 = vld [vmem:[#allocation11 + $0x1f0] sm:$0xff]
        %v5174 = vld [vmem:[#allocation11 + $0x1f8] sm:$0xff]
        %5175 = vmatpush.msra.mxu0 %v5126
        %5176 = vmatpush.msra.mxu0 %v5125
        %5177 = vmatpush.msra.mxu0 %v5124
        %5178 = vmatpush.msra.mxu0 %v5123
        %5179 = vmatpush.msra.mxu0 %v5122
        %5180 = vmatpush.msra.mxu0 %v5121
        %5181 = vmatpush.msra.mxu0 %v5120
        %5182 = vmatpush.msra.mxu0 %v5119
        %5183 = vmatpush.msra.mxu0 %v5118
        %5184 = vmatpush.msra.mxu0 %v5117
        %5185 = vmatpush.msra.mxu0 %v5116
        %5186 = vmatpush.msra.mxu0 %v5115
        %5187 = vmatpush.msra.mxu0 %v5114
        %5188 = vmatpush.msra.mxu0 %v5113
        %5189 = vmatpush.msra.mxu0 %v5112
        %5190 = vmatpush.msra.mxu0 %v5111
        %5191 = vmatmul.f32.gmra.mxu0 %v5107
        %v5192 = vpop.f32.mrf.mxu0
        %v5193 = vadd.f32 0.0, %v5192
        %5194 = vdwg.mxu0
        %5195 = vmatpush.msra.mxu0 %v5142
        %5196 = vmatpush.msra.mxu0 %v5141
        %5197 = vmatpush.msra.mxu0 %v5140
        %5198 = vmatpush.msra.mxu0 %v5139
        %5199 = vmatpush.msra.mxu0 %v5138
        %5200 = vmatpush.msra.mxu0 %v5137
        %5201 = vmatpush.msra.mxu0 %v5136
        %5202 = vmatpush.msra.mxu0 %v5135
        %5203 = vmatpush.msra.mxu0 %v5134
        %5204 = vmatpush.msra.mxu0 %v5133
        %5205 = vmatpush.msra.mxu0 %v5132
        %5206 = vmatpush.msra.mxu0 %v5131
        %5207 = vmatpush.msra.mxu0 %v5130
        %5208 = vmatpush.msra.mxu0 %v5129
        %5209 = vmatpush.msra.mxu0 %v5128
        %5210 = vmatpush.msra.mxu0 %v5127
        %5211 = vmatmul.f32.gmra.mxu0 %v5108
        %v5212 = vpop.f32.mrf.mxu0
        %v5213 = vadd.f32 %v5193, %v5212
        %5214 = vdwg.mxu0
        %5215 = vmatpush.msra.mxu0 %v5158
        %5216 = vmatpush.msra.mxu0 %v5157
        %5217 = vmatpush.msra.mxu0 %v5156
        %5218 = vmatpush.msra.mxu0 %v5155
        %5219 = vmatpush.msra.mxu0 %v5154
        %5220 = vmatpush.msra.mxu0 %v5153
        %5221 = vmatpush.msra.mxu0 %v5152
        %5222 = vmatpush.msra.mxu0 %v5151
        %5223 = vmatpush.msra.mxu0 %v5150
        %5224 = vmatpush.msra.mxu0 %v5149
        %5225 = vmatpush.msra.mxu0 %v5148
        %5226 = vmatpush.msra.mxu0 %v5147
        %5227 = vmatpush.msra.mxu0 %v5146
        %5228 = vmatpush.msra.mxu0 %v5145
        %5229 = vmatpush.msra.mxu0 %v5144
        %5230 = vmatpush.msra.mxu0 %v5143
        %5231 = vmatmul.f32.gmra.mxu0 %v5109
        %v5232 = vpop.f32.mrf.mxu0
        %v5233 = vadd.f32 %v5213, %v5232
        %5234 = vdwg.mxu0
        %5235 = vmatpush.msra.mxu0 %v5174
        %5236 = vmatpush.msra.mxu0 %v5173
        %5237 = vmatpush.msra.mxu0 %v5172
        %5238 = vmatpush.msra.mxu0 %v5171
        %5239 = vmatpush.msra.mxu0 %v5170
        %5240 = vmatpush.msra.mxu0 %v5169
        %5241 = vmatpush.msra.mxu0 %v5168
        %5242 = vmatpush.msra.mxu0 %v5167
        %5243 = vmatpush.msra.mxu0 %v5166
        %5244 = vmatpush.msra.mxu0 %v5165
        %5245 = vmatpush.msra.mxu0 %v5164
        %5246 = vmatpush.msra.mxu0 %v5163
        %5247 = vmatpush.msra.mxu0 %v5162
        %5248 = vmatpush.msra.mxu0 %v5161
        %5249 = vmatpush.msra.mxu0 %v5160
        %5250 = vmatpush.msra.mxu0 %v5159
        %5251 = vmatmul.f32.gmra.mxu0 %v5110
        %v5252 = vpop.f32.mrf.mxu0
        %v5253 = vadd.f32 %v5233, %v5252
        %5254 = vdwg.mxu0
        %5255 = vst [vmem:[%s346] sm:$0x1] %v5253
        %s5256 = sand.u32 %s165, 1
        %s5257 = scalar_lea.sflag [#allocation4], %s5256
        %s5258 = sand.u32 %s165, 1
        %s5259 = scalar_lea.vmem [#allocation13], %s5258
        // Predicated region
        $region69: #{eegnet_forward.1} parent=43 // pred_check
          %p5260 = pneg %p175
        $region70: #{eegnet_forward.1} parent=43 // pred_check_branch
          %5262 = sbr.rel (%p5260) target = $region72
        $region71: #{eegnet_forward.1} parent=43 // pred_region
          %5264 = vsyncadd %s5257, 0
          %s5265 = scalar_lea.hbm %s6, %s26
          %s5267 = sshll.u32 %s5259, 4
          %s5268 = int_to_ptr.vmem [resolvable:$true] %s5267
          %s5269 = sshll.u32 %s5265, 4
          %s5270 = int_to_ptr.hbm [resolvable:$true] %s5269
          %5272 = dma.vmem_to_hbm [thread:$0]  %s5268, 16, %s5270, %s5257
        $region72: #{eegnet_forward.1} parent=43 // pred_fallthru
          _
      $region44: #{eegnet_forward.1} parent=5 // pred_fallthru
        _
      %p5273 = scmp.le.s32.totalorder 2, %s21
      // Predicated region
      $region73: #{eegnet_forward.1} parent=5 // pred_check
        %p5274 = pneg %p5273
      $region74: #{eegnet_forward.1} parent=5 // pred_check_branch
        %5276 = sbr.rel (%p5274) target = $region76
      $region75: #{eegnet_forward.1} parent=5 // pred_region
        %s5277 = ssub.s32 %s21, 2
        // Predicated region
        $region77: #{eegnet_forward.1} parent=75 // pred_check
          %p5278 = pneg %p181
        $region78: #{eegnet_forward.1} parent=75 // pred_check_branch
          %5280 = sbr.rel (%p5278) target = $region80
        $region79: #{eegnet_forward.1} parent=75 // pred_region
          %s5281 = sand.u32 %s166, 1
          %s5282 = scalar_lea.sflag [#allocation4], %s5281
          %s5283 = sand.u32 %s166, 1
          %s5284 = scalar_lea.vmem [#allocation13], %s5283
          %5286 = dma.done %s5282, 16
        $region80: #{eegnet_forward.1} parent=75 // pred_fallthru
          _
      $region76: #{eegnet_forward.1} parent=5 // pred_fallthru
        _
    $region6: #{eegnet_forward.1} parent=1 // loop_footer
      %s25 = sadd.s32 1, %s21
    $region7: #{eegnet_forward.1} parent=1 // loop_footer_branch
      %20 = sbr.rel target = $region3
    $region8: #{eegnet_forward.1} parent=1 // loop_exit
      _
    %5287 = vsyncpa [#allocation3], 1
    %s5288 = scalar_lea.sflag [#allocation3], 1
    %5289 = vsyncpa %s5288, 1
    %5290 = vsyncpa [#allocation6], 1
    %5291 = vsyncpa [#allocation9], 1
    %5292 = vsyncpa [#allocation12], 1
    %5293 = vsyncpa [#allocation4], 1
    %s5294 = scalar_lea.sflag [#allocation4], 1
    %5295 = vsyncpa %s5294, 1

</llo_original>
